<compile_context>
chip_gen: v7x
topology: tpu7x:2x2x1
jax: 0.10.0
libtpu: 0.0.40
codegen_flags: <defaults>
</compile_context>

<pallas_src>
import functools
import math

import jax
import jax.numpy as jnp
from jax import lax
from jax.experimental import pallas as pl
from jax.experimental.pallas import tpu as pltpu

NEG_INF = -1e30
LN_EPS = 1e-5
LANE = 128

LAYER_PARAM_NAMES = ("wqkv", "bqkv", "wo", "bo", "w1", "b1", "w2", "b2",
                     "g1", "be1", "g2", "be2")


def _round_up(x, m):
    return (x + m - 1) // m * m


# ----------------------------- shared math ----------------------------------

def _layernorm(x, gamma, beta):
    """Two-pass LayerNorm over the (unpadded) last axis — matches PyTorch."""
    inv_d = 1.0 / float(x.shape[-1])
    mean = jnp.sum(x, axis=-1, keepdims=True) * inv_d
    xc = x - mean
    var = jnp.sum(xc * xc, axis=-1, keepdims=True) * inv_d
    return xc * lax.rsqrt(var + LN_EPS) * gamma + beta


# ----------------------------- kernel ----------------------------------------

def make_transformer_kernel(num_heads, d_model):
    hd = d_model // num_heads

    def kernel(x_ref, wqkv_ref, bqkv_ref, wo_ref, bo_ref,
               w1_ref, b1_ref, w2_ref, b2_ref,
               g1_ref, be1_ref, g2_ref, be2_ref,
               wcls_ref, bcls_ref,
               out_ref,
               h_ref, mask_ref):
        layer = pl.program_id(0)
        S = h_ref.shape[0]
        H = num_heads
        D = d_model

        @pl.when(layer == 0)
        def _():
            # hidden-state init + causal additive mask (stacked per head along
            # sublanes), built once and reused by every layer.
            h_ref[...] = x_ref[...]
            row = lax.broadcasted_iota(jnp.int32, (S, S), 0)
            col = lax.broadcasted_iota(jnp.int32, (S, S), 1)
            m = jnp.where(col <= row, 0.0, NEG_INF).astype(jnp.float32)
            mask_ref[...] = jnp.concatenate([m] * H, axis=0)

        x = h_ref[...]

        # ---- causal multi-head self-attention (1/sqrt(hd) pre-folded into Wq) --
        qkv = jnp.dot(x.astype(jnp.bfloat16), wqkv_ref[0],
                      preferred_element_type=jnp.float32) + bqkv_ref[0]
        s_blocks = []
        for h in range(H):                       # 16-lane head slices (cheap)
            q_h = qkv[:, h * hd:(h + 1) * hd].astype(jnp.bfloat16)
            k_h = qkv[:, D + h * hd:D + (h + 1) * hd].astype(jnp.bfloat16)
            s_blocks.append(lax.dot_general(
                q_h, k_h, (((1,), (1,)), ((), ())),
                preferred_element_type=jnp.float32))
        # Heads stacked along sublanes -> single max/exp/sum/reciprocal chain.
        s = jnp.concatenate(s_blocks, axis=0) + mask_ref[...]      # (H*S, S)
        s = s - jnp.max(s, axis=-1, keepdims=True)
        p = jnp.exp(s)
        p = p * pl.reciprocal(jnp.sum(p, axis=-1, keepdims=True), approx=True)
        p = p.astype(jnp.bfloat16)

        attn = bo_ref[0]                                           # (1, D)
        for h in range(H):
            v_h = qkv[:, 2 * D + h * hd:2 * D + (h + 1) * hd].astype(jnp.bfloat16)
            o_h = jnp.dot(p[h * S:(h + 1) * S, :], v_h,
                          preferred_element_type=jnp.float32)
            attn = attn + jnp.dot(o_h.astype(jnp.bfloat16),
                                  wo_ref[0][h * hd:(h + 1) * hd, :],
                                  preferred_element_type=jnp.float32)

        h1 = _layernorm(x + attn, g1_ref[0], be1_ref[0])

        # ---- feed-forward (relu), weights at real d_model = 48 -----------------
        ff = jnp.dot(h1.astype(jnp.bfloat16), w1_ref[0],
                     preferred_element_type=jnp.float32) + b1_ref[0]
        ff = jnp.maximum(ff, 0.0)
        ff = jnp.dot(ff.astype(jnp.bfloat16), w2_ref[0],
                     preferred_element_type=jnp.float32) + b2_ref[0]
        h2 = _layernorm(h1 + ff, g2_ref[0], be2_ref[0])
        h_ref[...] = h2

        # ---- fused classifier + log_softmax, last layer only -------------------
        # (classes padded to 128 lanes; padded columns carry a -inf bias so they
        #  contribute exp(.) = 0 and the log_softmax over real classes is exact)
        @pl.when(layer == pl.num_programs(0) - 1)
        def _():
            logits = jnp.dot(h2.astype(jnp.bfloat16), wcls_ref[...],
                             preferred_element_type=jnp.float32) + bcls_ref[...]
            z = logits - jnp.max(logits, axis=-1, keepdims=True)
            out_ref[...] = z - jnp.log(jnp.sum(jnp.exp(z), axis=-1, keepdims=True))

    return kernel


# ----------------------------- wrapper ----------------------------------------

@functools.partial(jax.jit, static_argnames=("num_heads", "d_model", "num_classes"))
def transformer_forward(indices, emb, layer_params, wcls_t, bcls_p,
                        *, num_heads, d_model, num_classes):
    """position_style='none': embed -> L encoder layers -> W -> log_softmax."""
    # TODO(synk): position_style='learned' (PositionalEncoding) is not implemented
    # — the class is not part of the provided spec; this is the 'none' path.
    seq = indices.shape[0]
    seq_p = _round_up(seq, 16)               # bf16 M-tile is 16 rows
    n_cls_pad = wcls_t.shape[1]
    num_layers = layer_params["wqkv"].shape[0]

    x = emb[indices]                          # embedding gather (plain XLA)
    x = jnp.pad(x, ((0, seq_p - seq), (0, 0)))
    # Pad tokens only ever attend earlier (real) positions (causal mask), and
    # their rows are sliced off at the end -> no effect on real outputs.

    def layer_spec(arr):
        return pl.BlockSpec((1,) + arr.shape[1:], lambda l: (l, 0, 0))

    in_specs = [pl.BlockSpec((seq_p, d_model), lambda l: (0, 0))]
    in_specs += [layer_spec(layer_params[n]) for n in LAYER_PARAM_NAMES]
    in_specs += [pl.BlockSpec(wcls_t.shape, lambda l: (0, 0)),
                 pl.BlockSpec(bcls_p.shape, lambda l: (0, 0))]

    out = pl.pallas_call(
        make_transformer_kernel(num_heads, d_model),
        out_shape=jax.ShapeDtypeStruct((seq_p, n_cls_pad), jnp.float32),
        grid=(num_layers,),
        in_specs=in_specs,
        out_specs=pl.BlockSpec((seq_p, n_cls_pad), lambda l: (0, 0)),
        scratch_shapes=[pltpu.VMEM((seq_p, d_model), jnp.float32),             # hidden
                        pltpu.VMEM((num_heads * seq_p, seq_p), jnp.float32)],  # mask
        compiler_params=pltpu.CompilerParams(
            # The layer axis carries state in scratch -> sequential.
            dimension_semantics=("arbitrary",)),
    )(x, *[layer_params[n] for n in LAYER_PARAM_NAMES], wcls_t, bcls_p)

    return out[:seq, :num_classes]


# ------------------------- weight packing (host side) -------------------------

def pack_params(real, d_model, num_heads):
    """PyTorch-layout f32 weights -> transposed, unpadded, bf16 kernel layout."""
    f32 = jnp.float32
    bf16 = jnp.bfloat16
    D = d_model
    hd = D // num_heads
    n_cls = real["wcls"].shape[0]
    n_cls_pad = _round_up(n_cls, LANE)
    scale = 1.0 / math.sqrt(hd)

    # Q|K|V packed tight along columns: [0,D)=Q, [D,2D)=K, [2D,3D)=V with head h
    # at offset h*hd inside each part — exactly PyTorch's in_proj layout,
    # transposed to (in, out).  No zero lanes are streamed.
    wqkv = jnp.transpose(real["in_proj_w"], (0, 2, 1))          # (L, D, 3D)
    bqkv = real["in_proj_b"][:, None, :]                         # (L, 1, 3D)
    # Fold the 1/sqrt(head_dim) attention scale into the Q projection (w and b).
    qscale = jnp.concatenate([jnp.full((D,), scale, f32), jnp.ones((2 * D,), f32)])
    wqkv = wqkv * qscale
    bqkv = bqkv * qscale

    params = {
        "wqkv": wqkv.astype(bf16),
        "bqkv": bqkv.astype(f32),
        "wo": jnp.transpose(real["out_proj_w"], (0, 2, 1)).astype(bf16),   # (L, D, D)
        "bo": real["out_proj_b"][:, None, :].astype(f32),
        "w1": jnp.transpose(real["lin1_w"], (0, 2, 1)).astype(bf16),       # (L, D, dff)
        "b1": real["lin1_b"][:, None, :].astype(f32),
        "w2": jnp.transpose(real["lin2_w"], (0, 2, 1)).astype(bf16),       # (L, dff, D)
        "b2": real["lin2_b"][:, None, :].astype(f32),
        "g1": real["ln1_g"][:, None, :].astype(f32),
        "be1": real["ln1_b"][:, None, :].astype(f32),
        "g2": real["ln2_g"][:, None, :].astype(f32),
        "be2": real["ln2_b"][:, None, :].astype(f32),
    }

    emb = real["emb"].astype(f32)                                 # (vocab, D)
    wcls_t = jnp.zeros((D, n_cls_pad), f32).at[:, :n_cls].set(real["wcls"].T)
    wcls_t = wcls_t.astype(bf16)
    # Padded class columns get a -inf bias so the fused log_softmax ignores them.
    bcls_p = jnp.full((1, n_cls_pad), NEG_INF, f32).at[0, :n_cls].set(real["bcls"])
    return params, emb, wcls_t, bcls_p


# ------------------------- pure-JAX reference ---------------------------------

def reference_forward(indices, real, num_heads, mixed):
    """Reference of the PyTorch forward (position_style='none', eval mode).

    mixed=True mirrors the kernel's bf16-input / f32-accumulate matmuls;
    mixed=False is plain float32 (PyTorch semantics)."""
    cast = (lambda a: a.astype(jnp.bfloat16)) if mixed else (lambda a: a)

    def dot(a, b):
        return jnp.dot(cast(a), cast(b), preferred_element_type=jnp.float32)

    x = real["emb"][indices]
    S, D = x.shape
    hd = D // num_heads
    scale = 1.0 / math.sqrt(hd)
    row = jnp.arange(S)[:, None]
    col = jnp.arange(S)[None, :]
    mask = jnp.where(col <= row, 0.0, NEG_INF)
    L = real["in_proj_w"].shape[0]
    for l in range(L):
        qkv = dot(x, real["in_proj_w"][l].T) + real["in_proj_b"][l][None, :]
        q, k, v = qkv[:, :D], qkv[:, D:2 * D], qkv[:, 2 * D:]
        heads = []
        for h in range(num_heads):
            sl = slice(h * hd, (h + 1) * hd)
            s = dot(q[:, sl], k[:, sl].T) * scale + mask
            p = jax.nn.softmax(s, axis=-1)
            heads.append(dot(p, v[:, sl]))
        attn = dot(jnp.concatenate(heads, axis=-1), real["out_proj_w"][l].T)
        attn = attn + real["out_proj_b"][l][None, :]
        h1 = _layernorm(x + attn, real["ln1_g"][l], real["ln1_b"][l])
        ff = dot(h1, real["lin1_w"][l].T) + real["lin1_b"][l][None, :]
        ff = jnp.maximum(ff, 0.0)
        ff = dot(ff, real["lin2_w"][l].T) + real["lin2_b"][l][None, :]
        x = _layernorm(h1 + ff, real["ln2_g"][l], real["ln2_b"][l])
    logits = dot(x, real["wcls"].T) + real["bcls"][None, :]
    return jax.nn.log_softmax(logits, axis=-1)


if __name__ == "__main__":
    vocab_size = 50
    seqlen = 20                  # == num_positions in the module docstring
    d_model = 48                 # divisible by num_heads = 3 (hardcoded in module)
    num_heads = 3
    num_layers = 2
    d_ff = 2048                  # hardcoded in the module
    num_classes = 3

    key = jax.random.PRNGKey(0)
    ks = jax.random.split(key, 12)

    def init(k, shape, scale=0.02):
        return jax.random.normal(k, shape, jnp.float32) * scale

    L, D = num_layers, d_model
    real = {
        "emb": init(ks[0], (vocab_size, D), 0.1),
        "in_proj_w": init(ks[1], (L, 3 * D, D)),
        "in_proj_b": init(ks[2], (L, 3 * D)),
        "out_proj_w": init(ks[3], (L, D, D)),
        "out_proj_b": init(ks[4], (L, D)),
        "lin1_w": init(ks[5], (L, d_ff, D)),
        "lin1_b": init(ks[6], (L, d_ff)),
        "lin2_w": init(ks[7], (L, D, d_ff)),
        "lin2_b": init(ks[8], (L, D)),
        "ln1_g": jnp.ones((L, D), jnp.float32),
        "ln1_b": jnp.zeros((L, D), jnp.float32),
        "ln2_g": jnp.ones((L, D), jnp.float32),
        "ln2_b": jnp.zeros((L, D), jnp.float32),
        "wcls": init(ks[9], (num_classes, D), 0.1),
        "bcls": jnp.zeros((num_classes,), jnp.float32),
    }
    indices = jax.random.randint(ks[10], (seqlen,), 0, vocab_size)

    layer_params, emb, wcls_t, bcls_p = pack_params(real, d_model, num_heads)

    log_probs = transformer_forward(
        indices, emb, layer_params, wcls_t, bcls_p,
        num_heads=num_heads, d_model=d_model, num_classes=num_classes)
    log_probs = jax.block_until_ready(log_probs)

    ref_mixed = reference_forward(indices, real, num_heads, mixed=True)
    ref_f32 = reference_forward(indices, real, num_heads, mixed=False)

    assert log_probs.shape == (seqlen, num_classes)
    assert bool(jnp.all(jnp.isfinite(log_probs)))
    # Kernel vs. same-math (bf16 matmul inputs / f32 accumulation) reference.
    assert bool(jnp.allclose(log_probs, ref_mixed, atol=1e-2, rtol=1e-2))
    # Kernel vs. full-float32 PyTorch-style reference (bf16-cast tolerance).
    assert bool(jnp.allclose(log_probs, ref_f32, atol=5e-2, rtol=5e-2))
    print("KERNEL_OK")
</pallas_src>

<mosaic_0001>
module attributes {stable_mosaic.version = 11 : i64} {
  func.func @kernel(%arg0: i32, %arg1: memref<32x48xf32, #tpu.memory_space<vmem>>, %arg2: memref<1x48x144xbf16, #tpu.memory_space<vmem>>, %arg3: memref<1x1x144xf32, #tpu.memory_space<vmem>>, %arg4: memref<1x48x48xbf16, #tpu.memory_space<vmem>>, %arg5: memref<1x1x48xf32, #tpu.memory_space<vmem>>, %arg6: memref<1x48x2048xbf16, #tpu.memory_space<vmem>>, %arg7: memref<1x1x2048xf32, #tpu.memory_space<vmem>>, %arg8: memref<1x2048x48xbf16, #tpu.memory_space<vmem>>, %arg9: memref<1x1x48xf32, #tpu.memory_space<vmem>>, %arg10: memref<1x1x48xf32, #tpu.memory_space<vmem>>, %arg11: memref<1x1x48xf32, #tpu.memory_space<vmem>>, %arg12: memref<1x1x48xf32, #tpu.memory_space<vmem>>, %arg13: memref<1x1x48xf32, #tpu.memory_space<vmem>>, %arg14: memref<48x128xbf16, #tpu.memory_space<vmem>>, %arg15: memref<1x128xf32, #tpu.memory_space<vmem>>, %arg16: memref<32x128xf32, #tpu.memory_space<vmem>>, %arg17: memref<32x48xf32, #tpu.memory_space<vmem>>, %arg18: memref<96x32xf32, #tpu.memory_space<vmem>>) attributes {dimension_semantics = [#tpu.dimension_semantics<arbitrary>], iteration_bounds = array<i64: 2>, scalar_prefetch = 0 : i64, scratch_operands = 2 : i64, tpu.core_type = #tpu.core_type<tc>, window_params = [{pipeline_mode = #tpu.pipeline_mode<synchronous>, transform_indices = @transform_0, window_bounds = array<i64: 32, 48>}, {transform_indices = @transform_1, window_bounds = array<i64: 1, 48, 144>}, {transform_indices = @transform_2, window_bounds = array<i64: 1, 1, 144>}, {transform_indices = @transform_3, window_bounds = array<i64: 1, 48, 48>}, {transform_indices = @transform_4, window_bounds = array<i64: 1, 1, 48>}, {transform_indices = @transform_5, window_bounds = array<i64: 1, 48, 2048>}, {transform_indices = @transform_6, window_bounds = array<i64: 1, 1, 2048>}, {transform_indices = @transform_7, window_bounds = array<i64: 1, 2048, 48>}, {transform_indices = @transform_8, window_bounds = array<i64: 1, 1, 48>}, {transform_indices = @transform_9, window_bounds = array<i64: 1, 1, 48>}, {transform_indices = @transform_10, window_bounds = array<i64: 1, 1, 48>}, {transform_indices = @transform_11, window_bounds = array<i64: 1, 1, 48>}, {transform_indices = @transform_12, window_bounds = array<i64: 1, 1, 48>}, {pipeline_mode = #tpu.pipeline_mode<synchronous>, transform_indices = @transform_13, window_bounds = array<i64: 48, 128>}, {pipeline_mode = #tpu.pipeline_mode<synchronous>, transform_indices = @transform_14, window_bounds = array<i64: 1, 128>}, {pipeline_mode = #tpu.pipeline_mode<synchronous>, transform_indices = @transform_15, window_bounds = array<i64: 32, 128>}]} {
    %c0_i32 = arith.constant 0 : i32
    %0 = arith.cmpi eq, %arg0, %c0_i32 : i32
    %1 = arith.extui %0 : i1 to i32
    %c0_i32_0 = arith.constant 0 : i32
    %2 = arith.cmpi ne, %1, %c0_i32_0 : i32
    scf.if %2 {
      %c0_73 = arith.constant 0 : index
      %c0_74 = arith.constant 0 : index
      %146 = vector.load %arg1[%c0_73, %c0_74] : memref<32x48xf32, #tpu.memory_space<vmem>>, vector<32x48xf32>
      %c0_75 = arith.constant 0 : index
      %c0_76 = arith.constant 0 : index
      %147 = vector.load %arg17[%c0_75, %c0_76] : memref<32x48xf32, #tpu.memory_space<vmem>>, vector<32x48xf32>
      tpu.vector_store %arg17[%c0_75, %c0_76], %146 {strides = array<i32>} : memref<32x48xf32, #tpu.memory_space<vmem>>, vector<32x48xf32>,
      %148 = tpu.iota {dimensions = array<i32: 0>} : vector<32x32xi32>
      %149 = tpu.iota {dimensions = array<i32: 1>} : vector<32x32xi32>
      %150 = arith.cmpi sle, %149, %148 : vector<32x32xi32>
      %cst_77 = arith.constant 0.000000e+00 : f32
      %cst_78 = arith.constant -1.000000e+30 : f32
      %151 = vector.broadcast %cst_77 : f32 to vector<32x32xf32>
      %152 = vector.broadcast %cst_78 : f32 to vector<32x32xf32>
      %153 = arith.select %150, %151, %152 : vector<32x32xi1>, vector<32x32xf32>
      %154 = tpu.concatenate %153, %153, %153 in 0 : vector<32x32xf32>, vector<32x32xf32>, vector<32x32xf32> -> vector<96x32xf32>
      %c0_79 = arith.constant 0 : index
      %c0_80 = arith.constant 0 : index
      %155 = vector.load %arg18[%c0_79, %c0_80] : memref<96x32xf32, #tpu.memory_space<vmem>>, vector<96x32xf32>
      tpu.vector_store %arg18[%c0_79, %c0_80], %154 {strides = array<i32>} : memref<96x32xf32, #tpu.memory_space<vmem>>, vector<96x32xf32>,
    } else {
    }
    %c0 = arith.constant 0 : index
    %c0_1 = arith.constant 0 : index
    %3 = vector.load %arg17[%c0, %c0_1] : memref<32x48xf32, #tpu.memory_space<vmem>>, vector<32x48xf32>
    %4 = arith.truncf %3 : vector<32x48xf32> to vector<32x48xbf16>
    %c0_2 = arith.constant 0 : index
    %c0_3 = arith.constant 0 : index
    %c0_4 = arith.constant 0 : index
    %5 = vector.load %arg2[%c0_2, %c0_3, %c0_4] : memref<1x48x144xbf16, #tpu.memory_space<vmem>>, vector<1x48x144xbf16>
    %6 = vector.shape_cast %5 : vector<1x48x144xbf16> to vector<48x144xbf16>
    %cst = arith.constant dense<0.000000e+00> : vector<32x144xf32>
    %7 = tpu.matmul %4, %6, %cst {dimension_numbers = #tpu.dot_dimension_numbers<[1], [0], [0], [1], [0, 0, 1, 1], [], []>} : vector<32x48xbf16>, vector<48x144xbf16>, vector<32x144xf32> -> vector<32x144xf32>
    %c0_5 = arith.constant 0 : index
    %c0_6 = arith.constant 0 : index
    %c0_7 = arith.constant 0 : index
    %8 = vector.load %arg3[%c0_5, %c0_6, %c0_7] : memref<1x1x144xf32, #tpu.memory_space<vmem>>, vector<1x1x144xf32>
    %9 = vector.shape_cast %8 : vector<1x1x144xf32> to vector<1x144xf32>
    %10 = vector.broadcast %9 : vector<1x144xf32> to vector<32x144xf32>
    %11 = arith.addf %7, %10 : vector<32x144xf32>
    %12 = vector.extract_strided_slice %11 {offsets = [0, 0], sizes = [32, 16], strides = [1, 1]} : vector<32x144xf32> to vector<32x16xf32>
    %13 = arith.truncf %12 : vector<32x16xf32> to vector<32x16xbf16>
    %14 = vector.extract_strided_slice %11 {offsets = [0, 48], sizes = [32, 16], strides = [1, 1]} : vector<32x144xf32> to vector<32x16xf32>
    %15 = arith.truncf %14 : vector<32x16xf32> to vector<32x16xbf16>
    %cst_8 = arith.constant dense<0.000000e+00> : vector<32x32xf32>
    %16 = tpu.matmul %13, %15, %cst_8 {dimension_numbers = #tpu.dot_dimension_numbers<[1], [1], [0], [0], [0, 0, 1, 0], [], []>} : vector<32x16xbf16>, vector<32x16xbf16>, vector<32x32xf32> -> vector<32x32xf32>
    %17 = vector.extract_strided_slice %11 {offsets = [0, 16], sizes = [32, 16], strides = [1, 1]} : vector<32x144xf32> to vector<32x16xf32>
    %18 = arith.truncf %17 : vector<32x16xf32> to vector<32x16xbf16>
    %19 = vector.extract_strided_slice %11 {offsets = [0, 64], sizes = [32, 16], strides = [1, 1]} : vector<32x144xf32> to vector<32x16xf32>
    %20 = arith.truncf %19 : vector<32x16xf32> to vector<32x16xbf16>
    %cst_9 = arith.constant dense<0.000000e+00> : vector<32x32xf32>
    %21 = tpu.matmul %18, %20, %cst_9 {dimension_numbers = #tpu.dot_dimension_numbers<[1], [1], [0], [0], [0, 0, 1, 0], [], []>} : vector<32x16xbf16>, vector<32x16xbf16>, vector<32x32xf32> -> vector<32x32xf32>
    %22 = vector.extract_strided_slice %11 {offsets = [0, 32], sizes = [32, 16], strides = [1, 1]} : vector<32x144xf32> to vector<32x16xf32>
    %23 = arith.truncf %22 : vector<32x16xf32> to vector<32x16xbf16>
    %24 = vector.extract_strided_slice %11 {offsets = [0, 80], sizes = [32, 16], strides = [1, 1]} : vector<32x144xf32> to vector<32x16xf32>
    %25 = arith.truncf %24 : vector<32x16xf32> to vector<32x16xbf16>
    %cst_10 = arith.constant dense<0.000000e+00> : vector<32x32xf32>
    %26 = tpu.matmul %23, %25, %cst_10 {dimension_numbers = #tpu.dot_dimension_numbers<[1], [1], [0], [0], [0, 0, 1, 0], [], []>} : vector<32x16xbf16>, vector<32x16xbf16>, vector<32x32xf32> -> vector<32x32xf32>
    %27 = tpu.concatenate %16, %21, %26 in 0 : vector<32x32xf32>, vector<32x32xf32>, vector<32x32xf32> -> vector<96x32xf32>
    %c0_11 = arith.constant 0 : index
    %c0_12 = arith.constant 0 : index
    %28 = vector.load %arg18[%c0_11, %c0_12] : memref<96x32xf32, #tpu.memory_space<vmem>>, vector<96x32xf32>
    %29 = arith.addf %27, %28 : vector<96x32xf32>
    %cst_13 = arith.constant dense<0xFF800000> : vector<96xf32>
    %30 = vector.multi_reduction <maximumf>, %29, %cst_13 [1] : vector<96x32xf32> to vector<96xf32>
    %31 = vector.shape_cast %30 : vector<96xf32> to vector<96x1xf32>
    %32 = vector.broadcast %31 : vector<96x1xf32> to vector<96x32xf32>
    %33 = arith.subf %29, %32 : vector<96x32xf32>
    %34 = math.exp %33 : vector<96x32xf32>
    %cst_14 = arith.constant dense<0.000000e+00> : vector<96xf32>
    %35 = vector.multi_reduction <add>, %34, %cst_14 [1] : vector<96x32xf32> to vector<96xf32>
    %36 = vector.shape_cast %35 : vector<96xf32> to vector<96x1xf32>
    %37 = tpu.reciprocal %36 {approx = true} : vector<96x1xf32> -> vector<96x1xf32>
    %38 = vector.broadcast %37 : vector<96x1xf32> to vector<96x32xf32>
    %39 = arith.mulf %34, %38 : vector<96x32xf32>
    %40 = arith.truncf %39 : vector<96x32xf32> to vector<96x32xbf16>
    %c0_15 = arith.constant 0 : index
    %c0_16 = arith.constant 0 : index
    %c0_17 = arith.constant 0 : index
    %41 = vector.load %arg5[%c0_15, %c0_16, %c0_17] : memref<1x1x48xf32, #tpu.memory_space<vmem>>, vector<1x1x48xf32>
    %42 = vector.shape_cast %41 : vector<1x1x48xf32> to vector<1x48xf32>
    %43 = vector.extract_strided_slice %11 {offsets = [0, 96], sizes = [32, 16], strides = [1, 1]} : vector<32x144xf32> to vector<32x16xf32>
    %44 = arith.truncf %43 : vector<32x16xf32> to vector<32x16xbf16>
    %45 = vector.extract_strided_slice %40 {offsets = [0, 0], sizes = [32, 32], strides = [1, 1]} : vector<96x32xbf16> to vector<32x32xbf16>
    %cst_18 = arith.constant dense<0.000000e+00> : vector<32x16xf32>
    %46 = tpu.matmul %45, %44, %cst_18 {dimension_numbers = #tpu.dot_dimension_numbers<[1], [0], [0], [1], [0, 0, 1, 1], [], []>} : vector<32x32xbf16>, vector<32x16xbf16>, vector<32x16xf32> -> vector<32x16xf32>
    %47 = arith.truncf %46 : vector<32x16xf32> to vector<32x16xbf16>
    %c0_19 = arith.constant 0 : index
    %c0_20 = arith.constant 0 : index
    %c0_21 = arith.constant 0 : index
    %48 = vector.load %arg4[%c0_19, %c0_20, %c0_21] : memref<1x48x48xbf16, #tpu.memory_space<vmem>>, vector<1x48x48xbf16>
    %49 = vector.shape_cast %48 : vector<1x48x48xbf16> to vector<48x48xbf16>
    %50 = vector.extract_strided_slice %49 {offsets = [0, 0], sizes = [16, 48], strides = [1, 1]} : vector<48x48xbf16> to vector<16x48xbf16>
    %cst_22 = arith.constant dense<0.000000e+00> : vector<32x48xf32>
    %51 = tpu.matmul %47, %50, %cst_22 {dimension_numbers = #tpu.dot_dimension_numbers<[1], [0], [0], [1], [0, 0, 1, 1], [], []>} : vector<32x16xbf16>, vector<16x48xbf16>, vector<32x48xf32> -> vector<32x48xf32>
    %52 = vector.broadcast %42 : vector<1x48xf32> to vector<32x48xf32>
    %53 = arith.addf %52, %51 : vector<32x48xf32>
    %54 = vector.extract_strided_slice %11 {offsets = [0, 112], sizes = [32, 16], strides = [1, 1]} : vector<32x144xf32> to vector<32x16xf32>
    %55 = arith.truncf %54 : vector<32x16xf32> to vector<32x16xbf16>
    %56 = vector.extract_strided_slice %40 {offsets = [32, 0], sizes = [32, 32], strides = [1, 1]} : vector<96x32xbf16> to vector<32x32xbf16>
    %cst_23 = arith.constant dense<0.000000e+00> : vector<32x16xf32>
    %57 = tpu.matmul %56, %55, %cst_23 {dimension_numbers = #tpu.dot_dimension_numbers<[1], [0], [0], [1], [0, 0, 1, 1], [], []>} : vector<32x32xbf16>, vector<32x16xbf16>, vector<32x16xf32> -> vector<32x16xf32>
    %58 = arith.truncf %57 : vector<32x16xf32> to vector<32x16xbf16>
    %c0_24 = arith.constant 0 : index
    %c0_25 = arith.constant 0 : index
    %c0_26 = arith.constant 0 : index
    %59 = vector.load %arg4[%c0_24, %c0_25, %c0_26] : memref<1x48x48xbf16, #tpu.memory_space<vmem>>, vector<1x48x48xbf16>
    %60 = vector.shape_cast %59 : vector<1x48x48xbf16> to vector<48x48xbf16>
    %61 = vector.extract_strided_slice %60 {offsets = [16, 0], sizes = [16, 48], strides = [1, 1]} : vector<48x48xbf16> to vector<16x48xbf16>
    %cst_27 = arith.constant dense<0.000000e+00> : vector<32x48xf32>
    %62 = tpu.matmul %58, %61, %cst_27 {dimension_numbers = #tpu.dot_dimension_numbers<[1], [0], [0], [1], [0, 0, 1, 1], [], []>} : vector<32x16xbf16>, vector<16x48xbf16>, vector<32x48xf32> -> vector<32x48xf32>
    %63 = arith.addf %53, %62 : vector<32x48xf32>
    %64 = vector.extract_strided_slice %11 {offsets = [0, 128], sizes = [32, 16], strides = [1, 1]} : vector<32x144xf32> to vector<32x16xf32>
    %65 = arith.truncf %64 : vector<32x16xf32> to vector<32x16xbf16>
    %66 = vector.extract_strided_slice %40 {offsets = [64, 0], sizes = [32, 32], strides = [1, 1]} : vector<96x32xbf16> to vector<32x32xbf16>
    %cst_28 = arith.constant dense<0.000000e+00> : vector<32x16xf32>
    %67 = tpu.matmul %66, %65, %cst_28 {dimension_numbers = #tpu.dot_dimension_numbers<[1], [0], [0], [1], [0, 0, 1, 1], [], []>} : vector<32x32xbf16>, vector<32x16xbf16>, vector<32x16xf32> -> vector<32x16xf32>
    %68 = arith.truncf %67 : vector<32x16xf32> to vector<32x16xbf16>
    %c0_29 = arith.constant 0 : index
    %c0_30 = arith.constant 0 : index
    %c0_31 = arith.constant 0 : index
    %69 = vector.load %arg4[%c0_29, %c0_30, %c0_31] : memref<1x48x48xbf16, #tpu.memory_space<vmem>>, vector<1x48x48xbf16>
    %70 = vector.shape_cast %69 : vector<1x48x48xbf16> to vector<48x48xbf16>
    %71 = vector.extract_strided_slice %70 {offsets = [32, 0], sizes = [16, 48], strides = [1, 1]} : vector<48x48xbf16> to vector<16x48xbf16>
    %cst_32 = arith.constant dense<0.000000e+00> : vector<32x48xf32>
    %72 = tpu.matmul %68, %71, %cst_32 {dimension_numbers = #tpu.dot_dimension_numbers<[1], [0], [0], [1], [0, 0, 1, 1], [], []>} : vector<32x16xbf16>, vector<16x48xbf16>, vector<32x48xf32> -> vector<32x48xf32>
    %73 = arith.addf %63, %72 : vector<32x48xf32>
    %74 = arith.addf %3, %73 : vector<32x48xf32>
    %c0_33 = arith.constant 0 : index
    %c0_34 = arith.constant 0 : index
    %c0_35 = arith.constant 0 : index
    %75 = vector.load %arg10[%c0_33, %c0_34, %c0_35] : memref<1x1x48xf32, #tpu.memory_space<vmem>>, vector<1x1x48xf32>
    %76 = vector.shape_cast %75 : vector<1x1x48xf32> to vector<1x48xf32>
    %c0_36 = arith.constant 0 : index
    %c0_37 = arith.constant 0 : index
    %c0_38 = arith.constant 0 : index
    %77 = vector.load %arg11[%c0_36, %c0_37, %c0_38] : memref<1x1x48xf32, #tpu.memory_space<vmem>>, vector<1x1x48xf32>
    %78 = vector.shape_cast %77 : vector<1x1x48xf32> to vector<1x48xf32>
    %cst_39 = arith.constant dense<0.000000e+00> : vector<32xf32>
    %79 = vector.multi_reduction <add>, %74, %cst_39 [1] : vector<32x48xf32> to vector<32xf32>
    %80 = vector.shape_cast %79 : vector<32xf32> to vector<32x1xf32>
    %cst_40 = arith.constant 0.020833334 : f32
    %81 = vector.broadcast %cst_40 : f32 to vector<32x1xf32>
    %82 = arith.mulf %80, %81 : vector<32x1xf32>
    %83 = vector.broadcast %82 : vector<32x1xf32> to vector<32x48xf32>
    %84 = arith.subf %74, %83 : vector<32x48xf32>
    %85 = arith.mulf %84, %84 : vector<32x48xf32>
    %cst_41 = arith.constant dense<0.000000e+00> : vector<32xf32>
    %86 = vector.multi_reduction <add>, %85, %cst_41 [1] : vector<32x48xf32> to vector<32xf32>
    %87 = vector.shape_cast %86 : vector<32xf32> to vector<32x1xf32>
    %cst_42 = arith.constant 0.020833334 : f32
    %88 = vector.broadcast %cst_42 : f32 to vector<32x1xf32>
    %89 = arith.mulf %87, %88 : vector<32x1xf32>
    %cst_43 = arith.constant 9.99999974E-6 : f32
    %90 = vector.broadcast %cst_43 : f32 to vector<32x1xf32>
    %91 = arith.addf %89, %90 : vector<32x1xf32>
    %92 = math.rsqrt %91 : vector<32x1xf32>
    %93 = vector.broadcast %92 : vector<32x1xf32> to vector<32x48xf32>
    %94 = arith.mulf %84, %93 : vector<32x48xf32>
    %95 = vector.broadcast %76 : vector<1x48xf32> to vector<32x48xf32>
    %96 = arith.mulf %94, %95 : vector<32x48xf32>
    %97 = vector.broadcast %78 : vector<1x48xf32> to vector<32x48xf32>
    %98 = arith.addf %96, %97 : vector<32x48xf32>
    %99 = arith.truncf %98 : vector<32x48xf32> to vector<32x48xbf16>
    %c0_44 = arith.constant 0 : index
    %c0_45 = arith.constant 0 : index
    %c0_46 = arith.constant 0 : index
    %100 = vector.load %arg6[%c0_44, %c0_45, %c0_46] : memref<1x48x2048xbf16, #tpu.memory_space<vmem>>, vector<1x48x2048xbf16>
    %101 = vector.shape_cast %100 : vector<1x48x2048xbf16> to vector<48x2048xbf16>
    %cst_47 = arith.constant dense<0.000000e+00> : vector<32x2048xf32>
    %102 = tpu.matmul %99, %101, %cst_47 {dimension_numbers = #tpu.dot_dimension_numbers<[1], [0], [0], [1], [0, 0, 1, 1], [], []>} : vector<32x48xbf16>, vector<48x2048xbf16>, vector<32x2048xf32> -> vector<32x2048xf32>
    %c0_48 = arith.constant 0 : index
    %c0_49 = arith.constant 0 : index
    %c0_50 = arith.constant 0 : index
    %103 = vector.load %arg7[%c0_48, %c0_49, %c0_50] : memref<1x1x2048xf32, #tpu.memory_space<vmem>>, vector<1x1x2048xf32>
    %104 = vector.shape_cast %103 : vector<1x1x2048xf32> to vector<1x2048xf32>
    %105 = vector.broadcast %104 : vector<1x2048xf32> to vector<32x2048xf32>
    %106 = arith.addf %102, %105 : vector<32x2048xf32>
    %cst_51 = arith.constant 0.000000e+00 : f32
    %107 = vector.broadcast %cst_51 : f32 to vector<32x2048xf32>
    %108 = arith.maximumf %106, %107 : vector<32x2048xf32>
    %109 = arith.truncf %108 : vector<32x2048xf32> to vector<32x2048xbf16>
    %c0_52 = arith.constant 0 : index
    %c0_53 = arith.constant 0 : index
    %c0_54 = arith.constant 0 : index
    %110 = vector.load %arg8[%c0_52, %c0_53, %c0_54] : memref<1x2048x48xbf16, #tpu.memory_space<vmem>>, vector<1x2048x48xbf16>
    %111 = vector.shape_cast %110 : vector<1x2048x48xbf16> to vector<2048x48xbf16>
    %cst_55 = arith.constant dense<0.000000e+00> : vector<32x48xf32>
    %112 = tpu.matmul %109, %111, %cst_55 {dimension_numbers = #tpu.dot_dimension_numbers<[1], [0], [0], [1], [0, 0, 1, 1], [], []>} : vector<32x2048xbf16>, vector<2048x48xbf16>, vector<32x48xf32> -> vector<32x48xf32>
    %c0_56 = arith.constant 0 : index
    %c0_57 = arith.constant 0 : index
    %c0_58 = arith.constant 0 : index
    %113 = vector.load %arg9[%c0_56, %c0_57, %c0_58] : memref<1x1x48xf32, #tpu.memory_space<vmem>>, vector<1x1x48xf32>
    %114 = vector.shape_cast %113 : vector<1x1x48xf32> to vector<1x48xf32>
    %115 = vector.broadcast %114 : vector<1x48xf32> to vector<32x48xf32>
    %116 = arith.addf %112, %115 : vector<32x48xf32>
    %117 = arith.addf %98, %116 : vector<32x48xf32>
    %c0_59 = arith.constant 0 : index
    %c0_60 = arith.constant 0 : index
    %c0_61 = arith.constant 0 : index
    %118 = vector.load %arg12[%c0_59, %c0_60, %c0_61] : memref<1x1x48xf32, #tpu.memory_space<vmem>>, vector<1x1x48xf32>
    %119 = vector.shape_cast %118 : vector<1x1x48xf32> to vector<1x48xf32>
    %c0_62 = arith.constant 0 : index
    %c0_63 = arith.constant 0 : index
    %c0_64 = arith.constant 0 : index
    %120 = vector.load %arg13[%c0_62, %c0_63, %c0_64] : memref<1x1x48xf32, #tpu.memory_space<vmem>>, vector<1x1x48xf32>
    %121 = vector.shape_cast %120 : vector<1x1x48xf32> to vector<1x48xf32>
    %cst_65 = arith.constant dense<0.000000e+00> : vector<32xf32>
    %122 = vector.multi_reduction <add>, %117, %cst_65 [1] : vector<32x48xf32> to vector<32xf32>
    %123 = vector.shape_cast %122 : vector<32xf32> to vector<32x1xf32>
    %cst_66 = arith.constant 0.020833334 : f32
    %124 = vector.broadcast %cst_66 : f32 to vector<32x1xf32>
    %125 = arith.mulf %123, %124 : vector<32x1xf32>
    %126 = vector.broadcast %125 : vector<32x1xf32> to vector<32x48xf32>
    %127 = arith.subf %117, %126 : vector<32x48xf32>
    %128 = arith.mulf %127, %127 : vector<32x48xf32>
    %cst_67 = arith.constant dense<0.000000e+00> : vector<32xf32>
    %129 = vector.multi_reduction <add>, %128, %cst_67 [1] : vector<32x48xf32> to vector<32xf32>
    %130 = vector.shape_cast %129 : vector<32xf32> to vector<32x1xf32>
    %cst_68 = arith.constant 0.020833334 : f32
    %131 = vector.broadcast %cst_68 : f32 to vector<32x1xf32>
    %132 = arith.mulf %130, %131 : vector<32x1xf32>
    %cst_69 = arith.constant 9.99999974E-6 : f32
    %133 = vector.broadcast %cst_69 : f32 to vector<32x1xf32>
    %134 = arith.addf %132, %133 : vector<32x1xf32>
    %135 = math.rsqrt %134 : vector<32x1xf32>
    %136 = vector.broadcast %135 : vector<32x1xf32> to vector<32x48xf32>
    %137 = arith.mulf %127, %136 : vector<32x48xf32>
    %138 = vector.broadcast %119 : vector<1x48xf32> to vector<32x48xf32>
    %139 = arith.mulf %137, %138 : vector<32x48xf32>
    %140 = vector.broadcast %121 : vector<1x48xf32> to vector<32x48xf32>
    %141 = arith.addf %139, %140 : vector<32x48xf32>
    %c0_70 = arith.constant 0 : index
    %c0_71 = arith.constant 0 : index
    %142 = vector.load %arg17[%c0_70, %c0_71] : memref<32x48xf32, #tpu.memory_space<vmem>>, vector<32x48xf32>
    tpu.vector_store %arg17[%c0_70, %c0_71], %141 {strides = array<i32>} : memref<32x48xf32, #tpu.memory_space<vmem>>, vector<32x48xf32>,
    %c1_i32 = arith.constant 1 : i32
    %143 = arith.cmpi eq, %arg0, %c1_i32 : i32
    %144 = arith.extui %143 : i1 to i32
    %c0_i32_72 = arith.constant 0 : i32
    %145 = arith.cmpi ne, %144, %c0_i32_72 : i32
    scf.if %145 {
      %146 = arith.truncf %141 : vector<32x48xf32> to vector<32x48xbf16>
      %c0_73 = arith.constant 0 : index
      %c0_74 = arith.constant 0 : index
      %147 = vector.load %arg14[%c0_73, %c0_74] : memref<48x128xbf16, #tpu.memory_space<vmem>>, vector<48x128xbf16>
      %cst_75 = arith.constant dense<0.000000e+00> : vector<32x128xf32>
      %148 = tpu.matmul %146, %147, %cst_75 {dimension_numbers = #tpu.dot_dimension_numbers<[1], [0], [0], [1], [0, 0, 1, 1], [], []>} : vector<32x48xbf16>, vector<48x128xbf16>, vector<32x128xf32> -> vector<32x128xf32>
      %c0_76 = arith.constant 0 : index
      %c0_77 = arith.constant 0 : index
      %149 = vector.load %arg15[%c0_76, %c0_77] : memref<1x128xf32, #tpu.memory_space<vmem>>, vector<1x128xf32>
      %150 = vector.broadcast %149 : vector<1x128xf32> to vector<32x128xf32>
      %151 = arith.addf %148, %150 : vector<32x128xf32>
      %cst_78 = arith.constant dense<0xFF800000> : vector<32xf32>
      %152 = vector.multi_reduction <maximumf>, %151, %cst_78 [1] : vector<32x128xf32> to vector<32xf32>
      %153 = vector.shape_cast %152 : vector<32xf32> to vector<32x1xf32>
      %154 = vector.broadcast %153 : vector<32x1xf32> to vector<32x128xf32>
      %155 = arith.subf %151, %154 : vector<32x128xf32>
      %156 = math.exp %155 : vector<32x128xf32>
      %cst_79 = arith.constant dense<0.000000e+00> : vector<32xf32>
      %157 = vector.multi_reduction <add>, %156, %cst_79 [1] : vector<32x128xf32> to vector<32xf32>
      %158 = vector.shape_cast %157 : vector<32xf32> to vector<32x1xf32>
      %159 = math.log %158 : vector<32x1xf32>
      %160 = vector.broadcast %159 : vector<32x1xf32> to vector<32x128xf32>
      %161 = arith.subf %155, %160 : vector<32x128xf32>
      %c0_80 = arith.constant 0 : index
      %c0_81 = arith.constant 0 : index
      %162 = vector.load %arg16[%c0_80, %c0_81] : memref<32x128xf32, #tpu.memory_space<vmem>>, vector<32x128xf32>
      tpu.vector_store %arg16[%c0_80, %c0_81], %161 {strides = array<i32>} : memref<32x128xf32, #tpu.memory_space<vmem>>, vector<32x128xf32>,
    } else {
    }
    return
  }
  func.func @transform_0(%arg0: i32) -> (i32, i32) {
    %c0_i32 = arith.constant 0 : i32
    %c0_i32_0 = arith.constant 0 : i32
    %c0_i32_1 = arith.constant 0 : i32
    return %c0_i32, %c0_i32_0 : i32, i32
  }
  func.func @transform_1(%arg0: i32) -> (i32, i32, i32) {
    %c0_i32 = arith.constant 0 : i32
    %c0_i32_0 = arith.constant 0 : i32
    %c0_i32_1 = arith.constant 0 : i32
    return %arg0, %c0_i32, %c0_i32_0 : i32, i32, i32
  }
  func.func @transform_2(%arg0: i32) -> (i32, i32, i32) {
    %c0_i32 = arith.constant 0 : i32
    %c0_i32_0 = arith.constant 0 : i32
    %c0_i32_1 = arith.constant 0 : i32
    return %arg0, %c0_i32, %c0_i32_0 : i32, i32, i32
  }
  func.func @transform_3(%arg0: i32) -> (i32, i32, i32) {
    %c0_i32 = arith.constant 0 : i32
    %c0_i32_0 = arith.constant 0 : i32
    %c0_i32_1 = arith.constant 0 : i32
    return %arg0, %c0_i32, %c0_i32_0 : i32, i32, i32
  }
  func.func @transform_4(%arg0: i32) -> (i32, i32, i32) {
    %c0_i32 = arith.constant 0 : i32
    %c0_i32_0 = arith.constant 0 : i32
    %c0_i32_1 = arith.constant 0 : i32
    return %arg0, %c0_i32, %c0_i32_0 : i32, i32, i32
  }
  func.func @transform_5(%arg0: i32) -> (i32, i32, i32) {
    %c0_i32 = arith.constant 0 : i32
    %c0_i32_0 = arith.constant 0 : i32
    %c0_i32_1 = arith.constant 0 : i32
    return %arg0, %c0_i32, %c0_i32_0 : i32, i32, i32
  }
  func.func @transform_6(%arg0: i32) -> (i32, i32, i32) {
    %c0_i32 = arith.constant 0 : i32
    %c0_i32_0 = arith.constant 0 : i32
    %c0_i32_1 = arith.constant 0 : i32
    return %arg0, %c0_i32, %c0_i32_0 : i32, i32, i32
  }
  func.func @transform_7(%arg0: i32) -> (i32, i32, i32) {
    %c0_i32 = arith.constant 0 : i32
    %c0_i32_0 = arith.constant 0 : i32
    %c0_i32_1 = arith.constant 0 : i32
    return %arg0, %c0_i32, %c0_i32_0 : i32, i32, i32
  }
  func.func @transform_8(%arg0: i32) -> (i32, i32, i32) {
    %c0_i32 = arith.constant 0 : i32
    %c0_i32_0 = arith.constant 0 : i32
    %c0_i32_1 = arith.constant 0 : i32
    return %arg0, %c0_i32, %c0_i32_0 : i32, i32, i32
  }
  func.func @transform_9(%arg0: i32) -> (i32, i32, i32) {
    %c0_i32 = arith.constant 0 : i32
    %c0_i32_0 = arith.constant 0 : i32
    %c0_i32_1 = arith.constant 0 : i32
    return %arg0, %c0_i32, %c0_i32_0 : i32, i32, i32
  }
  func.func @transform_10(%arg0: i32) -> (i32, i32, i32) {
    %c0_i32 = arith.constant 0 : i32
    %c0_i32_0 = arith.constant 0 : i32
    %c0_i32_1 = arith.constant 0 : i32
    return %arg0, %c0_i32, %c0_i32_0 : i32, i32, i32
  }
  func.func @transform_11(%arg0: i32) -> (i32, i32, i32) {
    %c0_i32 = arith.constant 0 : i32
    %c0_i32_0 = arith.constant 0 : i32
    %c0_i32_1 = arith.constant 0 : i32
    return %arg0, %c0_i32, %c0_i32_0 : i32, i32, i32
  }
  func.func @transform_12(%arg0: i32) -> (i32, i32, i32) {
    %c0_i32 = arith.constant 0 : i32
    %c0_i32_0 = arith.constant 0 : i32
    %c0_i32_1 = arith.constant 0 : i32
    return %arg0, %c0_i32, %c0_i32_0 : i32, i32, i32
  }
  func.func @transform_13(%arg0: i32) -> (i32, i32) {
    %c0_i32 = arith.constant 0 : i32
    %c0_i32_0 = arith.constant 0 : i32
    %c0_i32_1 = arith.constant 0 : i32
    return %c0_i32, %c0_i32_0 : i32, i32
  }
  func.func @transform_14(%arg0: i32) -> (i32, i32) {
    %c0_i32 = arith.constant 0 : i32
    %c0_i32_0 = arith.constant 0 : i32
    %c0_i32_1 = arith.constant 0 : i32
    return %c0_i32, %c0_i32_0 : i32, i32
  }
  func.func @transform_15(%arg0: i32) -> (i32, i32) {
    %c0_i32 = arith.constant 0 : i32
    %c0_i32_0 = arith.constant 0 : i32
    %c0_i32_1 = arith.constant 0 : i32
    return %c0_i32, %c0_i32_0 : i32, i32
  }
}

</mosaic_0001>

<llo_original>
// kernel: transformer_forward.1
$region0: #{transformer_forward.1}
  #allocation0 [shape = 'u32[]', space=smem, size = 0x4, offset = 0x4, fixed_abs, tag = 'smem constant byte address 0x4 - core index']
  #allocation1 [shape = 'u32[144,128]{1,0:T(1,128)}', space=vmem, size = 0x12000, scoped, tag = 'internal scratch']
  #allocation2 [shape = 'f32[32,48]{1,0:T(8,128)}', space=vmem, size = 0x4000, scoped, tag = 'scratch operand']
  #allocation3 [shape = 'f32[96,32]{1,0:T(8,128)}', space=vmem, size = 0xc000, scoped, tag = 'scratch operand']
  %s0 = inlined_call_operand.vmem [shape: f32[32,48], index: 0, kind: input, shape index: {}]
  %s1 = inlined_call_operand.vmem [shape: bf16[2,48,144], index: 1, kind: input, shape index: {}]
  %s2 = inlined_call_operand.vmem [shape: f32[2,1,144], index: 2, kind: input, shape index: {}]
  %s3 = inlined_call_operand.vmem [shape: bf16[2,48,48], index: 3, kind: input, shape index: {}]
  %s4 = inlined_call_operand.vmem [shape: f32[2,1,48], index: 4, kind: input, shape index: {}]
  %s5 = inlined_call_operand.vmem [shape: bf16[2,48,2048], index: 5, kind: input, shape index: {}]
  %s6 = inlined_call_operand.vmem [shape: f32[2,1,2048], index: 6, kind: input, shape index: {}]
  %s7 = inlined_call_operand.vmem [shape: bf16[2,2048,48], index: 7, kind: input, shape index: {}]
  %s8 = inlined_call_operand.vmem [shape: f32[2,1,48], index: 8, kind: input, shape index: {}]
  %s9 = inlined_call_operand.vmem [shape: f32[2,1,48], index: 9, kind: input, shape index: {}]
  %s10 = inlined_call_operand.vmem [shape: f32[2,1,48], index: 10, kind: input, shape index: {}]
  %s11 = inlined_call_operand.vmem [shape: f32[2,1,48], index: 11, kind: input, shape index: {}]
  %s12 = inlined_call_operand.vmem [shape: f32[2,1,48], index: 12, kind: input, shape index: {}]
  %s13 = inlined_call_operand.vmem [shape: bf16[48,128], index: 13, kind: input, shape index: {}]
  %s14 = inlined_call_operand.vmem [shape: f32[1,128], index: 14, kind: input, shape index: {}]
  %s15 = inlined_call_operand.vmem [shape: f32[32,128], index: 15, kind: output, shape index: {}]
  %s16 = sld [smem:[#allocation0]]
  $region101: #{transformer_forward.1} parent=0
    _
  %s18 = ssub.s32 1, %s16
  %s19 = scalar_select 0, %s18, %s16
  loop: start=0, step=1, limit=4
  $region2: #{transformer_forward.1} parent=0 // loop_pre_header
    _
  $region3: #{transformer_forward.1} parent=0 // loop_header
    %s21 = sphi 0, %s25
    %p22 = scmp.ge.s32.totalorder %s21, 4
    %s29 = sphi 0, %s29
    %s31 = sphi 0, %s29
    %s32 = sphi 0, %s31
    %s46 = sphi 0, %s32
    %s52 = sphi 0, %s54
    %s55 = sphi 0, %s52
    %s56 = sphi 0, %s55
    %s72 = sphi 0, %s56
    %s78 = sphi 0, %s80
    %s81 = sphi 0, %s78
    %s82 = sphi 0, %s81
    %s98 = sphi 0, %s82
    %s104 = sphi 0, %s106
    %s107 = sphi 0, %s104
    %s108 = sphi 0, %s107
    %s124 = sphi 0, %s108
    %s130 = sphi 0, %s132
    %s133 = sphi 0, %s130
    %s134 = sphi 0, %s133
    %s150 = sphi 0, %s134
    %s156 = sphi 0, %s158
    %s159 = sphi 0, %s156
    %s160 = sphi 0, %s159
    %s176 = sphi 0, %s160
    %s182 = sphi 0, %s184
    %s185 = sphi 0, %s182
    %s186 = sphi 0, %s185
    %s202 = sphi 0, %s186
    %s208 = sphi 0, %s210
    %s211 = sphi 0, %s208
    %s212 = sphi 0, %s211
    %s228 = sphi 0, %s212
    %s234 = sphi 0, %s236
    %s237 = sphi 0, %s234
    %s238 = sphi 0, %s237
    %s254 = sphi 0, %s238
    %s260 = sphi 0, %s262
    %s263 = sphi 0, %s260
    %s264 = sphi 0, %s263
    %s280 = sphi 0, %s264
    %s286 = sphi 0, %s288
    %s289 = sphi 0, %s286
    %s290 = sphi 0, %s289
    %s306 = sphi 0, %s290
    %s312 = sphi 0, %s314
    %s315 = sphi 0, %s312
    %s316 = sphi 0, %s315
    %s332 = sphi 0, %s316
    %s338 = sphi 0, %s340
    %s341 = sphi 0, %s338
    %s342 = sphi 0, %s341
    %s358 = sphi 0, %s342
    %s362 = sphi 0, %s362
    %s364 = sphi 0, %s362
    %s365 = sphi 0, %s364
    %s379 = sphi 0, %s365
    %s383 = sphi 0, %s383
    %s385 = sphi 0, %s383
    %s386 = sphi 0, %s385
    %s400 = sphi 0, %s386
    %s404 = sphi 0, %s404
    %s406 = sphi 0, %s404
    %s407 = sphi 0, %s406
    %s421 = sphi 0, %s407
  $region4: #{transformer_forward.1} parent=0 // loop_header_branch
    %24 = sbr.rel (%p22) target = $region8
  $region5: #{transformer_forward.1} parent=0 // loop_body
    %s26 = ssub.s32 %s21, 1
    %s27 = ssub.s32 %s21, 2
    %s28 = sadd.s32 %s21, 1
    %s30 = sadd.s32 %s29, 1
    %p33 = scmp.eq.s32.totalorder %s21, 1
    %p34 = scmp.ne.s32.totalorder %s29, %s31
    %p35 = scmp.eq.s32.totalorder %s21, 0
    %p36 = por %p34, %p35
    %p37 = scmp.ne.s32.totalorder %s29, %s31
    %p38 = scmp.eq.s32.totalorder %s26, 1
    %p39 = por %p37, %p38
    %p40 = scmp.ne.s32.totalorder %s31, %s32
    %p41 = scmp.eq.s32.totalorder %s26, 0
    %p42 = por %p40, %p41
    %p43 = scmp.ne.s32.totalorder %s31, %s32
    %p44 = scmp.eq.s32.totalorder %s27, 1
    %p45 = por %p43, %p44
    %p47 = scmp.ne.s32.totalorder %s32, %s46
    %p48 = scmp.eq.s32.totalorder %s27, 0
    %p49 = por %p47, %p48
    %s50 = ssub.s32 %s21, %s28
    %p51 = scmp.eq.s32.totalorder %s50, 0
    %s53 = sadd.s32 %s52, 1
    %s54 = scalar_select %p51, %s52, %s53
    %p57 = pneg %p51
    %p58 = scmp.eq.s32.totalorder %s21, 1
    %p59 = por %p57, %p58
    %p60 = scmp.ne.s32.totalorder %s52, %s55
    %p61 = scmp.eq.s32.totalorder %s21, 0
    %p62 = por %p60, %p61
    %p63 = scmp.ne.s32.totalorder %s52, %s55
    %p64 = scmp.eq.s32.totalorder %s26, 1
    %p65 = por %p63, %p64
    %p66 = scmp.ne.s32.totalorder %s55, %s56
    %p67 = scmp.eq.s32.totalorder %s26, 0
    %p68 = por %p66, %p67
    %p69 = scmp.ne.s32.totalorder %s55, %s56
    %p70 = scmp.eq.s32.totalorder %s27, 1
    %p71 = por %p69, %p70
    %p73 = scmp.ne.s32.totalorder %s56, %s72
    %p74 = scmp.eq.s32.totalorder %s27, 0
    %p75 = por %p73, %p74
    %s76 = ssub.s32 %s21, %s28
    %p77 = scmp.eq.s32.totalorder %s76, 0
    %s79 = sadd.s32 %s78, 1
    %s80 = scalar_select %p77, %s78, %s79
    %p83 = pneg %p77
    %p84 = scmp.eq.s32.totalorder %s21, 1
    %p85 = por %p83, %p84
    %p86 = scmp.ne.s32.totalorder %s78, %s81
    %p87 = scmp.eq.s32.totalorder %s21, 0
    %p88 = por %p86, %p87
    %p89 = scmp.ne.s32.totalorder %s78, %s81
    %p90 = scmp.eq.s32.totalorder %s26, 1
    %p91 = por %p89, %p90
    %p92 = scmp.ne.s32.totalorder %s81, %s82
    %p93 = scmp.eq.s32.totalorder %s26, 0
    %p94 = por %p92, %p93
    %p95 = scmp.ne.s32.totalorder %s81, %s82
    %p96 = scmp.eq.s32.totalorder %s27, 1
    %p97 = por %p95, %p96
    %p99 = scmp.ne.s32.totalorder %s82, %s98
    %p100 = scmp.eq.s32.totalorder %s27, 0
    %p101 = por %p99, %p100
    %s102 = ssub.s32 %s21, %s28
    %p103 = scmp.eq.s32.totalorder %s102, 0
    %s105 = sadd.s32 %s104, 1
    %s106 = scalar_select %p103, %s104, %s105
    %p109 = pneg %p103
    %p110 = scmp.eq.s32.totalorder %s21, 1
    %p111 = por %p109, %p110
    %p112 = scmp.ne.s32.totalorder %s104, %s107
    %p113 = scmp.eq.s32.totalorder %s21, 0
    %p114 = por %p112, %p113
    %p115 = scmp.ne.s32.totalorder %s104, %s107
    %p116 = scmp.eq.s32.totalorder %s26, 1
    %p117 = por %p115, %p116
    %p118 = scmp.ne.s32.totalorder %s107, %s108
    %p119 = scmp.eq.s32.totalorder %s26, 0
    %p120 = por %p118, %p119
    %p121 = scmp.ne.s32.totalorder %s107, %s108
    %p122 = scmp.eq.s32.totalorder %s27, 1
    %p123 = por %p121, %p122
    %p125 = scmp.ne.s32.totalorder %s108, %s124
    %p126 = scmp.eq.s32.totalorder %s27, 0
    %p127 = por %p125, %p126
    %s128 = ssub.s32 %s21, %s28
    %p129 = scmp.eq.s32.totalorder %s128, 0
    %s131 = sadd.s32 %s130, 1
    %s132 = scalar_select %p129, %s130, %s131
    %p135 = pneg %p129
    %p136 = scmp.eq.s32.totalorder %s21, 1
    %p137 = por %p135, %p136
    %p138 = scmp.ne.s32.totalorder %s130, %s133
    %p139 = scmp.eq.s32.totalorder %s21, 0
    %p140 = por %p138, %p139
    %p141 = scmp.ne.s32.totalorder %s130, %s133
    %p142 = scmp.eq.s32.totalorder %s26, 1
    %p143 = por %p141, %p142
    %p144 = scmp.ne.s32.totalorder %s133, %s134
    %p145 = scmp.eq.s32.totalorder %s26, 0
    %p146 = por %p144, %p145
    %p147 = scmp.ne.s32.totalorder %s133, %s134
    %p148 = scmp.eq.s32.totalorder %s27, 1
    %p149 = por %p147, %p148
    %p151 = scmp.ne.s32.totalorder %s134, %s150
    %p152 = scmp.eq.s32.totalorder %s27, 0
    %p153 = por %p151, %p152
    %s154 = ssub.s32 %s21, %s28
    %p155 = scmp.eq.s32.totalorder %s154, 0
    %s157 = sadd.s32 %s156, 1
    %s158 = scalar_select %p155, %s156, %s157
    %p161 = pneg %p155
    %p162 = scmp.eq.s32.totalorder %s21, 1
    %p163 = por %p161, %p162
    %p164 = scmp.ne.s32.totalorder %s156, %s159
    %p165 = scmp.eq.s32.totalorder %s21, 0
    %p166 = por %p164, %p165
    %p167 = scmp.ne.s32.totalorder %s156, %s159
    %p168 = scmp.eq.s32.totalorder %s26, 1
    %p169 = por %p167, %p168
    %p170 = scmp.ne.s32.totalorder %s159, %s160
    %p171 = scmp.eq.s32.totalorder %s26, 0
    %p172 = por %p170, %p171
    %p173 = scmp.ne.s32.totalorder %s159, %s160
    %p174 = scmp.eq.s32.totalorder %s27, 1
    %p175 = por %p173, %p174
    %p177 = scmp.ne.s32.totalorder %s160, %s176
    %p178 = scmp.eq.s32.totalorder %s27, 0
    %p179 = por %p177, %p178
    %s180 = ssub.s32 %s21, %s28
    %p181 = scmp.eq.s32.totalorder %s180, 0
    %s183 = sadd.s32 %s182, 1
    %s184 = scalar_select %p181, %s182, %s183
    %p187 = pneg %p181
    %p188 = scmp.eq.s32.totalorder %s21, 1
    %p189 = por %p187, %p188
    %p190 = scmp.ne.s32.totalorder %s182, %s185
    %p191 = scmp.eq.s32.totalorder %s21, 0
    %p192 = por %p190, %p191
    %p193 = scmp.ne.s32.totalorder %s182, %s185
    %p194 = scmp.eq.s32.totalorder %s26, 1
    %p195 = por %p193, %p194
    %p196 = scmp.ne.s32.totalorder %s185, %s186
    %p197 = scmp.eq.s32.totalorder %s26, 0
    %p198 = por %p196, %p197
    %p199 = scmp.ne.s32.totalorder %s185, %s186
    %p200 = scmp.eq.s32.totalorder %s27, 1
    %p201 = por %p199, %p200
    %p203 = scmp.ne.s32.totalorder %s186, %s202
    %p204 = scmp.eq.s32.totalorder %s27, 0
    %p205 = por %p203, %p204
    %s206 = ssub.s32 %s21, %s28
    %p207 = scmp.eq.s32.totalorder %s206, 0
    %s209 = sadd.s32 %s208, 1
    %s210 = scalar_select %p207, %s208, %s209
    %p213 = pneg %p207
    %p214 = scmp.eq.s32.totalorder %s21, 1
    %p215 = por %p213, %p214
    %p216 = scmp.ne.s32.totalorder %s208, %s211
    %p217 = scmp.eq.s32.totalorder %s21, 0
    %p218 = por %p216, %p217
    %p219 = scmp.ne.s32.totalorder %s208, %s211
    %p220 = scmp.eq.s32.totalorder %s26, 1
    %p221 = por %p219, %p220
    %p222 = scmp.ne.s32.totalorder %s211, %s212
    %p223 = scmp.eq.s32.totalorder %s26, 0
    %p224 = por %p222, %p223
    %p225 = scmp.ne.s32.totalorder %s211, %s212
    %p226 = scmp.eq.s32.totalorder %s27, 1
    %p227 = por %p225, %p226
    %p229 = scmp.ne.s32.totalorder %s212, %s228
    %p230 = scmp.eq.s32.totalorder %s27, 0
    %p231 = por %p229, %p230
    %s232 = ssub.s32 %s21, %s28
    %p233 = scmp.eq.s32.totalorder %s232, 0
    %s235 = sadd.s32 %s234, 1
    %s236 = scalar_select %p233, %s234, %s235
    %p239 = pneg %p233
    %p240 = scmp.eq.s32.totalorder %s21, 1
    %p241 = por %p239, %p240
    %p242 = scmp.ne.s32.totalorder %s234, %s237
    %p243 = scmp.eq.s32.totalorder %s21, 0
    %p244 = por %p242, %p243
    %p245 = scmp.ne.s32.totalorder %s234, %s237
    %p246 = scmp.eq.s32.totalorder %s26, 1
    %p247 = por %p245, %p246
    %p248 = scmp.ne.s32.totalorder %s237, %s238
    %p249 = scmp.eq.s32.totalorder %s26, 0
    %p250 = por %p248, %p249
    %p251 = scmp.ne.s32.totalorder %s237, %s238
    %p252 = scmp.eq.s32.totalorder %s27, 1
    %p253 = por %p251, %p252
    %p255 = scmp.ne.s32.totalorder %s238, %s254
    %p256 = scmp.eq.s32.totalorder %s27, 0
    %p257 = por %p255, %p256
    %s258 = ssub.s32 %s21, %s28
    %p259 = scmp.eq.s32.totalorder %s258, 0
    %s261 = sadd.s32 %s260, 1
    %s262 = scalar_select %p259, %s260, %s261
    %p265 = pneg %p259
    %p266 = scmp.eq.s32.totalorder %s21, 1
    %p267 = por %p265, %p266
    %p268 = scmp.ne.s32.totalorder %s260, %s263
    %p269 = scmp.eq.s32.totalorder %s21, 0
    %p270 = por %p268, %p269
    %p271 = scmp.ne.s32.totalorder %s260, %s263
    %p272 = scmp.eq.s32.totalorder %s26, 1
    %p273 = por %p271, %p272
    %p274 = scmp.ne.s32.totalorder %s263, %s264
    %p275 = scmp.eq.s32.totalorder %s26, 0
    %p276 = por %p274, %p275
    %p277 = scmp.ne.s32.totalorder %s263, %s264
    %p278 = scmp.eq.s32.totalorder %s27, 1
    %p279 = por %p277, %p278
    %p281 = scmp.ne.s32.totalorder %s264, %s280
    %p282 = scmp.eq.s32.totalorder %s27, 0
    %p283 = por %p281, %p282
    %s284 = ssub.s32 %s21, %s28
    %p285 = scmp.eq.s32.totalorder %s284, 0
    %s287 = sadd.s32 %s286, 1
    %s288 = scalar_select %p285, %s286, %s287
    %p291 = pneg %p285
    %p292 = scmp.eq.s32.totalorder %s21, 1
    %p293 = por %p291, %p292
    %p294 = scmp.ne.s32.totalorder %s286, %s289
    %p295 = scmp.eq.s32.totalorder %s21, 0
    %p296 = por %p294, %p295
    %p297 = scmp.ne.s32.totalorder %s286, %s289
    %p298 = scmp.eq.s32.totalorder %s26, 1
    %p299 = por %p297, %p298
    %p300 = scmp.ne.s32.totalorder %s289, %s290
    %p301 = scmp.eq.s32.totalorder %s26, 0
    %p302 = por %p300, %p301
    %p303 = scmp.ne.s32.totalorder %s289, %s290
    %p304 = scmp.eq.s32.totalorder %s27, 1
    %p305 = por %p303, %p304
    %p307 = scmp.ne.s32.totalorder %s290, %s306
    %p308 = scmp.eq.s32.totalorder %s27, 0
    %p309 = por %p307, %p308
    %s310 = ssub.s32 %s21, %s28
    %p311 = scmp.eq.s32.totalorder %s310, 0
    %s313 = sadd.s32 %s312, 1
    %s314 = scalar_select %p311, %s312, %s313
    %p317 = pneg %p311
    %p318 = scmp.eq.s32.totalorder %s21, 1
    %p319 = por %p317, %p318
    %p320 = scmp.ne.s32.totalorder %s312, %s315
    %p321 = scmp.eq.s32.totalorder %s21, 0
    %p322 = por %p320, %p321
    %p323 = scmp.ne.s32.totalorder %s312, %s315
    %p324 = scmp.eq.s32.totalorder %s26, 1
    %p325 = por %p323, %p324
    %p326 = scmp.ne.s32.totalorder %s315, %s316
    %p327 = scmp.eq.s32.totalorder %s26, 0
    %p328 = por %p326, %p327
    %p329 = scmp.ne.s32.totalorder %s315, %s316
    %p330 = scmp.eq.s32.totalorder %s27, 1
    %p331 = por %p329, %p330
    %p333 = scmp.ne.s32.totalorder %s316, %s332
    %p334 = scmp.eq.s32.totalorder %s27, 0
    %p335 = por %p333, %p334
    %s336 = ssub.s32 %s21, %s28
    %p337 = scmp.eq.s32.totalorder %s336, 0
    %s339 = sadd.s32 %s338, 1
    %s340 = scalar_select %p337, %s338, %s339
    %p343 = pneg %p337
    %p344 = scmp.eq.s32.totalorder %s21, 1
    %p345 = por %p343, %p344
    %p346 = scmp.ne.s32.totalorder %s338, %s341
    %p347 = scmp.eq.s32.totalorder %s21, 0
    %p348 = por %p346, %p347
    %p349 = scmp.ne.s32.totalorder %s338, %s341
    %p350 = scmp.eq.s32.totalorder %s26, 1
    %p351 = por %p349, %p350
    %p352 = scmp.ne.s32.totalorder %s341, %s342
    %p353 = scmp.eq.s32.totalorder %s26, 0
    %p354 = por %p352, %p353
    %p355 = scmp.ne.s32.totalorder %s341, %s342
    %p356 = scmp.eq.s32.totalorder %s27, 1
    %p357 = por %p355, %p356
    %p359 = scmp.ne.s32.totalorder %s342, %s358
    %p360 = scmp.eq.s32.totalorder %s27, 0
    %p361 = por %p359, %p360
    %s363 = sadd.s32 %s362, 1
    %p366 = scmp.eq.s32.totalorder %s21, 1
    %p367 = scmp.ne.s32.totalorder %s362, %s364
    %p368 = scmp.eq.s32.totalorder %s21, 0
    %p369 = por %p367, %p368
    %p370 = scmp.ne.s32.totalorder %s362, %s364
    %p371 = scmp.eq.s32.totalorder %s26, 1
    %p372 = por %p370, %p371
    %p373 = scmp.ne.s32.totalorder %s364, %s365
    %p374 = scmp.eq.s32.totalorder %s26, 0
    %p375 = por %p373, %p374
    %p376 = scmp.ne.s32.totalorder %s364, %s365
    %p377 = scmp.eq.s32.totalorder %s27, 1
    %p378 = por %p376, %p377
    %p380 = scmp.ne.s32.totalorder %s365, %s379
    %p381 = scmp.eq.s32.totalorder %s27, 0
    %p382 = por %p380, %p381
    %s384 = sadd.s32 %s383, 1
    %p387 = scmp.eq.s32.totalorder %s21, 1
    %p388 = scmp.ne.s32.totalorder %s383, %s385
    %p389 = scmp.eq.s32.totalorder %s21, 0
    %p390 = por %p388, %p389
    %p391 = scmp.ne.s32.totalorder %s383, %s385
    %p392 = scmp.eq.s32.totalorder %s26, 1
    %p393 = por %p391, %p392
    %p394 = scmp.ne.s32.totalorder %s385, %s386
    %p395 = scmp.eq.s32.totalorder %s26, 0
    %p396 = por %p394, %p395
    %p397 = scmp.ne.s32.totalorder %s385, %s386
    %p398 = scmp.eq.s32.totalorder %s27, 1
    %p399 = por %p397, %p398
    %p401 = scmp.ne.s32.totalorder %s386, %s400
    %p402 = scmp.eq.s32.totalorder %s27, 0
    %p403 = por %p401, %p402
    %s405 = sadd.s32 %s404, 1
    %p408 = scmp.eq.s32.totalorder %s21, 1
    %p409 = scmp.ne.s32.totalorder %s404, %s406
    %p410 = scmp.eq.s32.totalorder %s21, 0
    %p411 = por %p409, %p410
    %p412 = scmp.ne.s32.totalorder %s404, %s406
    %p413 = scmp.eq.s32.totalorder %s26, 1
    %p414 = por %p412, %p413
    %p415 = scmp.ne.s32.totalorder %s406, %s407
    %p416 = scmp.eq.s32.totalorder %s26, 0
    %p417 = por %p415, %p416
    %p418 = scmp.ne.s32.totalorder %s406, %s407
    %p419 = scmp.eq.s32.totalorder %s27, 1
    %p420 = por %p418, %p419
    %p422 = scmp.ne.s32.totalorder %s407, %s421
    %p423 = scmp.eq.s32.totalorder %s27, 0
    %p424 = por %p422, %p423
    %p425 = scmp.le.s32.totalorder 1, %s21
    %p426 = scmp.lt.s32.totalorder %s21, 3
    %p427 = pnand %p425, %p426
    %p428 = pneg %p427
    // Predicated region
    $region9: #{transformer_forward.1} parent=5 // pred_check
      _
    $region10: #{transformer_forward.1} parent=5 // pred_check_branch
      %430 = sbr.rel (%p427) target = $region12
    $region11: #{transformer_forward.1} parent=5 // pred_region
      %s431 = ssub.s32 %s21, 1
      // Predicated region
      $region13: #{transformer_forward.1} parent=11 // pred_check
        %p432 = pneg %p42
      $region14: #{transformer_forward.1} parent=11 // pred_check_branch
        %434 = sbr.rel (%p432) target = $region16
      $region15: #{transformer_forward.1} parent=11 // pred_region
        _
      $region16: #{transformer_forward.1} parent=11 // pred_fallthru
        _
      // Predicated region
      $region17: #{transformer_forward.1} parent=11 // pred_check
        %p435 = pneg %p375
      $region18: #{transformer_forward.1} parent=11 // pred_check_branch
        %437 = sbr.rel (%p435) target = $region20
      $region19: #{transformer_forward.1} parent=11 // pred_region
        _
      $region20: #{transformer_forward.1} parent=11 // pred_fallthru
        _
      // Predicated region
      $region21: #{transformer_forward.1} parent=11 // pred_check
        %p438 = pneg %p396
      $region22: #{transformer_forward.1} parent=11 // pred_check_branch
        %440 = sbr.rel (%p438) target = $region24
      $region23: #{transformer_forward.1} parent=11 // pred_region
        _
      $region24: #{transformer_forward.1} parent=11 // pred_fallthru
        _
    $region12: #{transformer_forward.1} parent=5 // pred_fallthru
      _
    %p441 = scmp.lt.s32.totalorder %s21, 2
    // Predicated region
    $region25: #{transformer_forward.1} parent=5 // pred_check
      %p442 = pneg %p441
    $region26: #{transformer_forward.1} parent=5 // pred_check_branch
      %444 = sbr.rel (%p442) target = $region28
    $region27: #{transformer_forward.1} parent=5 // pred_region
      // Predicated region
      $region29: #{transformer_forward.1} parent=27 // pred_check
        %p445 = pneg %p62
      $region30: #{transformer_forward.1} parent=27 // pred_check_branch
        %447 = sbr.rel (%p445) target = $region32
      $region31: #{transformer_forward.1} parent=27 // pred_region
        %p448 = scmp.lt.s32.totalorder %s21, 1
        %s449 = scalar_select %p448, %s21, 1
        %s450 = smul.addr %s449, 12
        %s451 = smul.addr %s450, 4
        %s452 = scalar_lea.vmem %s1, %s451
      $region32: #{transformer_forward.1} parent=27 // pred_fallthru
        _
      // Predicated region
      $region33: #{transformer_forward.1} parent=27 // pred_check
        %p453 = pneg %p88
      $region34: #{transformer_forward.1} parent=27 // pred_check_branch
        %455 = sbr.rel (%p453) target = $region36
      $region35: #{transformer_forward.1} parent=27 // pred_region
        %p456 = scmp.lt.s32.totalorder %s21, 1
        %s457 = scalar_select %p456, %s21, 1
        %s458 = smul.addr %s457, 2
        %s459 = scalar_lea.vmem %s2, %s458
      $region36: #{transformer_forward.1} parent=27 // pred_fallthru
        _
      // Predicated region
      $region37: #{transformer_forward.1} parent=27 // pred_check
        %p460 = pneg %p114
      $region38: #{transformer_forward.1} parent=27 // pred_check_branch
        %462 = sbr.rel (%p460) target = $region40
      $region39: #{transformer_forward.1} parent=27 // pred_region
        %p463 = scmp.lt.s32.totalorder %s21, 1
        %s464 = scalar_select %p463, %s21, 1
        %s465 = smul.addr %s464, 6
        %s466 = smul.addr %s465, 4
        %s467 = scalar_lea.vmem %s3, %s466
      $region40: #{transformer_forward.1} parent=27 // pred_fallthru
        _
      // Predicated region
      $region41: #{transformer_forward.1} parent=27 // pred_check
        %p468 = pneg %p140
      $region42: #{transformer_forward.1} parent=27 // pred_check_branch
        %470 = sbr.rel (%p468) target = $region44
      $region43: #{transformer_forward.1} parent=27 // pred_region
        %p471 = scmp.lt.s32.totalorder %s21, 1
        %s472 = scalar_select %p471, %s21, 1
        %s473 = scalar_lea.vmem %s4, %s472
      $region44: #{transformer_forward.1} parent=27 // pred_fallthru
        _
      // Predicated region
      $region45: #{transformer_forward.1} parent=27 // pred_check
        %p474 = pneg %p166
      $region46: #{transformer_forward.1} parent=27 // pred_check_branch
        %476 = sbr.rel (%p474) target = $region48
      $region47: #{transformer_forward.1} parent=27 // pred_region
        %p477 = scmp.lt.s32.totalorder %s21, 1
        %s478 = scalar_select %p477, %s21, 1
        %s479 = smul.addr %s478, 96
        %s480 = smul.addr %s479, 4
        %s481 = scalar_lea.vmem %s5, %s480
      $region48: #{transformer_forward.1} parent=27 // pred_fallthru
        _
      // Predicated region
      $region49: #{transformer_forward.1} parent=27 // pred_check
        %p482 = pneg %p192
      $region50: #{transformer_forward.1} parent=27 // pred_check_branch
        %484 = sbr.rel (%p482) target = $region52
      $region51: #{transformer_forward.1} parent=27 // pred_region
        %p485 = scmp.lt.s32.totalorder %s21, 1
        %s486 = scalar_select %p485, %s21, 1
        %s487 = smul.addr %s486, 16
        %s488 = scalar_lea.vmem %s6, %s487
      $region52: #{transformer_forward.1} parent=27 // pred_fallthru
        _
      // Predicated region
      $region53: #{transformer_forward.1} parent=27 // pred_check
        %p489 = pneg %p218
      $region54: #{transformer_forward.1} parent=27 // pred_check_branch
        %491 = sbr.rel (%p489) target = $region56
      $region55: #{transformer_forward.1} parent=27 // pred_region
        %p492 = scmp.lt.s32.totalorder %s21, 1
        %s493 = scalar_select %p492, %s21, 1
        %s494 = smul.addr %s493, 256
        %s495 = smul.addr %s494, 4
        %s496 = scalar_lea.vmem %s7, %s495
      $region56: #{transformer_forward.1} parent=27 // pred_fallthru
        _
      // Predicated region
      $region57: #{transformer_forward.1} parent=27 // pred_check
        %p497 = pneg %p244
      $region58: #{transformer_forward.1} parent=27 // pred_check_branch
        %499 = sbr.rel (%p497) target = $region60
      $region59: #{transformer_forward.1} parent=27 // pred_region
        %p500 = scmp.lt.s32.totalorder %s21, 1
        %s501 = scalar_select %p500, %s21, 1
        %s502 = scalar_lea.vmem %s8, %s501
      $region60: #{transformer_forward.1} parent=27 // pred_fallthru
        _
      // Predicated region
      $region61: #{transformer_forward.1} parent=27 // pred_check
        %p503 = pneg %p270
      $region62: #{transformer_forward.1} parent=27 // pred_check_branch
        %505 = sbr.rel (%p503) target = $region64
      $region63: #{transformer_forward.1} parent=27 // pred_region
        %p506 = scmp.lt.s32.totalorder %s21, 1
        %s507 = scalar_select %p506, %s21, 1
        %s508 = scalar_lea.vmem %s9, %s507
      $region64: #{transformer_forward.1} parent=27 // pred_fallthru
        _
      // Predicated region
      $region65: #{transformer_forward.1} parent=27 // pred_check
        %p509 = pneg %p296
      $region66: #{transformer_forward.1} parent=27 // pred_check_branch
        %511 = sbr.rel (%p509) target = $region68
      $region67: #{transformer_forward.1} parent=27 // pred_region
        %p512 = scmp.lt.s32.totalorder %s21, 1
        %s513 = scalar_select %p512, %s21, 1
        %s514 = scalar_lea.vmem %s10, %s513
      $region68: #{transformer_forward.1} parent=27 // pred_fallthru
        _
      // Predicated region
      $region69: #{transformer_forward.1} parent=27 // pred_check
        %p515 = pneg %p322
      $region70: #{transformer_forward.1} parent=27 // pred_check_branch
        %517 = sbr.rel (%p515) target = $region72
      $region71: #{transformer_forward.1} parent=27 // pred_region
        %p518 = scmp.lt.s32.totalorder %s21, 1
        %s519 = scalar_select %p518, %s21, 1
        %s520 = scalar_lea.vmem %s11, %s519
      $region72: #{transformer_forward.1} parent=27 // pred_fallthru
        _
      // Predicated region
      $region73: #{transformer_forward.1} parent=27 // pred_check
        %p521 = pneg %p348
      $region74: #{transformer_forward.1} parent=27 // pred_check_branch
        %523 = sbr.rel (%p521) target = $region76
      $region75: #{transformer_forward.1} parent=27 // pred_region
        %p524 = scmp.lt.s32.totalorder %s21, 1
        %s525 = scalar_select %p524, %s21, 1
        %s526 = scalar_lea.vmem %s12, %s525
      $region76: #{transformer_forward.1} parent=27 // pred_fallthru
        _
    $region28: #{transformer_forward.1} parent=5 // pred_fallthru
      _
    %p527 = scmp.le.s32.totalorder 1, %s21
    %p528 = scmp.lt.s32.totalorder %s21, 3
    %p529 = pnand %p527, %p528
    %p530 = pneg %p529
    // Predicated region
    $region77: #{transformer_forward.1} parent=5 // pred_check
      _
    $region78: #{transformer_forward.1} parent=5 // pred_check_branch
      %532 = sbr.rel (%p529) target = $region80
    $region79: #{transformer_forward.1} parent=5 // pred_region
      %s533 = ssub.s32 %s21, 1
      %p534 = pneg %p42
      %p535 = pneg %p39
      %p536 = scmp.lt.s32.totalorder %s26, 1
      %s537 = scalar_select %p536, %s26, 1
      %s538 = smul.addr %s537, 12
      %s539 = smul.addr %s538, 4
      %s540 = scalar_lea.vmem %s1, %s539
      %p541 = pneg %p68
      %p542 = pneg %p65
      %p543 = scmp.lt.s32.totalorder %s26, 1
      %s544 = scalar_select %p543, %s26, 1
      %s545 = smul.addr %s544, 2
      %s546 = scalar_lea.vmem %s2, %s545
      %p547 = pneg %p94
      %p548 = pneg %p91
      %p549 = scmp.lt.s32.totalorder %s26, 1
      %s550 = scalar_select %p549, %s26, 1
      %s551 = smul.addr %s550, 6
      %s552 = smul.addr %s551, 4
      %s553 = scalar_lea.vmem %s3, %s552
      %p554 = pneg %p120
      %p555 = pneg %p117
      %p556 = scmp.lt.s32.totalorder %s26, 1
      %s557 = scalar_select %p556, %s26, 1
      %s558 = scalar_lea.vmem %s4, %s557
      %p559 = pneg %p146
      %p560 = pneg %p143
      %p561 = scmp.lt.s32.totalorder %s26, 1
      %s562 = scalar_select %p561, %s26, 1
      %s563 = smul.addr %s562, 96
      %s564 = smul.addr %s563, 4
      %s565 = scalar_lea.vmem %s5, %s564
      %p566 = pneg %p172
      %p567 = pneg %p169
      %p568 = scmp.lt.s32.totalorder %s26, 1
      %s569 = scalar_select %p568, %s26, 1
      %s570 = smul.addr %s569, 16
      %s571 = scalar_lea.vmem %s6, %s570
      %p572 = pneg %p198
      %p573 = pneg %p195
      %p574 = scmp.lt.s32.totalorder %s26, 1
      %s575 = scalar_select %p574, %s26, 1
      %s576 = smul.addr %s575, 256
      %s577 = smul.addr %s576, 4
      %s578 = scalar_lea.vmem %s7, %s577
      %p579 = pneg %p224
      %p580 = pneg %p221
      %p581 = scmp.lt.s32.totalorder %s26, 1
      %s582 = scalar_select %p581, %s26, 1
      %s583 = scalar_lea.vmem %s8, %s582
      %p584 = pneg %p250
      %p585 = pneg %p247
      %p586 = scmp.lt.s32.totalorder %s26, 1
      %s587 = scalar_select %p586, %s26, 1
      %s588 = scalar_lea.vmem %s9, %s587
      %p589 = pneg %p276
      %p590 = pneg %p273
      %p591 = scmp.lt.s32.totalorder %s26, 1
      %s592 = scalar_select %p591, %s26, 1
      %s593 = scalar_lea.vmem %s10, %s592
      %p594 = pneg %p302
      %p595 = pneg %p299
      %p596 = scmp.lt.s32.totalorder %s26, 1
      %s597 = scalar_select %p596, %s26, 1
      %s598 = scalar_lea.vmem %s11, %s597
      %p599 = pneg %p328
      %p600 = pneg %p325
      %p601 = scmp.lt.s32.totalorder %s26, 1
      %s602 = scalar_select %p601, %s26, 1
      %s603 = scalar_lea.vmem %s12, %s602
      %p604 = pneg %p354
      %p605 = pneg %p351
      %p606 = pneg %p375
      %p607 = pneg %p372
      %p608 = pneg %p396
      %p609 = pneg %p393
      %p610 = pneg %p417
      %p611 = pneg %p414
      %p612 = scmp.lt.s32.totalorder %s26, 1
      %s613 = scalar_select %p612, %s26, 1
      %s614 = smul.addr %s613, 12
      %s615 = smul.addr %s614, 4
      %s616 = scalar_lea.vmem %s1, %s615
      %p617 = scmp.lt.s32.totalorder %s26, 1
      %s618 = scalar_select %p617, %s26, 1
      %s619 = smul.addr %s618, 2
      %s620 = scalar_lea.vmem %s2, %s619
      %p621 = scmp.lt.s32.totalorder %s26, 1
      %s622 = scalar_select %p621, %s26, 1
      %s623 = smul.addr %s622, 6
      %s624 = smul.addr %s623, 4
      %s625 = scalar_lea.vmem %s3, %s624
      %p626 = scmp.lt.s32.totalorder %s26, 1
      %s627 = scalar_select %p626, %s26, 1
      %s628 = scalar_lea.vmem %s4, %s627
      %p629 = scmp.lt.s32.totalorder %s26, 1
      %s630 = scalar_select %p629, %s26, 1
      %s631 = smul.addr %s630, 96
      %s632 = smul.addr %s631, 4
      %s633 = scalar_lea.vmem %s5, %s632
      %p634 = scmp.lt.s32.totalorder %s26, 1
      %s635 = scalar_select %p634, %s26, 1
      %s636 = smul.addr %s635, 16
      %s637 = scalar_lea.vmem %s6, %s636
      %p638 = scmp.lt.s32.totalorder %s26, 1
      %s639 = scalar_select %p638, %s26, 1
      %s640 = smul.addr %s639, 256
      %s641 = smul.addr %s640, 4
      %s642 = scalar_lea.vmem %s7, %s641
      %p643 = scmp.lt.s32.totalorder %s26, 1
      %s644 = scalar_select %p643, %s26, 1
      %s645 = scalar_lea.vmem %s8, %s644
      %p646 = scmp.lt.s32.totalorder %s26, 1
      %s647 = scalar_select %p646, %s26, 1
      %s648 = scalar_lea.vmem %s9, %s647
      %p649 = scmp.lt.s32.totalorder %s26, 1
      %s650 = scalar_select %p649, %s26, 1
      %s651 = scalar_lea.vmem %s10, %s650
      %p652 = scmp.lt.s32.totalorder %s26, 1
      %s653 = scalar_select %p652, %s26, 1
      %s654 = scalar_lea.vmem %s11, %s653
      %p655 = scmp.lt.s32.totalorder %s26, 1
      %s656 = scalar_select %p655, %s26, 1
      %s657 = scalar_lea.vmem %s12, %s656
      %p659 = scmp.eq.s32.totalorder %s26, 0
      // Predicated region
      $region81: #{transformer_forward.1} parent=79 // pred_check
        %p660 = pneg %p659
      $region82: #{transformer_forward.1} parent=79 // pred_check_branch
        %662 = sbr.rel (%p660) target = $region84
      $region83: #{transformer_forward.1} parent=79 // pred_region
        %v663 = vld [vmem:[%s0] sm:$0xff]
        %v664 = vld [vmem:[%s0 + $0x8] sm:$0xff]
        %v665 = vld [vmem:[%s0 + $0x10] sm:$0xff]
        %v666 = vld [vmem:[%s0 + $0x18] sm:$0xff]
        %vm667 = vcmask 392192
        %668 = vst.msk [vmem:[#allocation2] sm:$0xff] %vm667, %v663
        %669 = vst.msk [vmem:[#allocation2 + $0x8] sm:$0xff] %vm667, %v664
        %670 = vst.msk [vmem:[#allocation2 + $0x10] sm:$0xff] %vm667, %v665
        %671 = vst.msk [vmem:[#allocation2 + $0x18] sm:$0xff] %vm667, %v666
        %v672 = vlaneseq
        %v673 = vshrl.u32 %v672, 7
        %v674 = vadd.s32 %v673, 8
        %v675 = vadd.s32 %v673, 16
        %v676 = vadd.s32 %v673, 24
        %v677 = vlaneseq
        %v678 = vand.u32 %v677, 127
        %vm679 = vcmp.le.s32.totalorder %v678, %v673
        %vm680 = vcmp.le.s32.totalorder %v678, %v674
        %vm681 = vcmp.le.s32.totalorder %v678, %v675
        %vm682 = vcmp.le.s32.totalorder %v678, %v676
        %v683 = vsel %vm679, 0.0, -1e+30
        %v684 = vsel %vm680, 0.0, -1e+30
        %v685 = vsel %vm681, 0.0, -1e+30
        %v686 = vsel %vm682, 0.0, -1e+30
        %vm687 = vcmask 261120
        %688 = vst.msk [vmem:[#allocation3] sm:$0xff] %vm687, %v683
        %689 = vst.msk [vmem:[#allocation3 + $0x8] sm:$0xff] %vm687, %v684
        %690 = vst.msk [vmem:[#allocation3 + $0x10] sm:$0xff] %vm687, %v685
        %691 = vst.msk [vmem:[#allocation3 + $0x18] sm:$0xff] %vm687, %v686
        %692 = vst.msk [vmem:[#allocation3 + $0x20] sm:$0xff] %vm687, %v683
        %693 = vst.msk [vmem:[#allocation3 + $0x28] sm:$0xff] %vm687, %v684
        %694 = vst.msk [vmem:[#allocation3 + $0x30] sm:$0xff] %vm687, %v685
        %695 = vst.msk [vmem:[#allocation3 + $0x38] sm:$0xff] %vm687, %v686
        %696 = vst.msk [vmem:[#allocation3 + $0x40] sm:$0xff] %vm687, %v683
        %697 = vst.msk [vmem:[#allocation3 + $0x48] sm:$0xff] %vm687, %v684
        %698 = vst.msk [vmem:[#allocation3 + $0x50] sm:$0xff] %vm687, %v685
        %699 = vst.msk [vmem:[#allocation3 + $0x58] sm:$0xff] %vm687, %v686
      $region84: #{transformer_forward.1} parent=79 // pred_fallthru
        _
      %v700 = vld [vmem:[#allocation2] sm:$0xff]
      %v701 = vld [vmem:[#allocation2 + $0x8] sm:$0xff]
      %v702 = vld [vmem:[#allocation2 + $0x10] sm:$0xff]
      %v703 = vld [vmem:[#allocation2 + $0x18] sm:$0xff]
      %v704 = vpack.c.bf16 %v701, %v700
      %v705 = vpack.c.bf16 %v703, %v702
      %v706 = vld [vmem:[%s616] sm:$0xff]
      %v707 = vld [vmem:[%s616 + $0x8] sm:$0xff]
      %v708 = vld [vmem:[%s616 + $0x10] sm:$0xff]
      %v709 = vld [vmem:[%s616 + $0x18] sm:$0xff]
      %v710 = vld [vmem:[%s616 + $0x20] sm:$0xff]
      %v711 = vld [vmem:[%s616 + $0x28] sm:$0xff]
      %v712 = vld [vmem:[%s620] sm:$0x3]
      %v714 = vlaneseq
      %v715 = vshrl.u32 %v714, 7
      %v716 = vsub.s32 0, %v715
      %v717 = vrot.slane %v712, %v716
      %v718 = vlaneseq
      %v719 = vshrl.u32 %v718, 7
      %v720 = vsub.s32 1, %v719
      %v721 = vrot.slane %v712, %v720
      %v730 = vunpack.c.l.b16 %v706
      %v731 = vunpack.c.h.b16 %v706
      %v732 = vunpack.c.l.b16 %v707
      %v733 = vunpack.c.h.b16 %v707
      %v734 = vunpack.c.l.b16 %v708
      %v735 = vunpack.c.h.b16 %v708
      %v736 = vunpack.c.l.b16 %v709
      %v737 = vunpack.c.h.b16 %v709
      %v738 = vunpack.c.l.b16 %v710
      %v739 = vunpack.c.h.b16 %v710
      %v740 = vunpack.c.l.b16 %v711
      %v741 = vunpack.c.h.b16 %v711
      %v742 = vpack.c.b16 %v732, %v730
      %v743 = vpack.c.b16 %v733, %v731
      %v744 = vpack.c.b16 %v736, %v734
      %v745 = vpack.c.b16 %v737, %v735
      %v746 = vpack.c.b16 %v740, %v738
      %v747 = vpack.c.b16 %v741, %v739
      %vm754 = vcmask 392192
      %v756 = vsel %vm754, %v704, 0
      %v759 = vsel %vm754, %v705, 0
      %761 = vmatprep.subr.bf16.mxu0 %v743
      %762 = vmatpush1.bf16.msra.mxu0 %v742
      %763 = vmatprep.subr.bf16.mxu0 %v745
      %764 = vmatpush1.bf16.msra.mxu0 %v744
      %765 = vmatprep.subr.bf16.mxu0 %v747
      %766 = vmatpush1.bf16.msra.mxu0 %v746
      %767 = vmatprep.subr.bf16.mxu0 0
      %768 = vmatpush1.bf16.msra.mxu0 0
      %769 = vmatprep.subr.bf16.mxu0 0
      %770 = vmatpush1.bf16.msra.mxu0 0
      %771 = vmatprep.subr.bf16.mxu0 0
      %772 = vmatpush1.bf16.msra.mxu0 0
      %773 = vmatprep.subr.bf16.mxu0 0
      %774 = vmatpush1.bf16.msra.mxu0 0
      %775 = vmatprep.subr.bf16.mxu0 0
      %776 = vmatpush1.bf16.msra.mxu0 0
      %777 = vmatprep.subr.bf16.mxu0 0
      %778 = vmatpush1.bf16.msra.mxu0 0
      %779 = vmatprep.subr.bf16.mxu0 0
      %780 = vmatpush1.bf16.msra.mxu0 0
      %781 = vmatprep.subr.bf16.mxu0 0
      %782 = vmatpush1.bf16.msra.mxu0 0
      %783 = vmatprep.subr.bf16.mxu0 0
      %784 = vmatpush1.bf16.msra.mxu0 0
      %785 = vmatprep.subr.bf16.mxu0 0
      %786 = vmatpush1.bf16.msra.mxu0 0
      %787 = vmatprep.subr.bf16.mxu0 0
      %788 = vmatpush1.bf16.msra.mxu0 0
      %789 = vmatprep.subr.bf16.mxu0 0
      %790 = vmatpush1.bf16.msra.mxu0 0
      %791 = vmatprep.subr.bf16.mxu0 0
      %792 = vmatpush1.bf16.msra.mxu0 0
      %793 = vmatprep.mubr.bf16.mxu0 0
      %794 = vmatmul.mubr.bf16.gmra.mrb[0].mxu0 %v756
      %v795 = vpop.f32.mrb[0].mxu0
      %v796 = vadd.f32 %v717, %v795
      %v797 = vpop.f32.mrb[0].mxu0
      %v798 = vadd.f32 %v721, %v797
      %v799 = vpop.f32.mrb[0].mxu0
      %v800 = vadd.f32 %v717, %v799
      %v801 = vpop.f32.mrb[0].mxu0
      %v802 = vadd.f32 %v721, %v801
      %803 = vmatprep.mubr.bf16.mxu0 0
      %804 = vmatmul.mubr.bf16.gmra.mrb[0].mxu0 %v759
      %v805 = vpop.f32.mrb[0].mxu0
      %v806 = vadd.f32 %v717, %v805
      %v807 = vpop.f32.mrb[0].mxu0
      %v808 = vadd.f32 %v721, %v807
      %v809 = vpop.f32.mrb[0].mxu0
      %v810 = vadd.f32 %v717, %v809
      %v811 = vpop.f32.mrb[0].mxu0
      %v812 = vadd.f32 %v721, %v811
      %813 = vdwg.mxu0
      %v814 = vpack.c.bf16 %v800, %v796
      %v815 = vpack.c.bf16 %v810, %v806
      %818 = vrot.lane.b32.xlu0 %v814, 80
      %v819 = vpop.permute.xlu0 %818
      %820 = vrot.lane.b32.xlu0 %v815, 80
      %v821 = vpop.permute.xlu0 %820
      %vm822 = vcmask 130048
      %v824 = vsel %vm822, %v814, 0
      %v827 = vsel %vm822, %v815, 0
      %v830 = vsel %vm822, %v819, 0
      %v833 = vsel %vm822, %v821, 0
      %835 = vmatprep.subr.bf16.mxu0 0
      %836 = vmatpush1.bf16.xpose.msra.mxu0 %v830
      %837 = vmatprep.subr.bf16.mxu0 0
      %838 = vmatpush1.bf16.xpose.msra.mxu0 %v833
      %839 = vmatprep.subr.bf16.mxu0 0
      %840 = vmatpush1.bf16.xpose.msra.mxu0 0
      %841 = vmatprep.subr.bf16.mxu0 0
      %842 = vmatpush1.bf16.xpose.msra.mxu0 0
      %843 = vmatprep.subr.bf16.mxu0 0
      %844 = vmatpush1.bf16.xpose.msra.mxu0 0
      %845 = vmatprep.subr.bf16.mxu0 0
      %846 = vmatpush1.bf16.xpose.msra.mxu0 0
      %847 = vmatprep.subr.bf16.mxu0 0
      %848 = vmatpush1.bf16.xpose.msra.mxu0 0
      %849 = vmatprep.subr.bf16.mxu0 0
      %850 = vmatpush1.bf16.xpose.msra.mxu0 0
      %851 = vmatprep.subr.bf16.mxu0 0
      %852 = vmatpush1.bf16.xpose.msra.mxu0 0
      %853 = vmatprep.subr.bf16.mxu0 0
      %854 = vmatpush1.bf16.xpose.msra.mxu0 0
      %855 = vmatprep.subr.bf16.mxu0 0
      %856 = vmatpush1.bf16.xpose.msra.mxu0 0
      %857 = vmatprep.subr.bf16.mxu0 0
      %858 = vmatpush1.bf16.xpose.msra.mxu0 0
      %859 = vmatprep.subr.bf16.mxu0 0
      %860 = vmatpush1.bf16.xpose.msra.mxu0 0
      %861 = vmatprep.subr.bf16.mxu0 0
      %862 = vmatpush1.bf16.xpose.msra.mxu0 0
      %863 = vmatprep.subr.bf16.mxu0 0
      %864 = vmatpush1.bf16.xpose.msra.mxu0 0
      %865 = vmatprep.subr.bf16.mxu0 0
      %866 = vmatpush1.bf16.xpose.msra.mxu0 0
      %867 = vmatprep.mubr.bf16.mxu0 0
      %868 = vmatmul.mubr.bf16.gmra.mrb[0].mxu0 %v824
      %v869 = vpop.f32.mrb[0].mxu0
      %v870 = vadd.f32 0.0, %v869
      %v871 = vpop.f32.mrb[0].mxu0
      %v872 = vpop.f32.mrb[0].mxu0
      %v873 = vadd.f32 0.0, %v872
      %v874 = vpop.f32.mrb[0].mxu0
      %875 = vmatprep.mubr.bf16.mxu0 0
      %876 = vmatmul.mubr.bf16.gmra.mrb[0].mxu0 %v827
      %v877 = vpop.f32.mrb[0].mxu0
      %v878 = vadd.f32 0.0, %v877
      %v879 = vpop.f32.mrb[0].mxu0
      %v880 = vpop.f32.mrb[0].mxu0
      %v881 = vadd.f32 0.0, %v880
      %v882 = vpop.f32.mrb[0].mxu0
      %883 = vdwg.mxu0
      %884 = vrot.lane.b32.xlu0 %v814, 112
      %v885 = vpop.permute.xlu0 %884
      %886 = vrot.lane.b32.xlu0 %v815, 112
      %v887 = vpop.permute.xlu0 %886
      %888 = vrot.lane.b32.xlu0 %v814, 64
      %v889 = vpop.permute.xlu0 %888
      %890 = vrot.lane.b32.xlu0 %v815, 64
      %v891 = vpop.permute.xlu0 %890
      %v893 = vsel %vm822, %v885, 0
      %v896 = vsel %vm822, %v887, 0
      %v899 = vsel %vm822, %v889, 0
      %v902 = vsel %vm822, %v891, 0
      %904 = vmatprep.subr.bf16.mxu0 0
      %905 = vmatpush1.bf16.xpose.msra.mxu0 %v899
      %906 = vmatprep.subr.bf16.mxu0 0
      %907 = vmatpush1.bf16.xpose.msra.mxu0 %v902
      %908 = vmatprep.subr.bf16.mxu0 0
      %909 = vmatpush1.bf16.xpose.msra.mxu0 0
      %910 = vmatprep.subr.bf16.mxu0 0
      %911 = vmatpush1.bf16.xpose.msra.mxu0 0
      %912 = vmatprep.subr.bf16.mxu0 0
      %913 = vmatpush1.bf16.xpose.msra.mxu0 0
      %914 = vmatprep.subr.bf16.mxu0 0
      %915 = vmatpush1.bf16.xpose.msra.mxu0 0
      %916 = vmatprep.subr.bf16.mxu0 0
      %917 = vmatpush1.bf16.xpose.msra.mxu0 0
      %918 = vmatprep.subr.bf16.mxu0 0
      %919 = vmatpush1.bf16.xpose.msra.mxu0 0
      %920 = vmatprep.subr.bf16.mxu0 0
      %921 = vmatpush1.bf16.xpose.msra.mxu0 0
      %922 = vmatprep.subr.bf16.mxu0 0
      %923 = vmatpush1.bf16.xpose.msra.mxu0 0
      %924 = vmatprep.subr.bf16.mxu0 0
      %925 = vmatpush1.bf16.xpose.msra.mxu0 0
      %926 = vmatprep.subr.bf16.mxu0 0
      %927 = vmatpush1.bf16.xpose.msra.mxu0 0
      %928 = vmatprep.subr.bf16.mxu0 0
      %929 = vmatpush1.bf16.xpose.msra.mxu0 0
      %930 = vmatprep.subr.bf16.mxu0 0
      %931 = vmatpush1.bf16.xpose.msra.mxu0 0
      %932 = vmatprep.subr.bf16.mxu0 0
      %933 = vmatpush1.bf16.xpose.msra.mxu0 0
      %934 = vmatprep.subr.bf16.mxu0 0
      %935 = vmatpush1.bf16.xpose.msra.mxu0 0
      %936 = vmatprep.mubr.bf16.mxu0 0
      %937 = vmatmul.mubr.bf16.gmra.mrb[0].mxu0 %v893
      %v938 = vpop.f32.mrb[0].mxu0
      %v939 = vadd.f32 0.0, %v938
      %v940 = vpop.f32.mrb[0].mxu0
      %v941 = vpop.f32.mrb[0].mxu0
      %v942 = vadd.f32 0.0, %v941
      %v943 = vpop.f32.mrb[0].mxu0
      %944 = vmatprep.mubr.bf16.mxu0 0
      %945 = vmatmul.mubr.bf16.gmra.mrb[0].mxu0 %v896
      %v946 = vpop.f32.mrb[0].mxu0
      %v947 = vadd.f32 0.0, %v946
      %v948 = vpop.f32.mrb[0].mxu0
      %v949 = vpop.f32.mrb[0].mxu0
      %v950 = vadd.f32 0.0, %v949
      %v951 = vpop.f32.mrb[0].mxu0
      %952 = vdwg.mxu0
      %953 = vrot.lane.b32.xlu0 %v814, 96
      %v954 = vpop.permute.xlu0 %953
      %955 = vrot.lane.b32.xlu0 %v815, 96
      %v956 = vpop.permute.xlu0 %955
      %957 = vrot.lane.b32.xlu0 %v814, 48
      %v958 = vpop.permute.xlu0 %957
      %959 = vrot.lane.b32.xlu0 %v815, 48
      %v960 = vpop.permute.xlu0 %959
      %v962 = vsel %vm822, %v954, 0
      %v965 = vsel %vm822, %v956, 0
      %v968 = vsel %vm822, %v958, 0
      %v971 = vsel %vm822, %v960, 0
      %973 = vmatprep.subr.bf16.mxu0 0
      %974 = vmatpush1.bf16.xpose.msra.mxu0 %v968
      %975 = vmatprep.subr.bf16.mxu0 0
      %976 = vmatpush1.bf16.xpose.msra.mxu0 %v971
      %977 = vmatprep.subr.bf16.mxu0 0
      %978 = vmatpush1.bf16.xpose.msra.mxu0 0
      %979 = vmatprep.subr.bf16.mxu0 0
      %980 = vmatpush1.bf16.xpose.msra.mxu0 0
      %981 = vmatprep.subr.bf16.mxu0 0
      %982 = vmatpush1.bf16.xpose.msra.mxu0 0
      %983 = vmatprep.subr.bf16.mxu0 0
      %984 = vmatpush1.bf16.xpose.msra.mxu0 0
      %985 = vmatprep.subr.bf16.mxu0 0
      %986 = vmatpush1.bf16.xpose.msra.mxu0 0
      %987 = vmatprep.subr.bf16.mxu0 0
      %988 = vmatpush1.bf16.xpose.msra.mxu0 0
      %989 = vmatprep.subr.bf16.mxu0 0
      %990 = vmatpush1.bf16.xpose.msra.mxu0 0
      %991 = vmatprep.subr.bf16.mxu0 0
      %992 = vmatpush1.bf16.xpose.msra.mxu0 0
      %993 = vmatprep.subr.bf16.mxu0 0
      %994 = vmatpush1.bf16.xpose.msra.mxu0 0
      %995 = vmatprep.subr.bf16.mxu0 0
      %996 = vmatpush1.bf16.xpose.msra.mxu0 0
      %997 = vmatprep.subr.bf16.mxu0 0
      %998 = vmatpush1.bf16.xpose.msra.mxu0 0
      %999 = vmatprep.subr.bf16.mxu0 0
      %1000 = vmatpush1.bf16.xpose.msra.mxu0 0
      %1001 = vmatprep.subr.bf16.mxu0 0
      %1002 = vmatpush1.bf16.xpose.msra.mxu0 0
      %1003 = vmatprep.subr.bf16.mxu0 0
      %1004 = vmatpush1.bf16.xpose.msra.mxu0 0
      %1005 = vmatprep.mubr.bf16.mxu0 0
      %1006 = vmatmul.mubr.bf16.gmra.mrb[0].mxu0 %v962
      %v1007 = vpop.f32.mrb[0].mxu0
      %v1008 = vadd.f32 0.0, %v1007
      %v1009 = vpop.f32.mrb[0].mxu0
      %v1010 = vpop.f32.mrb[0].mxu0
      %v1011 = vadd.f32 0.0, %v1010
      %v1012 = vpop.f32.mrb[0].mxu0
      %1013 = vmatprep.mubr.bf16.mxu0 0
      %1014 = vmatmul.mubr.bf16.gmra.mrb[0].mxu0 %v965
      %v1015 = vpop.f32.mrb[0].mxu0
      %v1016 = vadd.f32 0.0, %v1015
      %v1017 = vpop.f32.mrb[0].mxu0
      %v1018 = vpop.f32.mrb[0].mxu0
      %v1019 = vadd.f32 0.0, %v1018
      %v1020 = vpop.f32.mrb[0].mxu0
      %1021 = vdwg.mxu0
      %v1022 = vld [vmem:[#allocation3] sm:$0xff]
      %v1023 = vld [vmem:[#allocation3 + $0x8] sm:$0xff]
      %v1024 = vld [vmem:[#allocation3 + $0x10] sm:$0xff]
      %v1025 = vld [vmem:[#allocation3 + $0x18] sm:$0xff]
      %v1026 = vld [vmem:[#allocation3 + $0x20] sm:$0xff]
      %v1027 = vld [vmem:[#allocation3 + $0x28] sm:$0xff]
      %v1028 = vld [vmem:[#allocation3 + $0x30] sm:$0xff]
      %v1029 = vld [vmem:[#allocation3 + $0x38] sm:$0xff]
      %v1030 = vld [vmem:[#allocation3 + $0x40] sm:$0xff]
      %v1031 = vld [vmem:[#allocation3 + $0x48] sm:$0xff]
      %v1032 = vld [vmem:[#allocation3 + $0x50] sm:$0xff]
      %v1033 = vld [vmem:[#allocation3 + $0x58] sm:$0xff]
      %v1034 = vadd.f32 %v870, %v1022
      %v1035 = vadd.f32 %v873, %v1023
      %v1036 = vadd.f32 %v878, %v1024
      %v1037 = vadd.f32 %v881, %v1025
      %v1038 = vadd.f32 %v939, %v1026
      %v1039 = vadd.f32 %v942, %v1027
      %v1040 = vadd.f32 %v947, %v1028
      %v1041 = vadd.f32 %v950, %v1029
      %v1042 = vadd.f32 %v1008, %v1030
      %v1043 = vadd.f32 %v1011, %v1031
      %v1044 = vadd.f32 %v1016, %v1032
      %v1045 = vadd.f32 %v1019, %v1033
      %vm1046 = vcmask 261120
      %v1047 = vsel %vm1046, %v1034, -inf
      %1048 = vmax.xlane.f32.xlu0 %v1047
      %v1049 = vpop.xlane.xlu0 %1048
      %v1050 = vsel %vm1046, %v1035, -inf
      %1051 = vmax.xlane.f32.xlu0 %v1050
      %v1052 = vpop.xlane.xlu0 %1051
      %v1053 = vsel %vm1046, %v1036, -inf
      %1054 = vmax.xlane.f32.xlu0 %v1053
      %v1055 = vpop.xlane.xlu0 %1054
      %v1056 = vsel %vm1046, %v1037, -inf
      %1057 = vmax.xlane.f32.xlu0 %v1056
      %v1058 = vpop.xlane.xlu0 %1057
      %v1059 = vsel %vm1046, %v1038, -inf
      %1060 = vmax.xlane.f32.xlu0 %v1059
      %v1061 = vpop.xlane.xlu0 %1060
      %v1062 = vsel %vm1046, %v1039, -inf
      %1063 = vmax.xlane.f32.xlu0 %v1062
      %v1064 = vpop.xlane.xlu0 %1063
      %v1065 = vsel %vm1046, %v1040, -inf
      %1066 = vmax.xlane.f32.xlu0 %v1065
      %v1067 = vpop.xlane.xlu0 %1066
      %v1068 = vsel %vm1046, %v1041, -inf
      %1069 = vmax.xlane.f32.xlu0 %v1068
      %v1070 = vpop.xlane.xlu0 %1069
      %v1071 = vsel %vm1046, %v1042, -inf
      %1072 = vmax.xlane.f32.xlu0 %v1071
      %v1073 = vpop.xlane.xlu0 %1072
      %v1074 = vsel %vm1046, %v1043, -inf
      %1075 = vmax.xlane.f32.xlu0 %v1074
      %v1076 = vpop.xlane.xlu0 %1075
      %v1077 = vsel %vm1046, %v1044, -inf
      %1078 = vmax.xlane.f32.xlu0 %v1077
      %v1079 = vpop.xlane.xlu0 %1078
      %v1080 = vsel %vm1046, %v1045, -inf
      %1081 = vmax.xlane.f32.xlu0 %v1080
      %v1082 = vpop.xlane.xlu0 %1081
      %v1083 = vsub.f32 %v1034, %v1049
      %v1084 = vsub.f32 %v1035, %v1052
      %v1085 = vsub.f32 %v1036, %v1055
      %v1086 = vsub.f32 %v1037, %v1058
      %v1087 = vsub.f32 %v1038, %v1061
      %v1088 = vsub.f32 %v1039, %v1064
      %v1089 = vsub.f32 %v1040, %v1067
      %v1090 = vsub.f32 %v1041, %v1070
      %v1091 = vsub.f32 %v1042, %v1073
      %v1092 = vsub.f32 %v1043, %v1076
      %v1093 = vsub.f32 %v1044, %v1079
      %v1094 = vsub.f32 %v1045, %v1082
      %v1095 = vmul.f32 %v1083, 1.442695
      %v1096 = vpow.pop %v1095
      %v1097 = vmul.f32 %v1084, 1.442695
      %v1098 = vpow.pop %v1097
      %v1099 = vmul.f32 %v1085, 1.442695
      %v1100 = vpow.pop %v1099
      %v1101 = vmul.f32 %v1086, 1.442695
      %v1102 = vpow.pop %v1101
      %v1103 = vmul.f32 %v1087, 1.442695
      %v1104 = vpow.pop %v1103
      %v1105 = vmul.f32 %v1088, 1.442695
      %v1106 = vpow.pop %v1105
      %v1107 = vmul.f32 %v1089, 1.442695
      %v1108 = vpow.pop %v1107
      %v1109 = vmul.f32 %v1090, 1.442695
      %v1110 = vpow.pop %v1109
      %v1111 = vmul.f32 %v1091, 1.442695
      %v1112 = vpow.pop %v1111
      %v1113 = vmul.f32 %v1092, 1.442695
      %v1114 = vpow.pop %v1113
      %v1115 = vmul.f32 %v1093, 1.442695
      %v1116 = vpow.pop %v1115
      %v1117 = vmul.f32 %v1094, 1.442695
      %v1118 = vpow.pop %v1117
      %v1119 = vsel %vm1046, %v1096, 0.0
      %1120 = vadd.xlane.f32.xlu0 %v1119
      %v1121 = vpop.xlane.xlu0 %1120
      %v1122 = vsel %vm1046, %v1098, 0.0
      %1123 = vadd.xlane.f32.xlu0 %v1122
      %v1124 = vpop.xlane.xlu0 %1123
      %v1125 = vsel %vm1046, %v1100, 0.0
      %1126 = vadd.xlane.f32.xlu0 %v1125
      %v1127 = vpop.xlane.xlu0 %1126
      %v1128 = vsel %vm1046, %v1102, 0.0
      %1129 = vadd.xlane.f32.xlu0 %v1128
      %v1130 = vpop.xlane.xlu0 %1129
      %v1131 = vsel %vm1046, %v1104, 0.0
      %1132 = vadd.xlane.f32.xlu0 %v1131
      %v1133 = vpop.xlane.xlu0 %1132
      %v1134 = vsel %vm1046, %v1106, 0.0
      %1135 = vadd.xlane.f32.xlu0 %v1134
      %v1136 = vpop.xlane.xlu0 %1135
      %v1137 = vsel %vm1046, %v1108, 0.0
      %1138 = vadd.xlane.f32.xlu0 %v1137
      %v1139 = vpop.xlane.xlu0 %1138
      %v1140 = vsel %vm1046, %v1110, 0.0
      %1141 = vadd.xlane.f32.xlu0 %v1140
      %v1142 = vpop.xlane.xlu0 %1141
      %v1143 = vsel %vm1046, %v1112, 0.0
      %1144 = vadd.xlane.f32.xlu0 %v1143
      %v1145 = vpop.xlane.xlu0 %1144
      %v1146 = vsel %vm1046, %v1114, 0.0
      %1147 = vadd.xlane.f32.xlu0 %v1146
      %v1148 = vpop.xlane.xlu0 %1147
      %v1149 = vsel %vm1046, %v1116, 0.0
      %1150 = vadd.xlane.f32.xlu0 %v1149
      %v1151 = vpop.xlane.xlu0 %1150
      %v1152 = vsel %vm1046, %v1118, 0.0
      %1153 = vadd.xlane.f32.xlu0 %v1152
      %v1154 = vpop.xlane.xlu0 %1153
      %v1155 = vrcp.pop %v1121
      %v1156 = vrcp.pop %v1124
      %v1157 = vrcp.pop %v1127
      %v1158 = vrcp.pop %v1130
      %v1159 = vrcp.pop %v1133
      %v1160 = vrcp.pop %v1136
      %v1161 = vrcp.pop %v1139
      %v1162 = vrcp.pop %v1142
      %v1163 = vrcp.pop %v1145
      %v1164 = vrcp.pop %v1148
      %v1165 = vrcp.pop %v1151
      %v1166 = vrcp.pop %v1154
      %v1167 = vmul.f32 %v1096, %v1155
      %v1168 = vmul.f32 %v1098, %v1156
      %v1169 = vmul.f32 %v1100, %v1157
      %v1170 = vmul.f32 %v1102, %v1158
      %v1171 = vmul.f32 %v1104, %v1159
      %v1172 = vmul.f32 %v1106, %v1160
      %v1173 = vmul.f32 %v1108, %v1161
      %v1174 = vmul.f32 %v1110, %v1162
      %v1175 = vmul.f32 %v1112, %v1163
      %v1176 = vmul.f32 %v1114, %v1164
      %v1177 = vmul.f32 %v1116, %v1165
      %v1178 = vmul.f32 %v1118, %v1166
      %v1179 = vpack.c.bf16 %v1168, %v1167
      %v1180 = vpack.c.bf16 %v1170, %v1169
      %v1181 = vpack.c.bf16 %v1172, %v1171
      %v1182 = vpack.c.bf16 %v1174, %v1173
      %v1183 = vpack.c.bf16 %v1176, %v1175
      %v1184 = vpack.c.bf16 %v1178, %v1177
      %v1185 = vld [vmem:[%s628] sm:$0x1]
      %1186 = vrot.lane.b32.xlu0 %v814, 32
      %v1187 = vpop.permute.xlu0 %1186
      %1188 = vrot.lane.b32.xlu0 %v815, 32
      %v1189 = vpop.permute.xlu0 %1188
      %v1193 = vsel %vm1046, %v1179, 0
      %v1196 = vsel %vm1046, %v1180, 0
      %1198 = vmatprep.subr.bf16.mxu0 0
      %1199 = vmatpush1.bf16.msra.mxu0 %v1187
      %1200 = vmatprep.subr.bf16.mxu0 0
      %1201 = vmatpush1.bf16.msra.mxu0 %v1189
      %1202 = vmatprep.subr.bf16.mxu0 0
      %1203 = vmatpush1.bf16.msra.mxu0 0
      %1204 = vmatprep.subr.bf16.mxu0 0
      %1205 = vmatpush1.bf16.msra.mxu0 0
      %1206 = vmatprep.subr.bf16.mxu0 0
      %1207 = vmatpush1.bf16.msra.mxu0 0
      %1208 = vmatprep.subr.bf16.mxu0 0
      %1209 = vmatpush1.bf16.msra.mxu0 0
      %1210 = vmatprep.subr.bf16.mxu0 0
      %1211 = vmatpush1.bf16.msra.mxu0 0
      %1212 = vmatprep.subr.bf16.mxu0 0
      %1213 = vmatpush1.bf16.msra.mxu0 0
      %1214 = vmatprep.subr.bf16.mxu0 0
      %1215 = vmatpush1.bf16.msra.mxu0 0
      %1216 = vmatprep.subr.bf16.mxu0 0
      %1217 = vmatpush1.bf16.msra.mxu0 0
      %1218 = vmatprep.subr.bf16.mxu0 0
      %1219 = vmatpush1.bf16.msra.mxu0 0
      %1220 = vmatprep.subr.bf16.mxu0 0
      %1221 = vmatpush1.bf16.msra.mxu0 0
      %1222 = vmatprep.subr.bf16.mxu0 0
      %1223 = vmatpush1.bf16.msra.mxu0 0
      %1224 = vmatprep.subr.bf16.mxu0 0
      %1225 = vmatpush1.bf16.msra.mxu0 0
      %1226 = vmatprep.subr.bf16.mxu0 0
      %1227 = vmatpush1.bf16.msra.mxu0 0
      %1228 = vmatprep.subr.bf16.mxu0 0
      %1229 = vmatpush1.bf16.msra.mxu0 0
      %1230 = vmatprep.mubr.bf16.mxu0 0
      %1231 = vmatmul.mubr.bf16.gmra.mrb[0].mxu0 %v1193
      %v1232 = vpop.f32.mrb[0].mxu0
      %v1233 = vadd.f32 0.0, %v1232
      %v1234 = vpop.f32.mrb[0].mxu0
      %v1235 = vpop.f32.mrb[0].mxu0
      %v1236 = vadd.f32 0.0, %v1235
      %v1237 = vpop.f32.mrb[0].mxu0
      %1238 = vmatprep.mubr.bf16.mxu0 0
      %1239 = vmatmul.mubr.bf16.gmra.mrb[0].mxu0 %v1196
      %v1240 = vpop.f32.mrb[0].mxu0
      %v1241 = vadd.f32 0.0, %v1240
      %v1242 = vpop.f32.mrb[0].mxu0
      %v1243 = vpop.f32.mrb[0].mxu0
      %v1244 = vadd.f32 0.0, %v1243
      %v1245 = vpop.f32.mrb[0].mxu0
      %1246 = vdwg.mxu0
      %v1247 = vpack.c.bf16 %v1236, %v1233
      %v1248 = vpack.c.bf16 %v1244, %v1241
      %v1249 = vld [vmem:[%s625] sm:$0xf]
      %v1250 = vld [vmem:[%s625 + $0x4] sm:$0xf]
      %v1251 = vld [vmem:[%s625 + $0x8] sm:$0xf]
      %v1252 = vld [vmem:[%s625 + $0xc] sm:$0xf]
      %v1253 = vld [vmem:[%s625 + $0x10] sm:$0xf]
      %v1254 = vld [vmem:[%s625 + $0x14] sm:$0xf]
      %v1257 = vunpack.c.l.b16 %v1249
      %v1258 = vunpack.c.l.b16 %v1250
      %v1259 = vpack.c.b16 %v1258, %v1257
      %v1262 = vsel %vm822, %v1247, 0
      %v1265 = vsel %vm822, %v1248, 0
      %1267 = vmatprep.subr.bf16.mxu0 0
      %1268 = vmatpush1.bf16.msra.mxu0 %v1259
      %1269 = vmatprep.subr.bf16.mxu0 0
      %1270 = vmatpush1.bf16.msra.mxu0 0
      %1271 = vmatprep.subr.bf16.mxu0 0
      %1272 = vmatpush1.bf16.msra.mxu0 0
      %1273 = vmatprep.subr.bf16.mxu0 0
      %1274 = vmatpush1.bf16.msra.mxu0 0
      %1275 = vmatprep.subr.bf16.mxu0 0
      %1276 = vmatpush1.bf16.msra.mxu0 0
      %1277 = vmatprep.subr.bf16.mxu0 0
      %1278 = vmatpush1.bf16.msra.mxu0 0
      %1279 = vmatprep.subr.bf16.mxu0 0
      %1280 = vmatpush1.bf16.msra.mxu0 0
      %1281 = vmatprep.subr.bf16.mxu0 0
      %1282 = vmatpush1.bf16.msra.mxu0 0
      %1283 = vmatprep.subr.bf16.mxu0 0
      %1284 = vmatpush1.bf16.msra.mxu0 0
      %1285 = vmatprep.subr.bf16.mxu0 0
      %1286 = vmatpush1.bf16.msra.mxu0 0
      %1287 = vmatprep.subr.bf16.mxu0 0
      %1288 = vmatpush1.bf16.msra.mxu0 0
      %1289 = vmatprep.subr.bf16.mxu0 0
      %1290 = vmatpush1.bf16.msra.mxu0 0
      %1291 = vmatprep.subr.bf16.mxu0 0
      %1292 = vmatpush1.bf16.msra.mxu0 0
      %1293 = vmatprep.subr.bf16.mxu0 0
      %1294 = vmatpush1.bf16.msra.mxu0 0
      %1295 = vmatprep.subr.bf16.mxu0 0
      %1296 = vmatpush1.bf16.msra.mxu0 0
      %1297 = vmatprep.subr.bf16.mxu0 0
      %1298 = vmatpush1.bf16.msra.mxu0 0
      %1299 = vmatprep.mubr.bf16.mxu0 0
      %1300 = vmatmul.mubr.bf16.gmra.mrb[0].mxu0 %v1262
      %v1301 = vpop.f32.mrb[0].mxu0
      %v1302 = vadd.f32 0.0, %v1301
      %v1303 = vpop.f32.mrb[0].mxu0
      %v1304 = vpop.f32.mrb[0].mxu0
      %v1305 = vadd.f32 0.0, %v1304
      %v1306 = vpop.f32.mrb[0].mxu0
      %1307 = vmatprep.mubr.bf16.mxu0 0
      %1308 = vmatmul.mubr.bf16.gmra.mrb[0].mxu0 %v1265
      %v1309 = vpop.f32.mrb[0].mxu0
      %v1310 = vadd.f32 0.0, %v1309
      %v1311 = vpop.f32.mrb[0].mxu0
      %v1312 = vpop.f32.mrb[0].mxu0
      %v1313 = vadd.f32 0.0, %v1312
      %v1314 = vpop.f32.mrb[0].mxu0
      %1315 = vdwg.mxu0
      %v1317 = vlaneseq
      %v1318 = vshrl.u32 %v1317, 7
      %v1319 = vsub.s32 0, %v1318
      %v1320 = vrot.slane %v1185, %v1319
      %v1322 = vadd.f32 %v1320, %v1302
      %v1323 = vadd.f32 %v1320, %v1305
      %v1324 = vadd.f32 %v1320, %v1310
      %v1325 = vadd.f32 %v1320, %v1313
      %1326 = vrot.lane.b32.xlu0 %v814, 16
      %v1327 = vpop.permute.xlu0 %1326
      %1328 = vrot.lane.b32.xlu0 %v815, 16
      %v1329 = vpop.permute.xlu0 %1328
      %v1333 = vsel %vm1046, %v1181, 0
      %v1336 = vsel %vm1046, %v1182, 0
      %1338 = vmatprep.subr.bf16.mxu0 0
      %1339 = vmatpush1.bf16.msra.mxu0 %v1327
      %1340 = vmatprep.subr.bf16.mxu0 0
      %1341 = vmatpush1.bf16.msra.mxu0 %v1329
      %1342 = vmatprep.subr.bf16.mxu0 0
      %1343 = vmatpush1.bf16.msra.mxu0 0
      %1344 = vmatprep.subr.bf16.mxu0 0
      %1345 = vmatpush1.bf16.msra.mxu0 0
      %1346 = vmatprep.subr.bf16.mxu0 0
      %1347 = vmatpush1.bf16.msra.mxu0 0
      %1348 = vmatprep.subr.bf16.mxu0 0
      %1349 = vmatpush1.bf16.msra.mxu0 0
      %1350 = vmatprep.subr.bf16.mxu0 0
      %1351 = vmatpush1.bf16.msra.mxu0 0
      %1352 = vmatprep.subr.bf16.mxu0 0
      %1353 = vmatpush1.bf16.msra.mxu0 0
      %1354 = vmatprep.subr.bf16.mxu0 0
      %1355 = vmatpush1.bf16.msra.mxu0 0
      %1356 = vmatprep.subr.bf16.mxu0 0
      %1357 = vmatpush1.bf16.msra.mxu0 0
      %1358 = vmatprep.subr.bf16.mxu0 0
      %1359 = vmatpush1.bf16.msra.mxu0 0
      %1360 = vmatprep.subr.bf16.mxu0 0
      %1361 = vmatpush1.bf16.msra.mxu0 0
      %1362 = vmatprep.subr.bf16.mxu0 0
      %1363 = vmatpush1.bf16.msra.mxu0 0
      %1364 = vmatprep.subr.bf16.mxu0 0
      %1365 = vmatpush1.bf16.msra.mxu0 0
      %1366 = vmatprep.subr.bf16.mxu0 0
      %1367 = vmatpush1.bf16.msra.mxu0 0
      %1368 = vmatprep.subr.bf16.mxu0 0
      %1369 = vmatpush1.bf16.msra.mxu0 0
      %1370 = vmatprep.mubr.bf16.mxu0 0
      %1371 = vmatmul.mubr.bf16.gmra.mrb[0].mxu0 %v1333
      %v1372 = vpop.f32.mrb[0].mxu0
      %v1373 = vadd.f32 0.0, %v1372
      %v1374 = vpop.f32.mrb[0].mxu0
      %v1375 = vpop.f32.mrb[0].mxu0
      %v1376 = vadd.f32 0.0, %v1375
      %v1377 = vpop.f32.mrb[0].mxu0
      %1378 = vmatprep.mubr.bf16.mxu0 0
      %1379 = vmatmul.mubr.bf16.gmra.mrb[0].mxu0 %v1336
      %v1380 = vpop.f32.mrb[0].mxu0
      %v1381 = vadd.f32 0.0, %v1380
      %v1382 = vpop.f32.mrb[0].mxu0
      %v1383 = vpop.f32.mrb[0].mxu0
      %v1384 = vadd.f32 0.0, %v1383
      %v1385 = vpop.f32.mrb[0].mxu0
      %1386 = vdwg.mxu0
      %v1387 = vpack.c.bf16 %v1376, %v1373
      %v1388 = vpack.c.bf16 %v1384, %v1381
      %v1391 = vunpack.c.l.b16 %v1251
      %v1392 = vunpack.c.l.b16 %v1252
      %v1393 = vpack.c.b16 %v1392, %v1391
      %v1396 = vsel %vm822, %v1387, 0
      %v1399 = vsel %vm822, %v1388, 0
      %1401 = vmatprep.subr.bf16.mxu0 0
      %1402 = vmatpush1.bf16.msra.mxu0 %v1393
      %1403 = vmatprep.subr.bf16.mxu0 0
      %1404 = vmatpush1.bf16.msra.mxu0 0
      %1405 = vmatprep.subr.bf16.mxu0 0
      %1406 = vmatpush1.bf16.msra.mxu0 0
      %1407 = vmatprep.subr.bf16.mxu0 0
      %1408 = vmatpush1.bf16.msra.mxu0 0
      %1409 = vmatprep.subr.bf16.mxu0 0
      %1410 = vmatpush1.bf16.msra.mxu0 0
      %1411 = vmatprep.subr.bf16.mxu0 0
      %1412 = vmatpush1.bf16.msra.mxu0 0
      %1413 = vmatprep.subr.bf16.mxu0 0
      %1414 = vmatpush1.bf16.msra.mxu0 0
      %1415 = vmatprep.subr.bf16.mxu0 0
      %1416 = vmatpush1.bf16.msra.mxu0 0
      %1417 = vmatprep.subr.bf16.mxu0 0
      %1418 = vmatpush1.bf16.msra.mxu0 0
      %1419 = vmatprep.subr.bf16.mxu0 0
      %1420 = vmatpush1.bf16.msra.mxu0 0
      %1421 = vmatprep.subr.bf16.mxu0 0
      %1422 = vmatpush1.bf16.msra.mxu0 0
      %1423 = vmatprep.subr.bf16.mxu0 0
      %1424 = vmatpush1.bf16.msra.mxu0 0
      %1425 = vmatprep.subr.bf16.mxu0 0
      %1426 = vmatpush1.bf16.msra.mxu0 0
      %1427 = vmatprep.subr.bf16.mxu0 0
      %1428 = vmatpush1.bf16.msra.mxu0 0
      %1429 = vmatprep.subr.bf16.mxu0 0
      %1430 = vmatpush1.bf16.msra.mxu0 0
      %1431 = vmatprep.subr.bf16.mxu0 0
      %1432 = vmatpush1.bf16.msra.mxu0 0
      %1433 = vmatprep.mubr.bf16.mxu0 0
      %1434 = vmatmul.mubr.bf16.gmra.mrb[0].mxu0 %v1396
      %v1435 = vpop.f32.mrb[0].mxu0
      %v1436 = vadd.f32 0.0, %v1435
      %v1437 = vpop.f32.mrb[0].mxu0
      %v1438 = vpop.f32.mrb[0].mxu0
      %v1439 = vadd.f32 0.0, %v1438
      %v1440 = vpop.f32.mrb[0].mxu0
      %1441 = vmatprep.mubr.bf16.mxu0 0
      %1442 = vmatmul.mubr.bf16.gmra.mrb[0].mxu0 %v1399
      %v1443 = vpop.f32.mrb[0].mxu0
      %v1444 = vadd.f32 0.0, %v1443
      %v1445 = vpop.f32.mrb[0].mxu0
      %v1446 = vpop.f32.mrb[0].mxu0
      %v1447 = vadd.f32 0.0, %v1446
      %v1448 = vpop.f32.mrb[0].mxu0
      %1449 = vdwg.mxu0
      %v1450 = vadd.f32 %v1322, %v1436
      %v1451 = vadd.f32 %v1323, %v1439
      %v1452 = vadd.f32 %v1324, %v1444
      %v1453 = vadd.f32 %v1325, %v1447
      %v1454 = vpack.c.bf16 %v802, %v798
      %v1455 = vpack.c.bf16 %v812, %v808
      %v1457 = vsel %vm1046, %v1183, 0
      %v1460 = vsel %vm1046, %v1184, 0
      %1462 = vmatprep.subr.bf16.mxu0 0
      %1463 = vmatpush1.bf16.msra.mxu0 %v1454
      %1464 = vmatprep.subr.bf16.mxu0 0
      %1465 = vmatpush1.bf16.msra.mxu0 %v1455
      %1466 = vmatprep.subr.bf16.mxu0 0
      %1467 = vmatpush1.bf16.msra.mxu0 0
      %1468 = vmatprep.subr.bf16.mxu0 0
      %1469 = vmatpush1.bf16.msra.mxu0 0
      %1470 = vmatprep.subr.bf16.mxu0 0
      %1471 = vmatpush1.bf16.msra.mxu0 0
      %1472 = vmatprep.subr.bf16.mxu0 0
      %1473 = vmatpush1.bf16.msra.mxu0 0
      %1474 = vmatprep.subr.bf16.mxu0 0
      %1475 = vmatpush1.bf16.msra.mxu0 0
      %1476 = vmatprep.subr.bf16.mxu0 0
      %1477 = vmatpush1.bf16.msra.mxu0 0
      %1478 = vmatprep.subr.bf16.mxu0 0
      %1479 = vmatpush1.bf16.msra.mxu0 0
      %1480 = vmatprep.subr.bf16.mxu0 0
      %1481 = vmatpush1.bf16.msra.mxu0 0
      %1482 = vmatprep.subr.bf16.mxu0 0
      %1483 = vmatpush1.bf16.msra.mxu0 0
      %1484 = vmatprep.subr.bf16.mxu0 0
      %1485 = vmatpush1.bf16.msra.mxu0 0
      %1486 = vmatprep.subr.bf16.mxu0 0
      %1487 = vmatpush1.bf16.msra.mxu0 0
      %1488 = vmatprep.subr.bf16.mxu0 0
      %1489 = vmatpush1.bf16.msra.mxu0 0
      %1490 = vmatprep.subr.bf16.mxu0 0
      %1491 = vmatpush1.bf16.msra.mxu0 0
      %1492 = vmatprep.subr.bf16.mxu0 0
      %1493 = vmatpush1.bf16.msra.mxu0 0
      %1494 = vmatprep.mubr.bf16.mxu0 0
      %1495 = vmatmul.mubr.bf16.gmra.mrb[0].mxu0 %v1457
      %v1496 = vpop.f32.mrb[0].mxu0
      %v1497 = vadd.f32 0.0, %v1496
      %v1498 = vpop.f32.mrb[0].mxu0
      %v1499 = vpop.f32.mrb[0].mxu0
      %v1500 = vadd.f32 0.0, %v1499
      %v1501 = vpop.f32.mrb[0].mxu0
      %1502 = vmatprep.mubr.bf16.mxu0 0
      %1503 = vmatmul.mubr.bf16.gmra.mrb[0].mxu0 %v1460
      %v1504 = vpop.f32.mrb[0].mxu0
      %v1505 = vadd.f32 0.0, %v1504
      %v1506 = vpop.f32.mrb[0].mxu0
      %v1507 = vpop.f32.mrb[0].mxu0
      %v1508 = vadd.f32 0.0, %v1507
      %v1509 = vpop.f32.mrb[0].mxu0
      %1510 = vdwg.mxu0
      %v1511 = vpack.c.bf16 %v1500, %v1497
      %v1512 = vpack.c.bf16 %v1508, %v1505
      %v1515 = vunpack.c.l.b16 %v1253
      %v1516 = vunpack.c.l.b16 %v1254
      %v1517 = vpack.c.b16 %v1516, %v1515
      %v1520 = vsel %vm822, %v1511, 0
      %v1523 = vsel %vm822, %v1512, 0
      %1525 = vmatprep.subr.bf16.mxu0 0
      %1526 = vmatpush1.bf16.msra.mxu0 %v1517
      %1527 = vmatprep.subr.bf16.mxu0 0
      %1528 = vmatpush1.bf16.msra.mxu0 0
      %1529 = vmatprep.subr.bf16.mxu0 0
      %1530 = vmatpush1.bf16.msra.mxu0 0
      %1531 = vmatprep.subr.bf16.mxu0 0
      %1532 = vmatpush1.bf16.msra.mxu0 0
      %1533 = vmatprep.subr.bf16.mxu0 0
      %1534 = vmatpush1.bf16.msra.mxu0 0
      %1535 = vmatprep.subr.bf16.mxu0 0
      %1536 = vmatpush1.bf16.msra.mxu0 0
      %1537 = vmatprep.subr.bf16.mxu0 0
      %1538 = vmatpush1.bf16.msra.mxu0 0
      %1539 = vmatprep.subr.bf16.mxu0 0
      %1540 = vmatpush1.bf16.msra.mxu0 0
      %1541 = vmatprep.subr.bf16.mxu0 0
      %1542 = vmatpush1.bf16.msra.mxu0 0
      %1543 = vmatprep.subr.bf16.mxu0 0
      %1544 = vmatpush1.bf16.msra.mxu0 0
      %1545 = vmatprep.subr.bf16.mxu0 0
      %1546 = vmatpush1.bf16.msra.mxu0 0
      %1547 = vmatprep.subr.bf16.mxu0 0
      %1548 = vmatpush1.bf16.msra.mxu0 0
      %1549 = vmatprep.subr.bf16.mxu0 0
      %1550 = vmatpush1.bf16.msra.mxu0 0
      %1551 = vmatprep.subr.bf16.mxu0 0
      %1552 = vmatpush1.bf16.msra.mxu0 0
      %1553 = vmatprep.subr.bf16.mxu0 0
      %1554 = vmatpush1.bf16.msra.mxu0 0
      %1555 = vmatprep.subr.bf16.mxu0 0
      %1556 = vmatpush1.bf16.msra.mxu0 0
      %1557 = vmatprep.mubr.bf16.mxu0 0
      %1558 = vmatmul.mubr.bf16.gmra.mrb[0].mxu0 %v1520
      %v1559 = vpop.f32.mrb[0].mxu0
      %v1560 = vadd.f32 0.0, %v1559
      %v1561 = vpop.f32.mrb[0].mxu0
      %v1562 = vpop.f32.mrb[0].mxu0
      %v1563 = vadd.f32 0.0, %v1562
      %v1564 = vpop.f32.mrb[0].mxu0
      %1565 = vmatprep.mubr.bf16.mxu0 0
      %1566 = vmatmul.mubr.bf16.gmra.mrb[0].mxu0 %v1523
      %v1567 = vpop.f32.mrb[0].mxu0
      %v1568 = vadd.f32 0.0, %v1567
      %v1569 = vpop.f32.mrb[0].mxu0
      %v1570 = vpop.f32.mrb[0].mxu0
      %v1571 = vadd.f32 0.0, %v1570
      %v1572 = vpop.f32.mrb[0].mxu0
      %1573 = vdwg.mxu0
      %v1574 = vadd.f32 %v1450, %v1560
      %v1575 = vadd.f32 %v1451, %v1563
      %v1576 = vadd.f32 %v1452, %v1568
      %v1577 = vadd.f32 %v1453, %v1571
      %v1578 = vadd.f32 %v700, %v1574
      %v1579 = vadd.f32 %v701, %v1575
      %v1580 = vadd.f32 %v702, %v1576
      %v1581 = vadd.f32 %v703, %v1577
      %v1582 = vld [vmem:[%s648] sm:$0x1]
      %v1583 = vld [vmem:[%s651] sm:$0x1]
      %v1584 = vsel %vm754, %v1578, 0.0
      %1585 = vadd.xlane.f32.xlu0 %v1584
      %v1586 = vpop.xlane.xlu0 %1585
      %v1587 = vsel %vm754, %v1579, 0.0
      %1588 = vadd.xlane.f32.xlu0 %v1587
      %v1589 = vpop.xlane.xlu0 %1588
      %v1590 = vsel %vm754, %v1580, 0.0
      %1591 = vadd.xlane.f32.xlu0 %v1590
      %v1592 = vpop.xlane.xlu0 %1591
      %v1593 = vsel %vm754, %v1581, 0.0
      %1594 = vadd.xlane.f32.xlu0 %v1593
      %v1595 = vpop.xlane.xlu0 %1594
      %v1596 = vmul.f32 %v1586, 0.020833334
      %v1597 = vmul.f32 %v1589, 0.020833334
      %v1598 = vmul.f32 %v1592, 0.020833334
      %v1599 = vmul.f32 %v1595, 0.020833334
      %v1600 = vsub.f32 %v1578, %v1596
      %v1601 = vsub.f32 %v1579, %v1597
      %v1602 = vsub.f32 %v1580, %v1598
      %v1603 = vsub.f32 %v1581, %v1599
      %v1604 = vmul.f32 %v1600, %v1600
      %v1605 = vmul.f32 %v1601, %v1601
      %v1606 = vmul.f32 %v1602, %v1602
      %v1607 = vmul.f32 %v1603, %v1603
      %v1608 = vsel %vm754, %v1604, 0.0
      %1609 = vadd.xlane.f32.xlu0 %v1608
      %v1610 = vpop.xlane.xlu0 %1609
      %v1611 = vsel %vm754, %v1605, 0.0
      %1612 = vadd.xlane.f32.xlu0 %v1611
      %v1613 = vpop.xlane.xlu0 %1612
      %v1614 = vsel %vm754, %v1606, 0.0
      %1615 = vadd.xlane.f32.xlu0 %v1614
      %v1616 = vpop.xlane.xlu0 %1615
      %v1617 = vsel %vm754, %v1607, 0.0
      %1618 = vadd.xlane.f32.xlu0 %v1617
      %v1619 = vpop.xlane.xlu0 %1618
      %v1620 = vmul.f32 %v1610, 0.020833334
      %v1621 = vmul.f32 %v1613, 0.020833334
      %v1622 = vmul.f32 %v1616, 0.020833334
      %v1623 = vmul.f32 %v1619, 0.020833334
      %v1624 = vadd.f32 %v1620, 1e-05
      %v1625 = vadd.f32 %v1621, 1e-05
      %v1626 = vadd.f32 %v1622, 1e-05
      %v1627 = vadd.f32 %v1623, 1e-05
      %v1628 = vrsqrt.pop %v1624
      %v1629 = vrsqrt.pop %v1625
      %v1630 = vrsqrt.pop %v1626
      %v1631 = vrsqrt.pop %v1627
      %v1632 = vmul.f32 %v1600, %v1628
      %v1633 = vmul.f32 %v1601, %v1629
      %v1634 = vmul.f32 %v1602, %v1630
      %v1635 = vmul.f32 %v1603, %v1631
      %v1637 = vlaneseq
      %v1638 = vshrl.u32 %v1637, 7
      %v1639 = vsub.s32 0, %v1638
      %v1640 = vrot.slane %v1582, %v1639
      %v1642 = vmul.f32 %v1632, %v1640
      %v1643 = vmul.f32 %v1633, %v1640
      %v1644 = vmul.f32 %v1634, %v1640
      %v1645 = vmul.f32 %v1635, %v1640
      %v1647 = vlaneseq
      %v1648 = vshrl.u32 %v1647, 7
      %v1649 = vsub.s32 0, %v1648
      %v1650 = vrot.slane %v1583, %v1649
      %v1652 = vadd.f32 %v1642, %v1650
      %v1653 = vadd.f32 %v1643, %v1650
      %v1654 = vadd.f32 %v1644, %v1650
      %v1655 = vadd.f32 %v1645, %v1650
      %v1656 = vpack.c.bf16 %v1653, %v1652
      %v1657 = vpack.c.bf16 %v1655, %v1654
      %v1658 = vld [vmem:[%s633] sm:$0xff]
      %v1659 = vld [vmem:[%s633 + $0x8] sm:$0xff]
      %v1660 = vld [vmem:[%s633 + $0x10] sm:$0xff]
      %v1661 = vld [vmem:[%s633 + $0x18] sm:$0xff]
      %v1662 = vld [vmem:[%s633 + $0x20] sm:$0xff]
      %v1663 = vld [vmem:[%s633 + $0x28] sm:$0xff]
      %v1664 = vld [vmem:[%s633 + $0x30] sm:$0xff]
      %v1665 = vld [vmem:[%s633 + $0x38] sm:$0xff]
      %v1666 = vld [vmem:[%s633 + $0x40] sm:$0xff]
      %v1667 = vld [vmem:[%s633 + $0x48] sm:$0xff]
      %v1668 = vld [vmem:[%s633 + $0x50] sm:$0xff]
      %v1669 = vld [vmem:[%s633 + $0x58] sm:$0xff]
      %v1670 = vld [vmem:[%s633 + $0x60] sm:$0xff]
      %v1671 = vld [vmem:[%s633 + $0x68] sm:$0xff]
      %v1672 = vld [vmem:[%s633 + $0x70] sm:$0xff]
      %v1673 = vld [vmem:[%s633 + $0x78] sm:$0xff]
      %v1674 = vld [vmem:[%s633 + $0x80] sm:$0xff]
      %v1675 = vld [vmem:[%s633 + $0x88] sm:$0xff]
      %v1676 = vld [vmem:[%s633 + $0x90] sm:$0xff]
      %v1677 = vld [vmem:[%s633 + $0x98] sm:$0xff]
      %v1678 = vld [vmem:[%s633 + $0xa0] sm:$0xff]
      %v1679 = vld [vmem:[%s633 + $0xa8] sm:$0xff]
      %v1680 = vld [vmem:[%s633 + $0xb0] sm:$0xff]
      %v1681 = vld [vmem:[%s633 + $0xb8] sm:$0xff]
      %v1682 = vld [vmem:[%s633 + $0xc0] sm:$0xff]
      %v1683 = vld [vmem:[%s633 + $0xc8] sm:$0xff]
      %v1684 = vld [vmem:[%s633 + $0xd0] sm:$0xff]
      %v1685 = vld [vmem:[%s633 + $0xd8] sm:$0xff]
      %v1686 = vld [vmem:[%s633 + $0xe0] sm:$0xff]
      %v1687 = vld [vmem:[%s633 + $0xe8] sm:$0xff]
      %v1688 = vld [vmem:[%s633 + $0xf0] sm:$0xff]
      %v1689 = vld [vmem:[%s633 + $0xf8] sm:$0xff]
      %v1690 = vld [vmem:[%s633 + $0x100] sm:$0xff]
      %v1691 = vld [vmem:[%s633 + $0x108] sm:$0xff]
      %v1692 = vld [vmem:[%s633 + $0x110] sm:$0xff]
      %v1693 = vld [vmem:[%s633 + $0x118] sm:$0xff]
      %v1694 = vld [vmem:[%s633 + $0x120] sm:$0xff]
      %v1695 = vld [vmem:[%s633 + $0x128] sm:$0xff]
      %v1696 = vld [vmem:[%s633 + $0x130] sm:$0xff]
      %v1697 = vld [vmem:[%s633 + $0x138] sm:$0xff]
      %v1698 = vld [vmem:[%s633 + $0x140] sm:$0xff]
      %v1699 = vld [vmem:[%s633 + $0x148] sm:$0xff]
      %v1700 = vld [vmem:[%s633 + $0x150] sm:$0xff]
      %v1701 = vld [vmem:[%s633 + $0x158] sm:$0xff]
      %v1702 = vld [vmem:[%s633 + $0x160] sm:$0xff]
      %v1703 = vld [vmem:[%s633 + $0x168] sm:$0xff]
      %v1704 = vld [vmem:[%s633 + $0x170] sm:$0xff]
      %v1705 = vld [vmem:[%s633 + $0x178] sm:$0xff]
      %v1706 = vld [vmem:[%s637] sm:$0xff]
      %v1707 = vld [vmem:[%s637 + $0x8] sm:$0xff]
      %v1710 = vlaneseq
      %v1711 = vshrl.u32 %v1710, 7
      %v1712 = vsub.s32 0, %v1711
      %v1713 = vrot.slane %v1706, %v1712
      %v1714 = vlaneseq
      %v1715 = vshrl.u32 %v1714, 7
      %v1716 = vsub.s32 1, %v1715
      %v1717 = vrot.slane %v1706, %v1716
      %v1718 = vlaneseq
      %v1719 = vshrl.u32 %v1718, 7
      %v1720 = vsub.s32 2, %v1719
      %v1721 = vrot.slane %v1706, %v1720
      %v1722 = vlaneseq
      %v1723 = vshrl.u32 %v1722, 7
      %v1724 = vsub.s32 3, %v1723
      %v1725 = vrot.slane %v1706, %v1724
      %v1726 = vlaneseq
      %v1727 = vshrl.u32 %v1726, 7
      %v1728 = vsub.s32 4, %v1727
      %v1729 = vrot.slane %v1706, %v1728
      %v1730 = vlaneseq
      %v1731 = vshrl.u32 %v1730, 7
      %v1732 = vsub.s32 5, %v1731
      %v1733 = vrot.slane %v1706, %v1732
      %v1734 = vlaneseq
      %v1735 = vshrl.u32 %v1734, 7
      %v1736 = vsub.s32 6, %v1735
      %v1737 = vrot.slane %v1706, %v1736
      %v1738 = vlaneseq
      %v1739 = vshrl.u32 %v1738, 7
      %v1740 = vsub.s32 7, %v1739
      %v1741 = vrot.slane %v1706, %v1740
      %v1742 = vlaneseq
      %v1743 = vshrl.u32 %v1742, 7
      %v1744 = vsub.s32 0, %v1743
      %v1745 = vrot.slane %v1707, %v1744
      %v1746 = vlaneseq
      %v1747 = vshrl.u32 %v1746, 7
      %v1748 = vsub.s32 1, %v1747
      %v1749 = vrot.slane %v1707, %v1748
      %v1750 = vlaneseq
      %v1751 = vshrl.u32 %v1750, 7
      %v1752 = vsub.s32 2, %v1751
      %v1753 = vrot.slane %v1707, %v1752
      %v1754 = vlaneseq
      %v1755 = vshrl.u32 %v1754, 7
      %v1756 = vsub.s32 3, %v1755
      %v1757 = vrot.slane %v1707, %v1756
      %v1758 = vlaneseq
      %v1759 = vshrl.u32 %v1758, 7
      %v1760 = vsub.s32 4, %v1759
      %v1761 = vrot.slane %v1707, %v1760
      %v1762 = vlaneseq
      %v1763 = vshrl.u32 %v1762, 7
      %v1764 = vsub.s32 5, %v1763
      %v1765 = vrot.slane %v1707, %v1764
      %v1766 = vlaneseq
      %v1767 = vshrl.u32 %v1766, 7
      %v1768 = vsub.s32 6, %v1767
      %v1769 = vrot.slane %v1707, %v1768
      %v1770 = vlaneseq
      %v1771 = vshrl.u32 %v1770, 7
      %v1772 = vsub.s32 7, %v1771
      %v1773 = vrot.slane %v1707, %v1772
      %v1838 = vunpack.c.l.b16 %v1658
      %v1839 = vunpack.c.h.b16 %v1658
      %v1840 = vunpack.c.l.b16 %v1659
      %v1841 = vunpack.c.h.b16 %v1659
      %v1842 = vunpack.c.l.b16 %v1660
      %v1843 = vunpack.c.h.b16 %v1660
      %v1844 = vunpack.c.l.b16 %v1661
      %v1845 = vunpack.c.h.b16 %v1661
      %v1846 = vunpack.c.l.b16 %v1662
      %v1847 = vunpack.c.h.b16 %v1662
      %v1848 = vunpack.c.l.b16 %v1663
      %v1849 = vunpack.c.h.b16 %v1663
      %v1850 = vunpack.c.l.b16 %v1664
      %v1851 = vunpack.c.h.b16 %v1664
      %v1852 = vunpack.c.l.b16 %v1665
      %v1853 = vunpack.c.h.b16 %v1665
      %v1854 = vunpack.c.l.b16 %v1666
      %v1855 = vunpack.c.h.b16 %v1666
      %v1856 = vunpack.c.l.b16 %v1667
      %v1857 = vunpack.c.h.b16 %v1667
      %v1858 = vunpack.c.l.b16 %v1668
      %v1859 = vunpack.c.h.b16 %v1668
      %v1860 = vunpack.c.l.b16 %v1669
      %v1861 = vunpack.c.h.b16 %v1669
      %v1862 = vunpack.c.l.b16 %v1670
      %v1863 = vunpack.c.h.b16 %v1670
      %v1864 = vunpack.c.l.b16 %v1671
      %v1865 = vunpack.c.h.b16 %v1671
      %v1866 = vunpack.c.l.b16 %v1672
      %v1867 = vunpack.c.h.b16 %v1672
      %v1868 = vunpack.c.l.b16 %v1673
      %v1869 = vunpack.c.h.b16 %v1673
      %v1870 = vunpack.c.l.b16 %v1674
      %v1871 = vunpack.c.h.b16 %v1674
      %v1872 = vunpack.c.l.b16 %v1675
      %v1873 = vunpack.c.h.b16 %v1675
      %v1874 = vunpack.c.l.b16 %v1676
      %v1875 = vunpack.c.h.b16 %v1676
      %v1876 = vunpack.c.l.b16 %v1677
      %v1877 = vunpack.c.h.b16 %v1677
      %v1878 = vunpack.c.l.b16 %v1678
      %v1879 = vunpack.c.h.b16 %v1678
      %v1880 = vunpack.c.l.b16 %v1679
      %v1881 = vunpack.c.h.b16 %v1679
      %v1882 = vunpack.c.l.b16 %v1680
      %v1883 = vunpack.c.h.b16 %v1680
      %v1884 = vunpack.c.l.b16 %v1681
      %v1885 = vunpack.c.h.b16 %v1681
      %v1886 = vunpack.c.l.b16 %v1682
      %v1887 = vunpack.c.h.b16 %v1682
      %v1888 = vunpack.c.l.b16 %v1683
      %v1889 = vunpack.c.h.b16 %v1683
      %v1890 = vunpack.c.l.b16 %v1684
      %v1891 = vunpack.c.h.b16 %v1684
      %v1892 = vunpack.c.l.b16 %v1685
      %v1893 = vunpack.c.h.b16 %v1685
      %v1894 = vunpack.c.l.b16 %v1686
      %v1895 = vunpack.c.h.b16 %v1686
      %v1896 = vunpack.c.l.b16 %v1687
      %v1897 = vunpack.c.h.b16 %v1687
      %v1898 = vunpack.c.l.b16 %v1688
      %v1899 = vunpack.c.h.b16 %v1688
      %v1900 = vunpack.c.l.b16 %v1689
      %v1901 = vunpack.c.h.b16 %v1689
      %v1902 = vunpack.c.l.b16 %v1690
      %v1903 = vunpack.c.h.b16 %v1690
      %v1904 = vunpack.c.l.b16 %v1691
      %v1905 = vunpack.c.h.b16 %v1691
      %v1906 = vunpack.c.l.b16 %v1692
      %v1907 = vunpack.c.h.b16 %v1692
      %v1908 = vunpack.c.l.b16 %v1693
      %v1909 = vunpack.c.h.b16 %v1693
      %v1910 = vunpack.c.l.b16 %v1694
      %v1911 = vunpack.c.h.b16 %v1694
      %v1912 = vunpack.c.l.b16 %v1695
      %v1913 = vunpack.c.h.b16 %v1695
      %v1914 = vunpack.c.l.b16 %v1696
      %v1915 = vunpack.c.h.b16 %v1696
      %v1916 = vunpack.c.l.b16 %v1697
      %v1917 = vunpack.c.h.b16 %v1697
      %v1918 = vunpack.c.l.b16 %v1698
      %v1919 = vunpack.c.h.b16 %v1698
      %v1920 = vunpack.c.l.b16 %v1699
      %v1921 = vunpack.c.h.b16 %v1699
      %v1922 = vunpack.c.l.b16 %v1700
      %v1923 = vunpack.c.h.b16 %v1700
      %v1924 = vunpack.c.l.b16 %v1701
      %v1925 = vunpack.c.h.b16 %v1701
      %v1926 = vunpack.c.l.b16 %v1702
      %v1927 = vunpack.c.h.b16 %v1702
      %v1928 = vunpack.c.l.b16 %v1703
      %v1929 = vunpack.c.h.b16 %v1703
      %v1930 = vunpack.c.l.b16 %v1704
      %v1931 = vunpack.c.h.b16 %v1704
      %v1932 = vunpack.c.l.b16 %v1705
      %v1933 = vunpack.c.h.b16 %v1705
      %v1934 = vpack.c.b16 %v1854, %v1838
      %v1935 = vpack.c.b16 %v1855, %v1839
      %v1936 = vpack.c.b16 %v1856, %v1840
      %v1937 = vpack.c.b16 %v1857, %v1841
      %v1938 = vpack.c.b16 %v1858, %v1842
      %v1939 = vpack.c.b16 %v1859, %v1843
      %v1940 = vpack.c.b16 %v1860, %v1844
      %v1941 = vpack.c.b16 %v1861, %v1845
      %v1942 = vpack.c.b16 %v1862, %v1846
      %v1943 = vpack.c.b16 %v1863, %v1847
      %v1944 = vpack.c.b16 %v1864, %v1848
      %v1945 = vpack.c.b16 %v1865, %v1849
      %v1946 = vpack.c.b16 %v1866, %v1850
      %v1947 = vpack.c.b16 %v1867, %v1851
      %v1948 = vpack.c.b16 %v1868, %v1852
      %v1949 = vpack.c.b16 %v1869, %v1853
      %v1950 = vpack.c.b16 %v1886, %v1870
      %v1951 = vpack.c.b16 %v1887, %v1871
      %v1952 = vpack.c.b16 %v1888, %v1872
      %v1953 = vpack.c.b16 %v1889, %v1873
      %v1954 = vpack.c.b16 %v1890, %v1874
      %v1955 = vpack.c.b16 %v1891, %v1875
      %v1956 = vpack.c.b16 %v1892, %v1876
      %v1957 = vpack.c.b16 %v1893, %v1877
      %v1958 = vpack.c.b16 %v1894, %v1878
      %v1959 = vpack.c.b16 %v1895, %v1879
      %v1960 = vpack.c.b16 %v1896, %v1880
      %v1961 = vpack.c.b16 %v1897, %v1881
      %v1962 = vpack.c.b16 %v1898, %v1882
      %v1963 = vpack.c.b16 %v1899, %v1883
      %v1964 = vpack.c.b16 %v1900, %v1884
      %v1965 = vpack.c.b16 %v1901, %v1885
      %v1966 = vpack.c.b16 %v1918, %v1902
      %v1967 = vpack.c.b16 %v1919, %v1903
      %v1968 = vpack.c.b16 %v1920, %v1904
      %v1969 = vpack.c.b16 %v1921, %v1905
      %v1970 = vpack.c.b16 %v1922, %v1906
      %v1971 = vpack.c.b16 %v1923, %v1907
      %v1972 = vpack.c.b16 %v1924, %v1908
      %v1973 = vpack.c.b16 %v1925, %v1909
      %v1974 = vpack.c.b16 %v1926, %v1910
      %v1975 = vpack.c.b16 %v1927, %v1911
      %v1976 = vpack.c.b16 %v1928, %v1912
      %v1977 = vpack.c.b16 %v1929, %v1913
      %v1978 = vpack.c.b16 %v1930, %v1914
      %v1979 = vpack.c.b16 %v1931, %v1915
      %v1980 = vpack.c.b16 %v1932, %v1916
      %v1981 = vpack.c.b16 %v1933, %v1917
      %v2031 = vsel %vm754, %v1656, 0
      %v2034 = vsel %vm754, %v1657, 0
      %2036 = vmatprep.subr.bf16.mxu0 %v1935
      %2037 = vmatpush1.bf16.msra.mxu0 %v1934
      %2038 = vmatprep.subr.bf16.mxu0 %v1951
      %2039 = vmatpush1.bf16.msra.mxu0 %v1950
      %2040 = vmatprep.subr.bf16.mxu0 %v1967
      %2041 = vmatpush1.bf16.msra.mxu0 %v1966
      %2042 = vmatprep.subr.bf16.mxu0 0
      %2043 = vmatpush1.bf16.msra.mxu0 0
      %2044 = vmatprep.subr.bf16.mxu0 0
      %2045 = vmatpush1.bf16.msra.mxu0 0
      %2046 = vmatprep.subr.bf16.mxu0 0
      %2047 = vmatpush1.bf16.msra.mxu0 0
      %2048 = vmatprep.subr.bf16.mxu0 0
      %2049 = vmatpush1.bf16.msra.mxu0 0
      %2050 = vmatprep.subr.bf16.mxu0 0
      %2051 = vmatpush1.bf16.msra.mxu0 0
      %2052 = vmatprep.subr.bf16.mxu0 0
      %2053 = vmatpush1.bf16.msra.mxu0 0
      %2054 = vmatprep.subr.bf16.mxu0 0
      %2055 = vmatpush1.bf16.msra.mxu0 0
      %2056 = vmatprep.subr.bf16.mxu0 0
      %2057 = vmatpush1.bf16.msra.mxu0 0
      %2058 = vmatprep.subr.bf16.mxu0 0
      %2059 = vmatpush1.bf16.msra.mxu0 0
      %2060 = vmatprep.subr.bf16.mxu0 0
      %2061 = vmatpush1.bf16.msra.mxu0 0
      %2062 = vmatprep.subr.bf16.mxu0 0
      %2063 = vmatpush1.bf16.msra.mxu0 0
      %2064 = vmatprep.subr.bf16.mxu0 0
      %2065 = vmatpush1.bf16.msra.mxu0 0
      %2066 = vmatprep.subr.bf16.mxu0 0
      %2067 = vmatpush1.bf16.msra.mxu0 0
      %2068 = vmatprep.mubr.bf16.mxu0 0
      %2069 = vmatmul.mubr.bf16.gmra.mrb[0].mxu0 %v2031
      %v2070 = vpop.f32.mrb[0].mxu0
      %v2071 = vadd.f32 %v1713, %v2070
      %v2072 = vpop.f32.mrb[0].mxu0
      %v2073 = vadd.f32 %v1717, %v2072
      %v2074 = vpop.f32.mrb[0].mxu0
      %v2075 = vadd.f32 %v1713, %v2074
      %v2076 = vpop.f32.mrb[0].mxu0
      %v2077 = vadd.f32 %v1717, %v2076
      %2078 = vmatprep.mubr.bf16.mxu0 0
      %2079 = vmatmul.mubr.bf16.gmra.mrb[0].mxu0 %v2034
      %v2080 = vpop.f32.mrb[0].mxu0
      %v2081 = vadd.f32 %v1713, %v2080
      %v2082 = vpop.f32.mrb[0].mxu0
      %v2083 = vadd.f32 %v1717, %v2082
      %v2084 = vpop.f32.mrb[0].mxu0
      %v2085 = vadd.f32 %v1713, %v2084
      %v2086 = vpop.f32.mrb[0].mxu0
      %v2087 = vadd.f32 %v1717, %v2086
      %2088 = vdwg.mxu0
      %2089 = vmatprep.subr.bf16.mxu0 %v1937
      %2090 = vmatpush1.bf16.msra.mxu0 %v1936
      %2091 = vmatprep.subr.bf16.mxu0 %v1953
      %2092 = vmatpush1.bf16.msra.mxu0 %v1952
      %2093 = vmatprep.subr.bf16.mxu0 %v1969
      %2094 = vmatpush1.bf16.msra.mxu0 %v1968
      %2095 = vmatprep.subr.bf16.mxu0 0
      %2096 = vmatpush1.bf16.msra.mxu0 0
      %2097 = vmatprep.subr.bf16.mxu0 0
      %2098 = vmatpush1.bf16.msra.mxu0 0
      %2099 = vmatprep.subr.bf16.mxu0 0
      %2100 = vmatpush1.bf16.msra.mxu0 0
      %2101 = vmatprep.subr.bf16.mxu0 0
      %2102 = vmatpush1.bf16.msra.mxu0 0
      %2103 = vmatprep.subr.bf16.mxu0 0
      %2104 = vmatpush1.bf16.msra.mxu0 0
      %2105 = vmatprep.subr.bf16.mxu0 0
      %2106 = vmatpush1.bf16.msra.mxu0 0
      %2107 = vmatprep.subr.bf16.mxu0 0
      %2108 = vmatpush1.bf16.msra.mxu0 0
      %2109 = vmatprep.subr.bf16.mxu0 0
      %2110 = vmatpush1.bf16.msra.mxu0 0
      %2111 = vmatprep.subr.bf16.mxu0 0
      %2112 = vmatpush1.bf16.msra.mxu0 0
      %2113 = vmatprep.subr.bf16.mxu0 0
      %2114 = vmatpush1.bf16.msra.mxu0 0
      %2115 = vmatprep.subr.bf16.mxu0 0
      %2116 = vmatpush1.bf16.msra.mxu0 0
      %2117 = vmatprep.subr.bf16.mxu0 0
      %2118 = vmatpush1.bf16.msra.mxu0 0
      %2119 = vmatprep.subr.bf16.mxu0 0
      %2120 = vmatpush1.bf16.msra.mxu0 0
      %2121 = vmatprep.mubr.bf16.mxu0 0
      %2122 = vmatmul.mubr.bf16.gmra.mrb[0].mxu0 %v2031
      %v2123 = vpop.f32.mrb[0].mxu0
      %v2124 = vadd.f32 %v1721, %v2123
      %v2125 = vpop.f32.mrb[0].mxu0
      %v2126 = vadd.f32 %v1725, %v2125
      %v2127 = vpop.f32.mrb[0].mxu0
      %v2128 = vadd.f32 %v1721, %v2127
      %v2129 = vpop.f32.mrb[0].mxu0
      %v2130 = vadd.f32 %v1725, %v2129
      %2131 = vmatprep.mubr.bf16.mxu0 0
      %2132 = vmatmul.mubr.bf16.gmra.mrb[0].mxu0 %v2034
      %v2133 = vpop.f32.mrb[0].mxu0
      %v2134 = vadd.f32 %v1721, %v2133
      %v2135 = vpop.f32.mrb[0].mxu0
      %v2136 = vadd.f32 %v1725, %v2135
      %v2137 = vpop.f32.mrb[0].mxu0
      %v2138 = vadd.f32 %v1721, %v2137
      %v2139 = vpop.f32.mrb[0].mxu0
      %v2140 = vadd.f32 %v1725, %v2139
      %2141 = vdwg.mxu0
      %2142 = vmatprep.subr.bf16.mxu0 %v1939
      %2143 = vmatpush1.bf16.msra.mxu0 %v1938
      %2144 = vmatprep.subr.bf16.mxu0 %v1955
      %2145 = vmatpush1.bf16.msra.mxu0 %v1954
      %2146 = vmatprep.subr.bf16.mxu0 %v1971
      %2147 = vmatpush1.bf16.msra.mxu0 %v1970
      %2148 = vmatprep.subr.bf16.mxu0 0
      %2149 = vmatpush1.bf16.msra.mxu0 0
      %2150 = vmatprep.subr.bf16.mxu0 0
      %2151 = vmatpush1.bf16.msra.mxu0 0
      %2152 = vmatprep.subr.bf16.mxu0 0
      %2153 = vmatpush1.bf16.msra.mxu0 0
      %2154 = vmatprep.subr.bf16.mxu0 0
      %2155 = vmatpush1.bf16.msra.mxu0 0
      %2156 = vmatprep.subr.bf16.mxu0 0
      %2157 = vmatpush1.bf16.msra.mxu0 0
      %2158 = vmatprep.subr.bf16.mxu0 0
      %2159 = vmatpush1.bf16.msra.mxu0 0
      %2160 = vmatprep.subr.bf16.mxu0 0
      %2161 = vmatpush1.bf16.msra.mxu0 0
      %2162 = vmatprep.subr.bf16.mxu0 0
      %2163 = vmatpush1.bf16.msra.mxu0 0
      %2164 = vmatprep.subr.bf16.mxu0 0
      %2165 = vmatpush1.bf16.msra.mxu0 0
      %2166 = vmatprep.subr.bf16.mxu0 0
      %2167 = vmatpush1.bf16.msra.mxu0 0
      %2168 = vmatprep.subr.bf16.mxu0 0
      %2169 = vmatpush1.bf16.msra.mxu0 0
      %2170 = vmatprep.subr.bf16.mxu0 0
      %2171 = vmatpush1.bf16.msra.mxu0 0
      %2172 = vmatprep.subr.bf16.mxu0 0
      %2173 = vmatpush1.bf16.msra.mxu0 0
      %2174 = vmatprep.mubr.bf16.mxu0 0
      %2175 = vmatmul.mubr.bf16.gmra.mrb[0].mxu0 %v2031
      %v2176 = vpop.f32.mrb[0].mxu0
      %v2177 = vadd.f32 %v1729, %v2176
      %v2178 = vpop.f32.mrb[0].mxu0
      %v2179 = vadd.f32 %v1733, %v2178
      %v2180 = vpop.f32.mrb[0].mxu0
      %v2181 = vadd.f32 %v1729, %v2180
      %v2182 = vpop.f32.mrb[0].mxu0
      %v2183 = vadd.f32 %v1733, %v2182
      %2184 = vmatprep.mubr.bf16.mxu0 0
      %2185 = vmatmul.mubr.bf16.gmra.mrb[0].mxu0 %v2034
      %v2186 = vpop.f32.mrb[0].mxu0
      %v2187 = vadd.f32 %v1729, %v2186
      %v2188 = vpop.f32.mrb[0].mxu0
      %v2189 = vadd.f32 %v1733, %v2188
      %v2190 = vpop.f32.mrb[0].mxu0
      %v2191 = vadd.f32 %v1729, %v2190
      %v2192 = vpop.f32.mrb[0].mxu0
      %v2193 = vadd.f32 %v1733, %v2192
      %2194 = vdwg.mxu0
      %2195 = vmatprep.subr.bf16.mxu0 %v1941
      %2196 = vmatpush1.bf16.msra.mxu0 %v1940
      %2197 = vmatprep.subr.bf16.mxu0 %v1957
      %2198 = vmatpush1.bf16.msra.mxu0 %v1956
      %2199 = vmatprep.subr.bf16.mxu0 %v1973
      %2200 = vmatpush1.bf16.msra.mxu0 %v1972
      %2201 = vmatprep.subr.bf16.mxu0 0
      %2202 = vmatpush1.bf16.msra.mxu0 0
      %2203 = vmatprep.subr.bf16.mxu0 0
      %2204 = vmatpush1.bf16.msra.mxu0 0
      %2205 = vmatprep.subr.bf16.mxu0 0
      %2206 = vmatpush1.bf16.msra.mxu0 0
      %2207 = vmatprep.subr.bf16.mxu0 0
      %2208 = vmatpush1.bf16.msra.mxu0 0
      %2209 = vmatprep.subr.bf16.mxu0 0
      %2210 = vmatpush1.bf16.msra.mxu0 0
      %2211 = vmatprep.subr.bf16.mxu0 0
      %2212 = vmatpush1.bf16.msra.mxu0 0
      %2213 = vmatprep.subr.bf16.mxu0 0
      %2214 = vmatpush1.bf16.msra.mxu0 0
      %2215 = vmatprep.subr.bf16.mxu0 0
      %2216 = vmatpush1.bf16.msra.mxu0 0
      %2217 = vmatprep.subr.bf16.mxu0 0
      %2218 = vmatpush1.bf16.msra.mxu0 0
      %2219 = vmatprep.subr.bf16.mxu0 0
      %2220 = vmatpush1.bf16.msra.mxu0 0
      %2221 = vmatprep.subr.bf16.mxu0 0
      %2222 = vmatpush1.bf16.msra.mxu0 0
      %2223 = vmatprep.subr.bf16.mxu0 0
      %2224 = vmatpush1.bf16.msra.mxu0 0
      %2225 = vmatprep.subr.bf16.mxu0 0
      %2226 = vmatpush1.bf16.msra.mxu0 0
      %2227 = vmatprep.mubr.bf16.mxu0 0
      %2228 = vmatmul.mubr.bf16.gmra.mrb[0].mxu0 %v2031
      %v2229 = vpop.f32.mrb[0].mxu0
      %v2230 = vadd.f32 %v1737, %v2229
      %v2231 = vpop.f32.mrb[0].mxu0
      %v2232 = vadd.f32 %v1741, %v2231
      %v2233 = vpop.f32.mrb[0].mxu0
      %v2234 = vadd.f32 %v1737, %v2233
      %v2235 = vpop.f32.mrb[0].mxu0
      %v2236 = vadd.f32 %v1741, %v2235
      %2237 = vmatprep.mubr.bf16.mxu0 0
      %2238 = vmatmul.mubr.bf16.gmra.mrb[0].mxu0 %v2034
      %v2239 = vpop.f32.mrb[0].mxu0
      %v2240 = vadd.f32 %v1737, %v2239
      %v2241 = vpop.f32.mrb[0].mxu0
      %v2242 = vadd.f32 %v1741, %v2241
      %v2243 = vpop.f32.mrb[0].mxu0
      %v2244 = vadd.f32 %v1737, %v2243
      %v2245 = vpop.f32.mrb[0].mxu0
      %v2246 = vadd.f32 %v1741, %v2245
      %2247 = vdwg.mxu0
      %2248 = vmatprep.subr.bf16.mxu0 %v1943
      %2249 = vmatpush1.bf16.msra.mxu0 %v1942
      %2250 = vmatprep.subr.bf16.mxu0 %v1959
      %2251 = vmatpush1.bf16.msra.mxu0 %v1958
      %2252 = vmatprep.subr.bf16.mxu0 %v1975
      %2253 = vmatpush1.bf16.msra.mxu0 %v1974
      %2254 = vmatprep.subr.bf16.mxu0 0
      %2255 = vmatpush1.bf16.msra.mxu0 0
      %2256 = vmatprep.subr.bf16.mxu0 0
      %2257 = vmatpush1.bf16.msra.mxu0 0
      %2258 = vmatprep.subr.bf16.mxu0 0
      %2259 = vmatpush1.bf16.msra.mxu0 0
      %2260 = vmatprep.subr.bf16.mxu0 0
      %2261 = vmatpush1.bf16.msra.mxu0 0
      %2262 = vmatprep.subr.bf16.mxu0 0
      %2263 = vmatpush1.bf16.msra.mxu0 0
      %2264 = vmatprep.subr.bf16.mxu0 0
      %2265 = vmatpush1.bf16.msra.mxu0 0
      %2266 = vmatprep.subr.bf16.mxu0 0
      %2267 = vmatpush1.bf16.msra.mxu0 0
      %2268 = vmatprep.subr.bf16.mxu0 0
      %2269 = vmatpush1.bf16.msra.mxu0 0
      %2270 = vmatprep.subr.bf16.mxu0 0
      %2271 = vmatpush1.bf16.msra.mxu0 0
      %2272 = vmatprep.subr.bf16.mxu0 0
      %2273 = vmatpush1.bf16.msra.mxu0 0
      %2274 = vmatprep.subr.bf16.mxu0 0
      %2275 = vmatpush1.bf16.msra.mxu0 0
      %2276 = vmatprep.subr.bf16.mxu0 0
      %2277 = vmatpush1.bf16.msra.mxu0 0
      %2278 = vmatprep.subr.bf16.mxu0 0
      %2279 = vmatpush1.bf16.msra.mxu0 0
      %2280 = vmatprep.mubr.bf16.mxu0 0
      %2281 = vmatmul.mubr.bf16.gmra.mrb[0].mxu0 %v2031
      %v2282 = vpop.f32.mrb[0].mxu0
      %v2283 = vadd.f32 %v1745, %v2282
      %v2284 = vpop.f32.mrb[0].mxu0
      %v2285 = vadd.f32 %v1749, %v2284
      %v2286 = vpop.f32.mrb[0].mxu0
      %v2287 = vadd.f32 %v1745, %v2286
      %v2288 = vpop.f32.mrb[0].mxu0
      %v2289 = vadd.f32 %v1749, %v2288
      %2290 = vmatprep.mubr.bf16.mxu0 0
      %2291 = vmatmul.mubr.bf16.gmra.mrb[0].mxu0 %v2034
      %v2292 = vpop.f32.mrb[0].mxu0
      %v2293 = vadd.f32 %v1745, %v2292
      %v2294 = vpop.f32.mrb[0].mxu0
      %v2295 = vadd.f32 %v1749, %v2294
      %v2296 = vpop.f32.mrb[0].mxu0
      %v2297 = vadd.f32 %v1745, %v2296
      %v2298 = vpop.f32.mrb[0].mxu0
      %v2299 = vadd.f32 %v1749, %v2298
      %2300 = vdwg.mxu0
      %2301 = vmatprep.subr.bf16.mxu0 %v1945
      %2302 = vmatpush1.bf16.msra.mxu0 %v1944
      %2303 = vmatprep.subr.bf16.mxu0 %v1961
      %2304 = vmatpush1.bf16.msra.mxu0 %v1960
      %2305 = vmatprep.subr.bf16.mxu0 %v1977
      %2306 = vmatpush1.bf16.msra.mxu0 %v1976
      %2307 = vmatprep.subr.bf16.mxu0 0
      %2308 = vmatpush1.bf16.msra.mxu0 0
      %2309 = vmatprep.subr.bf16.mxu0 0
      %2310 = vmatpush1.bf16.msra.mxu0 0
      %2311 = vmatprep.subr.bf16.mxu0 0
      %2312 = vmatpush1.bf16.msra.mxu0 0
      %2313 = vmatprep.subr.bf16.mxu0 0
      %2314 = vmatpush1.bf16.msra.mxu0 0
      %2315 = vmatprep.subr.bf16.mxu0 0
      %2316 = vmatpush1.bf16.msra.mxu0 0
      %2317 = vmatprep.subr.bf16.mxu0 0
      %2318 = vmatpush1.bf16.msra.mxu0 0
      %2319 = vmatprep.subr.bf16.mxu0 0
      %2320 = vmatpush1.bf16.msra.mxu0 0
      %2321 = vmatprep.subr.bf16.mxu0 0
      %2322 = vmatpush1.bf16.msra.mxu0 0
      %2323 = vmatprep.subr.bf16.mxu0 0
      %2324 = vmatpush1.bf16.msra.mxu0 0
      %2325 = vmatprep.subr.bf16.mxu0 0
      %2326 = vmatpush1.bf16.msra.mxu0 0
      %2327 = vmatprep.subr.bf16.mxu0 0
      %2328 = vmatpush1.bf16.msra.mxu0 0
      %2329 = vmatprep.subr.bf16.mxu0 0
      %2330 = vmatpush1.bf16.msra.mxu0 0
      %2331 = vmatprep.subr.bf16.mxu0 0
      %2332 = vmatpush1.bf16.msra.mxu0 0
      %2333 = vmatprep.mubr.bf16.mxu0 0
      %2334 = vmatmul.mubr.bf16.gmra.mrb[0].mxu0 %v2031
      %v2335 = vpop.f32.mrb[0].mxu0
      %v2336 = vadd.f32 %v1753, %v2335
      %v2337 = vpop.f32.mrb[0].mxu0
      %v2338 = vadd.f32 %v1757, %v2337
      %v2339 = vpop.f32.mrb[0].mxu0
      %v2340 = vadd.f32 %v1753, %v2339
      %v2341 = vpop.f32.mrb[0].mxu0
      %v2342 = vadd.f32 %v1757, %v2341
      %2343 = vmatprep.mubr.bf16.mxu0 0
      %2344 = vmatmul.mubr.bf16.gmra.mrb[0].mxu0 %v2034
      %v2345 = vpop.f32.mrb[0].mxu0
      %v2346 = vadd.f32 %v1753, %v2345
      %v2347 = vpop.f32.mrb[0].mxu0
      %v2348 = vadd.f32 %v1757, %v2347
      %v2349 = vpop.f32.mrb[0].mxu0
      %v2350 = vadd.f32 %v1753, %v2349
      %v2351 = vpop.f32.mrb[0].mxu0
      %v2352 = vadd.f32 %v1757, %v2351
      %2353 = vdwg.mxu0
      %2354 = vmatprep.subr.bf16.mxu0 %v1947
      %2355 = vmatpush1.bf16.msra.mxu0 %v1946
      %2356 = vmatprep.subr.bf16.mxu0 %v1963
      %2357 = vmatpush1.bf16.msra.mxu0 %v1962
      %2358 = vmatprep.subr.bf16.mxu0 %v1979
      %2359 = vmatpush1.bf16.msra.mxu0 %v1978
      %2360 = vmatprep.subr.bf16.mxu0 0
      %2361 = vmatpush1.bf16.msra.mxu0 0
      %2362 = vmatprep.subr.bf16.mxu0 0
      %2363 = vmatpush1.bf16.msra.mxu0 0
      %2364 = vmatprep.subr.bf16.mxu0 0
      %2365 = vmatpush1.bf16.msra.mxu0 0
      %2366 = vmatprep.subr.bf16.mxu0 0
      %2367 = vmatpush1.bf16.msra.mxu0 0
      %2368 = vmatprep.subr.bf16.mxu0 0
      %2369 = vmatpush1.bf16.msra.mxu0 0
      %2370 = vmatprep.subr.bf16.mxu0 0
      %2371 = vmatpush1.bf16.msra.mxu0 0
      %2372 = vmatprep.subr.bf16.mxu0 0
      %2373 = vmatpush1.bf16.msra.mxu0 0
      %2374 = vmatprep.subr.bf16.mxu0 0
      %2375 = vmatpush1.bf16.msra.mxu0 0
      %2376 = vmatprep.subr.bf16.mxu0 0
      %2377 = vmatpush1.bf16.msra.mxu0 0
      %2378 = vmatprep.subr.bf16.mxu0 0
      %2379 = vmatpush1.bf16.msra.mxu0 0
      %2380 = vmatprep.subr.bf16.mxu0 0
      %2381 = vmatpush1.bf16.msra.mxu0 0
      %2382 = vmatprep.subr.bf16.mxu0 0
      %2383 = vmatpush1.bf16.msra.mxu0 0
      %2384 = vmatprep.subr.bf16.mxu0 0
      %2385 = vmatpush1.bf16.msra.mxu0 0
      %2386 = vmatprep.mubr.bf16.mxu0 0
      %2387 = vmatmul.mubr.bf16.gmra.mrb[0].mxu0 %v2031
      %v2388 = vpop.f32.mrb[0].mxu0
      %v2389 = vadd.f32 %v1761, %v2388
      %v2390 = vpop.f32.mrb[0].mxu0
      %v2391 = vadd.f32 %v1765, %v2390
      %v2392 = vpop.f32.mrb[0].mxu0
      %v2393 = vadd.f32 %v1761, %v2392
      %v2394 = vpop.f32.mrb[0].mxu0
      %v2395 = vadd.f32 %v1765, %v2394
      %2396 = vmatprep.mubr.bf16.mxu0 0
      %2397 = vmatmul.mubr.bf16.gmra.mrb[0].mxu0 %v2034
      %v2398 = vpop.f32.mrb[0].mxu0
      %v2399 = vadd.f32 %v1761, %v2398
      %v2400 = vpop.f32.mrb[0].mxu0
      %v2401 = vadd.f32 %v1765, %v2400
      %v2402 = vpop.f32.mrb[0].mxu0
      %v2403 = vadd.f32 %v1761, %v2402
      %v2404 = vpop.f32.mrb[0].mxu0
      %v2405 = vadd.f32 %v1765, %v2404
      %2406 = vdwg.mxu0
      %2407 = vmatprep.subr.bf16.mxu0 %v1949
      %2408 = vmatpush1.bf16.msra.mxu0 %v1948
      %2409 = vmatprep.subr.bf16.mxu0 %v1965
      %2410 = vmatpush1.bf16.msra.mxu0 %v1964
      %2411 = vmatprep.subr.bf16.mxu0 %v1981
      %2412 = vmatpush1.bf16.msra.mxu0 %v1980
      %2413 = vmatprep.subr.bf16.mxu0 0
      %2414 = vmatpush1.bf16.msra.mxu0 0
      %2415 = vmatprep.subr.bf16.mxu0 0
      %2416 = vmatpush1.bf16.msra.mxu0 0
      %2417 = vmatprep.subr.bf16.mxu0 0
      %2418 = vmatpush1.bf16.msra.mxu0 0
      %2419 = vmatprep.subr.bf16.mxu0 0
      %2420 = vmatpush1.bf16.msra.mxu0 0
      %2421 = vmatprep.subr.bf16.mxu0 0
      %2422 = vmatpush1.bf16.msra.mxu0 0
      %2423 = vmatprep.subr.bf16.mxu0 0
      %2424 = vmatpush1.bf16.msra.mxu0 0
      %2425 = vmatprep.subr.bf16.mxu0 0
      %2426 = vmatpush1.bf16.msra.mxu0 0
      %2427 = vmatprep.subr.bf16.mxu0 0
      %2428 = vmatpush1.bf16.msra.mxu0 0
      %2429 = vmatprep.subr.bf16.mxu0 0
      %2430 = vmatpush1.bf16.msra.mxu0 0
      %2431 = vmatprep.subr.bf16.mxu0 0
      %2432 = vmatpush1.bf16.msra.mxu0 0
      %2433 = vmatprep.subr.bf16.mxu0 0
      %2434 = vmatpush1.bf16.msra.mxu0 0
      %2435 = vmatprep.subr.bf16.mxu0 0
      %2436 = vmatpush1.bf16.msra.mxu0 0
      %2437 = vmatprep.subr.bf16.mxu0 0
      %2438 = vmatpush1.bf16.msra.mxu0 0
      %2439 = vmatprep.mubr.bf16.mxu0 0
      %2440 = vmatmul.mubr.bf16.gmra.mrb[0].mxu0 %v2031
      %v2441 = vpop.f32.mrb[0].mxu0
      %v2442 = vadd.f32 %v1769, %v2441
      %v2443 = vpop.f32.mrb[0].mxu0
      %v2444 = vadd.f32 %v1773, %v2443
      %v2445 = vpop.f32.mrb[0].mxu0
      %v2446 = vadd.f32 %v1769, %v2445
      %v2447 = vpop.f32.mrb[0].mxu0
      %v2448 = vadd.f32 %v1773, %v2447
      %2449 = vmatprep.mubr.bf16.mxu0 0
      %2450 = vmatmul.mubr.bf16.gmra.mrb[0].mxu0 %v2034
      %v2451 = vpop.f32.mrb[0].mxu0
      %v2452 = vadd.f32 %v1769, %v2451
      %v2453 = vpop.f32.mrb[0].mxu0
      %v2454 = vadd.f32 %v1773, %v2453
      %v2455 = vpop.f32.mrb[0].mxu0
      %v2456 = vadd.f32 %v1769, %v2455
      %v2457 = vpop.f32.mrb[0].mxu0
      %v2458 = vadd.f32 %v1773, %v2457
      %2459 = vdwg.mxu0
      %v2460 = vmax.f32 %v2071, 0.0
      %v2461 = vmax.f32 %v2073, 0.0
      %v2462 = vmax.f32 %v2124, 0.0
      %v2463 = vmax.f32 %v2126, 0.0
      %v2464 = vmax.f32 %v2177, 0.0
      %v2465 = vmax.f32 %v2179, 0.0
      %v2466 = vmax.f32 %v2230, 0.0
      %v2467 = vmax.f32 %v2232, 0.0
      %v2468 = vmax.f32 %v2283, 0.0
      %v2469 = vmax.f32 %v2285, 0.0
      %v2470 = vmax.f32 %v2336, 0.0
      %v2471 = vmax.f32 %v2338, 0.0
      %v2472 = vmax.f32 %v2389, 0.0
      %v2473 = vmax.f32 %v2391, 0.0
      %v2474 = vmax.f32 %v2442, 0.0
      %v2475 = vmax.f32 %v2444, 0.0
      %v2476 = vmax.f32 %v2075, 0.0
      %v2477 = vmax.f32 %v2077, 0.0
      %v2478 = vmax.f32 %v2128, 0.0
      %v2479 = vmax.f32 %v2130, 0.0
      %v2480 = vmax.f32 %v2181, 0.0
      %v2481 = vmax.f32 %v2183, 0.0
      %v2482 = vmax.f32 %v2234, 0.0
      %v2483 = vmax.f32 %v2236, 0.0
      %v2484 = vmax.f32 %v2287, 0.0
      %v2485 = vmax.f32 %v2289, 0.0
      %v2486 = vmax.f32 %v2340, 0.0
      %v2487 = vmax.f32 %v2342, 0.0
      %v2488 = vmax.f32 %v2393, 0.0
      %v2489 = vmax.f32 %v2395, 0.0
      %v2490 = vmax.f32 %v2446, 0.0
      %v2491 = vmax.f32 %v2448, 0.0
      %v2492 = vmax.f32 %v2081, 0.0
      %v2493 = vmax.f32 %v2083, 0.0
      %v2494 = vmax.f32 %v2134, 0.0
      %v2495 = vmax.f32 %v2136, 0.0
      %v2496 = vmax.f32 %v2187, 0.0
      %v2497 = vmax.f32 %v2189, 0.0
      %v2498 = vmax.f32 %v2240, 0.0
      %v2499 = vmax.f32 %v2242, 0.0
      %v2500 = vmax.f32 %v2293, 0.0
      %v2501 = vmax.f32 %v2295, 0.0
      %v2502 = vmax.f32 %v2346, 0.0
      %v2503 = vmax.f32 %v2348, 0.0
      %v2504 = vmax.f32 %v2399, 0.0
      %v2505 = vmax.f32 %v2401, 0.0
      %v2506 = vmax.f32 %v2452, 0.0
      %v2507 = vmax.f32 %v2454, 0.0
      %v2508 = vmax.f32 %v2085, 0.0
      %v2509 = vmax.f32 %v2087, 0.0
      %v2510 = vmax.f32 %v2138, 0.0
      %v2511 = vmax.f32 %v2140, 0.0
      %v2512 = vmax.f32 %v2191, 0.0
      %v2513 = vmax.f32 %v2193, 0.0
      %v2514 = vmax.f32 %v2244, 0.0
      %v2515 = vmax.f32 %v2246, 0.0
      %v2516 = vmax.f32 %v2297, 0.0
      %v2517 = vmax.f32 %v2299, 0.0
      %v2518 = vmax.f32 %v2350, 0.0
      %v2519 = vmax.f32 %v2352, 0.0
      %v2520 = vmax.f32 %v2403, 0.0
      %v2521 = vmax.f32 %v2405, 0.0
      %v2522 = vmax.f32 %v2456, 0.0
      %v2523 = vmax.f32 %v2458, 0.0
      %v2524 = vpack.c.bf16 %v2476, %v2460
      %v2525 = vpack.c.bf16 %v2477, %v2461
      %v2526 = vpack.c.bf16 %v2478, %v2462
      %v2527 = vpack.c.bf16 %v2479, %v2463
      %v2528 = vpack.c.bf16 %v2480, %v2464
      %v2529 = vpack.c.bf16 %v2481, %v2465
      %v2530 = vpack.c.bf16 %v2482, %v2466
      %v2531 = vpack.c.bf16 %v2483, %v2467
      %v2532 = vpack.c.bf16 %v2484, %v2468
      %v2533 = vpack.c.bf16 %v2485, %v2469
      %v2534 = vpack.c.bf16 %v2486, %v2470
      %v2535 = vpack.c.bf16 %v2487, %v2471
      %v2536 = vpack.c.bf16 %v2488, %v2472
      %v2537 = vpack.c.bf16 %v2489, %v2473
      %v2538 = vpack.c.bf16 %v2490, %v2474
      %v2539 = vpack.c.bf16 %v2491, %v2475
      %v2540 = vpack.c.bf16 %v2508, %v2492
      %v2541 = vpack.c.bf16 %v2509, %v2493
      %v2542 = vpack.c.bf16 %v2510, %v2494
      %v2543 = vpack.c.bf16 %v2511, %v2495
      %v2544 = vpack.c.bf16 %v2512, %v2496
      %v2545 = vpack.c.bf16 %v2513, %v2497
      %v2546 = vpack.c.bf16 %v2514, %v2498
      %v2547 = vpack.c.bf16 %v2515, %v2499
      %v2548 = vpack.c.bf16 %v2516, %v2500
      %v2549 = vpack.c.bf16 %v2517, %v2501
      %v2550 = vpack.c.bf16 %v2518, %v2502
      %v2551 = vpack.c.bf16 %v2519, %v2503
      %v2552 = vpack.c.bf16 %v2520, %v2504
      %v2553 = vpack.c.bf16 %v2521, %v2505
      %v2554 = vpack.c.bf16 %v2522, %v2506
      %v2555 = vpack.c.bf16 %v2523, %v2507
      %v2556 = vld [vmem:[%s642] sm:$0xf]
      %v2557 = vld [vmem:[%s642 + $0x4] sm:$0xf]
      %v2558 = vld [vmem:[%s642 + $0x8] sm:$0xf]
      %v2559 = vld [vmem:[%s642 + $0xc] sm:$0xf]
      %v2560 = vld [vmem:[%s642 + $0x10] sm:$0xf]
      %v2561 = vld [vmem:[%s642 + $0x14] sm:$0xf]
      %v2562 = vld [vmem:[%s642 + $0x18] sm:$0xf]
      %v2563 = vld [vmem:[%s642 + $0x1c] sm:$0xf]
      %v2564 = vld [vmem:[%s642 + $0x20] sm:$0xf]
      %v2565 = vld [vmem:[%s642 + $0x24] sm:$0xf]
      %v2566 = vld [vmem:[%s642 + $0x28] sm:$0xf]
      %v2567 = vld [vmem:[%s642 + $0x2c] sm:$0xf]
      %v2568 = vld [vmem:[%s642 + $0x30] sm:$0xf]
      %v2569 = vld [vmem:[%s642 + $0x34] sm:$0xf]
      %v2570 = vld [vmem:[%s642 + $0x38] sm:$0xf]
      %v2571 = vld [vmem:[%s642 + $0x3c] sm:$0xf]
      %v2572 = vld [vmem:[%s642 + $0x40] sm:$0xf]
      %v2573 = vld [vmem:[%s642 + $0x44] sm:$0xf]
      %v2574 = vld [vmem:[%s642 + $0x48] sm:$0xf]
      %v2575 = vld [vmem:[%s642 + $0x4c] sm:$0xf]
      %v2576 = vld [vmem:[%s642 + $0x50] sm:$0xf]
      %v2577 = vld [vmem:[%s642 + $0x54] sm:$0xf]
      %v2578 = vld [vmem:[%s642 + $0x58] sm:$0xf]
      %v2579 = vld [vmem:[%s642 + $0x5c] sm:$0xf]
      %v2580 = vld [vmem:[%s642 + $0x60] sm:$0xf]
      %v2581 = vld [vmem:[%s642 + $0x64] sm:$0xf]
      %v2582 = vld [vmem:[%s642 + $0x68] sm:$0xf]
      %v2583 = vld [vmem:[%s642 + $0x6c] sm:$0xf]
      %v2584 = vld [vmem:[%s642 + $0x70] sm:$0xf]
      %v2585 = vld [vmem:[%s642 + $0x74] sm:$0xf]
      %v2586 = vld [vmem:[%s642 + $0x78] sm:$0xf]
      %v2587 = vld [vmem:[%s642 + $0x7c] sm:$0xf]
      %v2588 = vld [vmem:[%s642 + $0x80] sm:$0xf]
      %v2589 = vld [vmem:[%s642 + $0x84] sm:$0xf]
      %v2590 = vld [vmem:[%s642 + $0x88] sm:$0xf]
      %v2591 = vld [vmem:[%s642 + $0x8c] sm:$0xf]
      %v2592 = vld [vmem:[%s642 + $0x90] sm:$0xf]
      %v2593 = vld [vmem:[%s642 + $0x94] sm:$0xf]
      %v2594 = vld [vmem:[%s642 + $0x98] sm:$0xf]
      %v2595 = vld [vmem:[%s642 + $0x9c] sm:$0xf]
      %v2596 = vld [vmem:[%s642 + $0xa0] sm:$0xf]
      %v2597 = vld [vmem:[%s642 + $0xa4] sm:$0xf]
      %v2598 = vld [vmem:[%s642 + $0xa8] sm:$0xf]
      %v2599 = vld [vmem:[%s642 + $0xac] sm:$0xf]
      %v2600 = vld [vmem:[%s642 + $0xb0] sm:$0xf]
      %v2601 = vld [vmem:[%s642 + $0xb4] sm:$0xf]
      %v2602 = vld [vmem:[%s642 + $0xb8] sm:$0xf]
      %v2603 = vld [vmem:[%s642 + $0xbc] sm:$0xf]
      %v2604 = vld [vmem:[%s642 + $0xc0] sm:$0xf]
      %v2605 = vld [vmem:[%s642 + $0xc4] sm:$0xf]
      %v2606 = vld [vmem:[%s642 + $0xc8] sm:$0xf]
      %v2607 = vld [vmem:[%s642 + $0xcc] sm:$0xf]
      %v2608 = vld [vmem:[%s642 + $0xd0] sm:$0xf]
      %v2609 = vld [vmem:[%s642 + $0xd4] sm:$0xf]
      %v2610 = vld [vmem:[%s642 + $0xd8] sm:$0xf]
      %v2611 = vld [vmem:[%s642 + $0xdc] sm:$0xf]
      %v2612 = vld [vmem:[%s642 + $0xe0] sm:$0xf]
      %v2613 = vld [vmem:[%s642 + $0xe4] sm:$0xf]
      %v2614 = vld [vmem:[%s642 + $0xe8] sm:$0xf]
      %v2615 = vld [vmem:[%s642 + $0xec] sm:$0xf]
      %v2616 = vld [vmem:[%s642 + $0xf0] sm:$0xf]
      %v2617 = vld [vmem:[%s642 + $0xf4] sm:$0xf]
      %v2618 = vld [vmem:[%s642 + $0xf8] sm:$0xf]
      %v2619 = vld [vmem:[%s642 + $0xfc] sm:$0xf]
      %v2620 = vld [vmem:[%s642 + $0x100] sm:$0xf]
      %v2621 = vld [vmem:[%s642 + $0x104] sm:$0xf]
      %v2622 = vld [vmem:[%s642 + $0x108] sm:$0xf]
      %v2623 = vld [vmem:[%s642 + $0x10c] sm:$0xf]
      %v2624 = vld [vmem:[%s642 + $0x110] sm:$0xf]
      %v2625 = vld [vmem:[%s642 + $0x114] sm:$0xf]
      %v2626 = vld [vmem:[%s642 + $0x118] sm:$0xf]
      %v2627 = vld [vmem:[%s642 + $0x11c] sm:$0xf]
      %v2628 = vld [vmem:[%s642 + $0x120] sm:$0xf]
      %v2629 = vld [vmem:[%s642 + $0x124] sm:$0xf]
      %v2630 = vld [vmem:[%s642 + $0x128] sm:$0xf]
      %v2631 = vld [vmem:[%s642 + $0x12c] sm:$0xf]
      %v2632 = vld [vmem:[%s642 + $0x130] sm:$0xf]
      %v2633 = vld [vmem:[%s642 + $0x134] sm:$0xf]
      %v2634 = vld [vmem:[%s642 + $0x138] sm:$0xf]
      %v2635 = vld [vmem:[%s642 + $0x13c] sm:$0xf]
      %v2636 = vld [vmem:[%s642 + $0x140] sm:$0xf]
      %v2637 = vld [vmem:[%s642 + $0x144] sm:$0xf]
      %v2638 = vld [vmem:[%s642 + $0x148] sm:$0xf]
      %v2639 = vld [vmem:[%s642 + $0x14c] sm:$0xf]
      %v2640 = vld [vmem:[%s642 + $0x150] sm:$0xf]
      %v2641 = vld [vmem:[%s642 + $0x154] sm:$0xf]
      %v2642 = vld [vmem:[%s642 + $0x158] sm:$0xf]
      %v2643 = vld [vmem:[%s642 + $0x15c] sm:$0xf]
      %v2644 = vld [vmem:[%s642 + $0x160] sm:$0xf]
      %v2645 = vld [vmem:[%s642 + $0x164] sm:$0xf]
      %v2646 = vld [vmem:[%s642 + $0x168] sm:$0xf]
      %v2647 = vld [vmem:[%s642 + $0x16c] sm:$0xf]
      %v2648 = vld [vmem:[%s642 + $0x170] sm:$0xf]
      %v2649 = vld [vmem:[%s642 + $0x174] sm:$0xf]
      %v2650 = vld [vmem:[%s642 + $0x178] sm:$0xf]
      %v2651 = vld [vmem:[%s642 + $0x17c] sm:$0xf]
      %v2652 = vld [vmem:[%s642 + $0x180] sm:$0xf]
      %v2653 = vld [vmem:[%s642 + $0x184] sm:$0xf]
      %v2654 = vld [vmem:[%s642 + $0x188] sm:$0xf]
      %v2655 = vld [vmem:[%s642 + $0x18c] sm:$0xf]
      %v2656 = vld [vmem:[%s642 + $0x190] sm:$0xf]
      %v2657 = vld [vmem:[%s642 + $0x194] sm:$0xf]
      %v2658 = vld [vmem:[%s642 + $0x198] sm:$0xf]
      %v2659 = vld [vmem:[%s642 + $0x19c] sm:$0xf]
      %v2660 = vld [vmem:[%s642 + $0x1a0] sm:$0xf]
      %v2661 = vld [vmem:[%s642 + $0x1a4] sm:$0xf]
      %v2662 = vld [vmem:[%s642 + $0x1a8] sm:$0xf]
      %v2663 = vld [vmem:[%s642 + $0x1ac] sm:$0xf]
      %v2664 = vld [vmem:[%s642 + $0x1b0] sm:$0xf]
      %v2665 = vld [vmem:[%s642 + $0x1b4] sm:$0xf]
      %v2666 = vld [vmem:[%s642 + $0x1b8] sm:$0xf]
      %v2667 = vld [vmem:[%s642 + $0x1bc] sm:$0xf]
      %v2668 = vld [vmem:[%s642 + $0x1c0] sm:$0xf]
      %v2669 = vld [vmem:[%s642 + $0x1c4] sm:$0xf]
      %v2670 = vld [vmem:[%s642 + $0x1c8] sm:$0xf]
      %v2671 = vld [vmem:[%s642 + $0x1cc] sm:$0xf]
      %v2672 = vld [vmem:[%s642 + $0x1d0] sm:$0xf]
      %v2673 = vld [vmem:[%s642 + $0x1d4] sm:$0xf]
      %v2674 = vld [vmem:[%s642 + $0x1d8] sm:$0xf]
      %v2675 = vld [vmem:[%s642 + $0x1dc] sm:$0xf]
      %v2676 = vld [vmem:[%s642 + $0x1e0] sm:$0xf]
      %v2677 = vld [vmem:[%s642 + $0x1e4] sm:$0xf]
      %v2678 = vld [vmem:[%s642 + $0x1e8] sm:$0xf]
      %v2679 = vld [vmem:[%s642 + $0x1ec] sm:$0xf]
      %v2680 = vld [vmem:[%s642 + $0x1f0] sm:$0xf]
      %v2681 = vld [vmem:[%s642 + $0x1f4] sm:$0xf]
      %v2682 = vld [vmem:[%s642 + $0x1f8] sm:$0xf]
      %v2683 = vld [vmem:[%s642 + $0x1fc] sm:$0xf]
      %v2684 = vld [vmem:[%s642 + $0x200] sm:$0xf]
      %v2685 = vld [vmem:[%s642 + $0x204] sm:$0xf]
      %v2686 = vld [vmem:[%s642 + $0x208] sm:$0xf]
      %v2687 = vld [vmem:[%s642 + $0x20c] sm:$0xf]
      %v2688 = vld [vmem:[%s642 + $0x210] sm:$0xf]
      %v2689 = vld [vmem:[%s642 + $0x214] sm:$0xf]
      %v2690 = vld [vmem:[%s642 + $0x218] sm:$0xf]
      %v2691 = vld [vmem:[%s642 + $0x21c] sm:$0xf]
      %v2692 = vld [vmem:[%s642 + $0x220] sm:$0xf]
      %v2693 = vld [vmem:[%s642 + $0x224] sm:$0xf]
      %v2694 = vld [vmem:[%s642 + $0x228] sm:$0xf]
      %v2695 = vld [vmem:[%s642 + $0x22c] sm:$0xf]
      %v2696 = vld [vmem:[%s642 + $0x230] sm:$0xf]
      %v2697 = vld [vmem:[%s642 + $0x234] sm:$0xf]
      %v2698 = vld [vmem:[%s642 + $0x238] sm:$0xf]
      %v2699 = vld [vmem:[%s642 + $0x23c] sm:$0xf]
      %v2700 = vld [vmem:[%s642 + $0x240] sm:$0xf]
      %v2701 = vld [vmem:[%s642 + $0x244] sm:$0xf]
      %v2702 = vld [vmem:[%s642 + $0x248] sm:$0xf]
      %v2703 = vld [vmem:[%s642 + $0x24c] sm:$0xf]
      %v2704 = vld [vmem:[%s642 + $0x250] sm:$0xf]
      %v2705 = vld [vmem:[%s642 + $0x254] sm:$0xf]
      %v2706 = vld [vmem:[%s642 + $0x258] sm:$0xf]
      %v2707 = vld [vmem:[%s642 + $0x25c] sm:$0xf]
      %v2708 = vld [vmem:[%s642 + $0x260] sm:$0xf]
      %v2709 = vld [vmem:[%s642 + $0x264] sm:$0xf]
      %v2710 = vld [vmem:[%s642 + $0x268] sm:$0xf]
      %v2711 = vld [vmem:[%s642 + $0x26c] sm:$0xf]
      %v2712 = vld [vmem:[%s642 + $0x270] sm:$0xf]
      %v2713 = vld [vmem:[%s642 + $0x274] sm:$0xf]
      %v2714 = vld [vmem:[%s642 + $0x278] sm:$0xf]
      %v2715 = vld [vmem:[%s642 + $0x27c] sm:$0xf]
      %v2716 = vld [vmem:[%s642 + $0x280] sm:$0xf]
      %v2717 = vld [vmem:[%s642 + $0x284] sm:$0xf]
      %v2718 = vld [vmem:[%s642 + $0x288] sm:$0xf]
      %v2719 = vld [vmem:[%s642 + $0x28c] sm:$0xf]
      %v2720 = vld [vmem:[%s642 + $0x290] sm:$0xf]
      %v2721 = vld [vmem:[%s642 + $0x294] sm:$0xf]
      %v2722 = vld [vmem:[%s642 + $0x298] sm:$0xf]
      %v2723 = vld [vmem:[%s642 + $0x29c] sm:$0xf]
      %v2724 = vld [vmem:[%s642 + $0x2a0] sm:$0xf]
      %v2725 = vld [vmem:[%s642 + $0x2a4] sm:$0xf]
      %v2726 = vld [vmem:[%s642 + $0x2a8] sm:$0xf]
      %v2727 = vld [vmem:[%s642 + $0x2ac] sm:$0xf]
      %v2728 = vld [vmem:[%s642 + $0x2b0] sm:$0xf]
      %v2729 = vld [vmem:[%s642 + $0x2b4] sm:$0xf]
      %v2730 = vld [vmem:[%s642 + $0x2b8] sm:$0xf]
      %v2731 = vld [vmem:[%s642 + $0x2bc] sm:$0xf]
      %v2732 = vld [vmem:[%s642 + $0x2c0] sm:$0xf]
      %v2733 = vld [vmem:[%s642 + $0x2c4] sm:$0xf]
      %v2734 = vld [vmem:[%s642 + $0x2c8] sm:$0xf]
      %v2735 = vld [vmem:[%s642 + $0x2cc] sm:$0xf]
      %v2736 = vld [vmem:[%s642 + $0x2d0] sm:$0xf]
      %v2737 = vld [vmem:[%s642 + $0x2d4] sm:$0xf]
      %v2738 = vld [vmem:[%s642 + $0x2d8] sm:$0xf]
      %v2739 = vld [vmem:[%s642 + $0x2dc] sm:$0xf]
      %v2740 = vld [vmem:[%s642 + $0x2e0] sm:$0xf]
      %v2741 = vld [vmem:[%s642 + $0x2e4] sm:$0xf]
      %v2742 = vld [vmem:[%s642 + $0x2e8] sm:$0xf]
      %v2743 = vld [vmem:[%s642 + $0x2ec] sm:$0xf]
      %v2744 = vld [vmem:[%s642 + $0x2f0] sm:$0xf]
      %v2745 = vld [vmem:[%s642 + $0x2f4] sm:$0xf]
      %v2746 = vld [vmem:[%s642 + $0x2f8] sm:$0xf]
      %v2747 = vld [vmem:[%s642 + $0x2fc] sm:$0xf]
      %v2748 = vld [vmem:[%s642 + $0x300] sm:$0xf]
      %v2749 = vld [vmem:[%s642 + $0x304] sm:$0xf]
      %v2750 = vld [vmem:[%s642 + $0x308] sm:$0xf]
      %v2751 = vld [vmem:[%s642 + $0x30c] sm:$0xf]
      %v2752 = vld [vmem:[%s642 + $0x310] sm:$0xf]
      %v2753 = vld [vmem:[%s642 + $0x314] sm:$0xf]
      %v2754 = vld [vmem:[%s642 + $0x318] sm:$0xf]
      %v2755 = vld [vmem:[%s642 + $0x31c] sm:$0xf]
      %v2756 = vld [vmem:[%s642 + $0x320] sm:$0xf]
      %v2757 = vld [vmem:[%s642 + $0x324] sm:$0xf]
      %v2758 = vld [vmem:[%s642 + $0x328] sm:$0xf]
      %v2759 = vld [vmem:[%s642 + $0x32c] sm:$0xf]
      %v2760 = vld [vmem:[%s642 + $0x330] sm:$0xf]
      %v2761 = vld [vmem:[%s642 + $0x334] sm:$0xf]
      %v2762 = vld [vmem:[%s642 + $0x338] sm:$0xf]
      %v2763 = vld [vmem:[%s642 + $0x33c] sm:$0xf]
      %v2764 = vld [vmem:[%s642 + $0x340] sm:$0xf]
      %v2765 = vld [vmem:[%s642 + $0x344] sm:$0xf]
      %v2766 = vld [vmem:[%s642 + $0x348] sm:$0xf]
      %v2767 = vld [vmem:[%s642 + $0x34c] sm:$0xf]
      %v2768 = vld [vmem:[%s642 + $0x350] sm:$0xf]
      %v2769 = vld [vmem:[%s642 + $0x354] sm:$0xf]
      %v2770 = vld [vmem:[%s642 + $0x358] sm:$0xf]
      %v2771 = vld [vmem:[%s642 + $0x35c] sm:$0xf]
      %v2772 = vld [vmem:[%s642 + $0x360] sm:$0xf]
      %v2773 = vld [vmem:[%s642 + $0x364] sm:$0xf]
      %v2774 = vld [vmem:[%s642 + $0x368] sm:$0xf]
      %v2775 = vld [vmem:[%s642 + $0x36c] sm:$0xf]
      %v2776 = vld [vmem:[%s642 + $0x370] sm:$0xf]
      %v2777 = vld [vmem:[%s642 + $0x374] sm:$0xf]
      %v2778 = vld [vmem:[%s642 + $0x378] sm:$0xf]
      %v2779 = vld [vmem:[%s642 + $0x37c] sm:$0xf]
      %v2780 = vld [vmem:[%s642 + $0x380] sm:$0xf]
      %v2781 = vld [vmem:[%s642 + $0x384] sm:$0xf]
      %v2782 = vld [vmem:[%s642 + $0x388] sm:$0xf]
      %v2783 = vld [vmem:[%s642 + $0x38c] sm:$0xf]
      %v2784 = vld [vmem:[%s642 + $0x390] sm:$0xf]
      %v2785 = vld [vmem:[%s642 + $0x394] sm:$0xf]
      %v2786 = vld [vmem:[%s642 + $0x398] sm:$0xf]
      %v2787 = vld [vmem:[%s642 + $0x39c] sm:$0xf]
      %v2788 = vld [vmem:[%s642 + $0x3a0] sm:$0xf]
      %v2789 = vld [vmem:[%s642 + $0x3a4] sm:$0xf]
      %v2790 = vld [vmem:[%s642 + $0x3a8] sm:$0xf]
      %v2791 = vld [vmem:[%s642 + $0x3ac] sm:$0xf]
      %v2792 = vld [vmem:[%s642 + $0x3b0] sm:$0xf]
      %v2793 = vld [vmem:[%s642 + $0x3b4] sm:$0xf]
      %v2794 = vld [vmem:[%s642 + $0x3b8] sm:$0xf]
      %v2795 = vld [vmem:[%s642 + $0x3bc] sm:$0xf]
      %v2796 = vld [vmem:[%s642 + $0x3c0] sm:$0xf]
      %v2797 = vld [vmem:[%s642 + $0x3c4] sm:$0xf]
      %v2798 = vld [vmem:[%s642 + $0x3c8] sm:$0xf]
      %v2799 = vld [vmem:[%s642 + $0x3cc] sm:$0xf]
      %v2800 = vld [vmem:[%s642 + $0x3d0] sm:$0xf]
      %v2801 = vld [vmem:[%s642 + $0x3d4] sm:$0xf]
      %v2802 = vld [vmem:[%s642 + $0x3d8] sm:$0xf]
      %v2803 = vld [vmem:[%s642 + $0x3dc] sm:$0xf]
      %v2804 = vld [vmem:[%s642 + $0x3e0] sm:$0xf]
      %v2805 = vld [vmem:[%s642 + $0x3e4] sm:$0xf]
      %v2806 = vld [vmem:[%s642 + $0x3e8] sm:$0xf]
      %v2807 = vld [vmem:[%s642 + $0x3ec] sm:$0xf]
      %v2808 = vld [vmem:[%s642 + $0x3f0] sm:$0xf]
      %v2809 = vld [vmem:[%s642 + $0x3f4] sm:$0xf]
      %v2810 = vld [vmem:[%s642 + $0x3f8] sm:$0xf]
      %v2811 = vld [vmem:[%s642 + $0x3fc] sm:$0xf]
      %v2812 = vld [vmem:[%s645] sm:$0x1]
      %v2814 = vlaneseq
      %v2815 = vshrl.u32 %v2814, 7
      %v2816 = vsub.s32 0, %v2815
      %v2817 = vrot.slane %v2812, %v2816
      %v3075 = vunpack.c.l.b16 %v2556
      %v3076 = vunpack.c.l.b16 %v2557
      %v3077 = vunpack.c.l.b16 %v2558
      %v3078 = vunpack.c.l.b16 %v2559
      %v3079 = vunpack.c.l.b16 %v2560
      %v3080 = vunpack.c.l.b16 %v2561
      %v3081 = vunpack.c.l.b16 %v2562
      %v3082 = vunpack.c.l.b16 %v2563
      %v3083 = vunpack.c.l.b16 %v2564
      %v3084 = vunpack.c.l.b16 %v2565
      %v3085 = vunpack.c.l.b16 %v2566
      %v3086 = vunpack.c.l.b16 %v2567
      %v3087 = vunpack.c.l.b16 %v2568
      %v3088 = vunpack.c.l.b16 %v2569
      %v3089 = vunpack.c.l.b16 %v2570
      %v3090 = vunpack.c.l.b16 %v2571
      %v3091 = vunpack.c.l.b16 %v2572
      %v3092 = vunpack.c.l.b16 %v2573
      %v3093 = vunpack.c.l.b16 %v2574
      %v3094 = vunpack.c.l.b16 %v2575
      %v3095 = vunpack.c.l.b16 %v2576
      %v3096 = vunpack.c.l.b16 %v2577
      %v3097 = vunpack.c.l.b16 %v2578
      %v3098 = vunpack.c.l.b16 %v2579
      %v3099 = vunpack.c.l.b16 %v2580
      %v3100 = vunpack.c.l.b16 %v2581
      %v3101 = vunpack.c.l.b16 %v2582
      %v3102 = vunpack.c.l.b16 %v2583
      %v3103 = vunpack.c.l.b16 %v2584
      %v3104 = vunpack.c.l.b16 %v2585
      %v3105 = vunpack.c.l.b16 %v2586
      %v3106 = vunpack.c.l.b16 %v2587
      %v3107 = vunpack.c.l.b16 %v2588
      %v3108 = vunpack.c.l.b16 %v2589
      %v3109 = vunpack.c.l.b16 %v2590
      %v3110 = vunpack.c.l.b16 %v2591
      %v3111 = vunpack.c.l.b16 %v2592
      %v3112 = vunpack.c.l.b16 %v2593
      %v3113 = vunpack.c.l.b16 %v2594
      %v3114 = vunpack.c.l.b16 %v2595
      %v3115 = vunpack.c.l.b16 %v2596
      %v3116 = vunpack.c.l.b16 %v2597
      %v3117 = vunpack.c.l.b16 %v2598
      %v3118 = vunpack.c.l.b16 %v2599
      %v3119 = vunpack.c.l.b16 %v2600
      %v3120 = vunpack.c.l.b16 %v2601
      %v3121 = vunpack.c.l.b16 %v2602
      %v3122 = vunpack.c.l.b16 %v2603
      %v3123 = vunpack.c.l.b16 %v2604
      %v3124 = vunpack.c.l.b16 %v2605
      %v3125 = vunpack.c.l.b16 %v2606
      %v3126 = vunpack.c.l.b16 %v2607
      %v3127 = vunpack.c.l.b16 %v2608
      %v3128 = vunpack.c.l.b16 %v2609
      %v3129 = vunpack.c.l.b16 %v2610
      %v3130 = vunpack.c.l.b16 %v2611
      %v3131 = vunpack.c.l.b16 %v2612
      %v3132 = vunpack.c.l.b16 %v2613
      %v3133 = vunpack.c.l.b16 %v2614
      %v3134 = vunpack.c.l.b16 %v2615
      %v3135 = vunpack.c.l.b16 %v2616
      %v3136 = vunpack.c.l.b16 %v2617
      %v3137 = vunpack.c.l.b16 %v2618
      %v3138 = vunpack.c.l.b16 %v2619
      %v3139 = vunpack.c.l.b16 %v2620
      %v3140 = vunpack.c.l.b16 %v2621
      %v3141 = vunpack.c.l.b16 %v2622
      %v3142 = vunpack.c.l.b16 %v2623
      %v3143 = vunpack.c.l.b16 %v2624
      %v3144 = vunpack.c.l.b16 %v2625
      %v3145 = vunpack.c.l.b16 %v2626
      %v3146 = vunpack.c.l.b16 %v2627
      %v3147 = vunpack.c.l.b16 %v2628
      %v3148 = vunpack.c.l.b16 %v2629
      %v3149 = vunpack.c.l.b16 %v2630
      %v3150 = vunpack.c.l.b16 %v2631
      %v3151 = vunpack.c.l.b16 %v2632
      %v3152 = vunpack.c.l.b16 %v2633
      %v3153 = vunpack.c.l.b16 %v2634
      %v3154 = vunpack.c.l.b16 %v2635
      %v3155 = vunpack.c.l.b16 %v2636
      %v3156 = vunpack.c.l.b16 %v2637
      %v3157 = vunpack.c.l.b16 %v2638
      %v3158 = vunpack.c.l.b16 %v2639
      %v3159 = vunpack.c.l.b16 %v2640
      %v3160 = vunpack.c.l.b16 %v2641
      %v3161 = vunpack.c.l.b16 %v2642
      %v3162 = vunpack.c.l.b16 %v2643
      %v3163 = vunpack.c.l.b16 %v2644
      %v3164 = vunpack.c.l.b16 %v2645
      %v3165 = vunpack.c.l.b16 %v2646
      %v3166 = vunpack.c.l.b16 %v2647
      %v3167 = vunpack.c.l.b16 %v2648
      %v3168 = vunpack.c.l.b16 %v2649
      %v3169 = vunpack.c.l.b16 %v2650
      %v3170 = vunpack.c.l.b16 %v2651
      %v3171 = vunpack.c.l.b16 %v2652
      %v3172 = vunpack.c.l.b16 %v2653
      %v3173 = vunpack.c.l.b16 %v2654
      %v3174 = vunpack.c.l.b16 %v2655
      %v3175 = vunpack.c.l.b16 %v2656
      %v3176 = vunpack.c.l.b16 %v2657
      %v3177 = vunpack.c.l.b16 %v2658
      %v3178 = vunpack.c.l.b16 %v2659
      %v3179 = vunpack.c.l.b16 %v2660
      %v3180 = vunpack.c.l.b16 %v2661
      %v3181 = vunpack.c.l.b16 %v2662
      %v3182 = vunpack.c.l.b16 %v2663
      %v3183 = vunpack.c.l.b16 %v2664
      %v3184 = vunpack.c.l.b16 %v2665
      %v3185 = vunpack.c.l.b16 %v2666
      %v3186 = vunpack.c.l.b16 %v2667
      %v3187 = vunpack.c.l.b16 %v2668
      %v3188 = vunpack.c.l.b16 %v2669
      %v3189 = vunpack.c.l.b16 %v2670
      %v3190 = vunpack.c.l.b16 %v2671
      %v3191 = vunpack.c.l.b16 %v2672
      %v3192 = vunpack.c.l.b16 %v2673
      %v3193 = vunpack.c.l.b16 %v2674
      %v3194 = vunpack.c.l.b16 %v2675
      %v3195 = vunpack.c.l.b16 %v2676
      %v3196 = vunpack.c.l.b16 %v2677
      %v3197 = vunpack.c.l.b16 %v2678
      %v3198 = vunpack.c.l.b16 %v2679
      %v3199 = vunpack.c.l.b16 %v2680
      %v3200 = vunpack.c.l.b16 %v2681
      %v3201 = vunpack.c.l.b16 %v2682
      %v3202 = vunpack.c.l.b16 %v2683
      %v3203 = vunpack.c.l.b16 %v2684
      %v3204 = vunpack.c.l.b16 %v2685
      %v3205 = vunpack.c.l.b16 %v2686
      %v3206 = vunpack.c.l.b16 %v2687
      %v3207 = vunpack.c.l.b16 %v2688
      %v3208 = vunpack.c.l.b16 %v2689
      %v3209 = vunpack.c.l.b16 %v2690
      %v3210 = vunpack.c.l.b16 %v2691
      %v3211 = vunpack.c.l.b16 %v2692
      %v3212 = vunpack.c.l.b16 %v2693
      %v3213 = vunpack.c.l.b16 %v2694
      %v3214 = vunpack.c.l.b16 %v2695
      %v3215 = vunpack.c.l.b16 %v2696
      %v3216 = vunpack.c.l.b16 %v2697
      %v3217 = vunpack.c.l.b16 %v2698
      %v3218 = vunpack.c.l.b16 %v2699
      %v3219 = vunpack.c.l.b16 %v2700
      %v3220 = vunpack.c.l.b16 %v2701
      %v3221 = vunpack.c.l.b16 %v2702
      %v3222 = vunpack.c.l.b16 %v2703
      %v3223 = vunpack.c.l.b16 %v2704
      %v3224 = vunpack.c.l.b16 %v2705
      %v3225 = vunpack.c.l.b16 %v2706
      %v3226 = vunpack.c.l.b16 %v2707
      %v3227 = vunpack.c.l.b16 %v2708
      %v3228 = vunpack.c.l.b16 %v2709
      %v3229 = vunpack.c.l.b16 %v2710
      %v3230 = vunpack.c.l.b16 %v2711
      %v3231 = vunpack.c.l.b16 %v2712
      %v3232 = vunpack.c.l.b16 %v2713
      %v3233 = vunpack.c.l.b16 %v2714
      %v3234 = vunpack.c.l.b16 %v2715
      %v3235 = vunpack.c.l.b16 %v2716
      %v3236 = vunpack.c.l.b16 %v2717
      %v3237 = vunpack.c.l.b16 %v2718
      %v3238 = vunpack.c.l.b16 %v2719
      %v3239 = vunpack.c.l.b16 %v2720
      %v3240 = vunpack.c.l.b16 %v2721
      %v3241 = vunpack.c.l.b16 %v2722
      %v3242 = vunpack.c.l.b16 %v2723
      %v3243 = vunpack.c.l.b16 %v2724
      %v3244 = vunpack.c.l.b16 %v2725
      %v3245 = vunpack.c.l.b16 %v2726
      %v3246 = vunpack.c.l.b16 %v2727
      %v3247 = vunpack.c.l.b16 %v2728
      %v3248 = vunpack.c.l.b16 %v2729
      %v3249 = vunpack.c.l.b16 %v2730
      %v3250 = vunpack.c.l.b16 %v2731
      %v3251 = vunpack.c.l.b16 %v2732
      %v3252 = vunpack.c.l.b16 %v2733
      %v3253 = vunpack.c.l.b16 %v2734
      %v3254 = vunpack.c.l.b16 %v2735
      %v3255 = vunpack.c.l.b16 %v2736
      %v3256 = vunpack.c.l.b16 %v2737
      %v3257 = vunpack.c.l.b16 %v2738
      %v3258 = vunpack.c.l.b16 %v2739
      %v3259 = vunpack.c.l.b16 %v2740
      %v3260 = vunpack.c.l.b16 %v2741
      %v3261 = vunpack.c.l.b16 %v2742
      %v3262 = vunpack.c.l.b16 %v2743
      %v3263 = vunpack.c.l.b16 %v2744
      %v3264 = vunpack.c.l.b16 %v2745
      %v3265 = vunpack.c.l.b16 %v2746
      %v3266 = vunpack.c.l.b16 %v2747
      %v3267 = vunpack.c.l.b16 %v2748
      %v3268 = vunpack.c.l.b16 %v2749
      %v3269 = vunpack.c.l.b16 %v2750
      %v3270 = vunpack.c.l.b16 %v2751
      %v3271 = vunpack.c.l.b16 %v2752
      %v3272 = vunpack.c.l.b16 %v2753
      %v3273 = vunpack.c.l.b16 %v2754
      %v3274 = vunpack.c.l.b16 %v2755
      %v3275 = vunpack.c.l.b16 %v2756
      %v3276 = vunpack.c.l.b16 %v2757
      %v3277 = vunpack.c.l.b16 %v2758
      %v3278 = vunpack.c.l.b16 %v2759
      %v3279 = vunpack.c.l.b16 %v2760
      %v3280 = vunpack.c.l.b16 %v2761
      %v3281 = vunpack.c.l.b16 %v2762
      %v3282 = vunpack.c.l.b16 %v2763
      %v3283 = vunpack.c.l.b16 %v2764
      %v3284 = vunpack.c.l.b16 %v2765
      %v3285 = vunpack.c.l.b16 %v2766
      %v3286 = vunpack.c.l.b16 %v2767
      %v3287 = vunpack.c.l.b16 %v2768
      %v3288 = vunpack.c.l.b16 %v2769
      %v3289 = vunpack.c.l.b16 %v2770
      %v3290 = vunpack.c.l.b16 %v2771
      %v3291 = vunpack.c.l.b16 %v2772
      %v3292 = vunpack.c.l.b16 %v2773
      %v3293 = vunpack.c.l.b16 %v2774
      %v3294 = vunpack.c.l.b16 %v2775
      %v3295 = vunpack.c.l.b16 %v2776
      %v3296 = vunpack.c.l.b16 %v2777
      %v3297 = vunpack.c.l.b16 %v2778
      %v3298 = vunpack.c.l.b16 %v2779
      %v3299 = vunpack.c.l.b16 %v2780
      %v3300 = vunpack.c.l.b16 %v2781
      %v3301 = vunpack.c.l.b16 %v2782
      %v3302 = vunpack.c.l.b16 %v2783
      %v3303 = vunpack.c.l.b16 %v2784
      %v3304 = vunpack.c.l.b16 %v2785
      %v3305 = vunpack.c.l.b16 %v2786
      %v3306 = vunpack.c.l.b16 %v2787
      %v3307 = vunpack.c.l.b16 %v2788
      %v3308 = vunpack.c.l.b16 %v2789
      %v3309 = vunpack.c.l.b16 %v2790
      %v3310 = vunpack.c.l.b16 %v2791
      %v3311 = vunpack.c.l.b16 %v2792
      %v3312 = vunpack.c.l.b16 %v2793
      %v3313 = vunpack.c.l.b16 %v2794
      %v3314 = vunpack.c.l.b16 %v2795
      %v3315 = vunpack.c.l.b16 %v2796
      %v3316 = vunpack.c.l.b16 %v2797
      %v3317 = vunpack.c.l.b16 %v2798
      %v3318 = vunpack.c.l.b16 %v2799
      %v3319 = vunpack.c.l.b16 %v2800
      %v3320 = vunpack.c.l.b16 %v2801
      %v3321 = vunpack.c.l.b16 %v2802
      %v3322 = vunpack.c.l.b16 %v2803
      %v3323 = vunpack.c.l.b16 %v2804
      %v3324 = vunpack.c.l.b16 %v2805
      %v3325 = vunpack.c.l.b16 %v2806
      %v3326 = vunpack.c.l.b16 %v2807
      %v3327 = vunpack.c.l.b16 %v2808
      %v3328 = vunpack.c.l.b16 %v2809
      %v3329 = vunpack.c.l.b16 %v2810
      %v3330 = vunpack.c.l.b16 %v2811
      %v3331 = vpack.c.b16 %v3076, %v3075
      %v3332 = vpack.c.b16 %v3078, %v3077
      %v3333 = vpack.c.b16 %v3080, %v3079
      %v3334 = vpack.c.b16 %v3082, %v3081
      %v3335 = vpack.c.b16 %v3084, %v3083
      %v3336 = vpack.c.b16 %v3086, %v3085
      %v3337 = vpack.c.b16 %v3088, %v3087
      %v3338 = vpack.c.b16 %v3090, %v3089
      %v3339 = vpack.c.b16 %v3092, %v3091
      %v3340 = vpack.c.b16 %v3094, %v3093
      %v3341 = vpack.c.b16 %v3096, %v3095
      %v3342 = vpack.c.b16 %v3098, %v3097
      %v3343 = vpack.c.b16 %v3100, %v3099
      %v3344 = vpack.c.b16 %v3102, %v3101
      %v3345 = vpack.c.b16 %v3104, %v3103
      %v3346 = vpack.c.b16 %v3106, %v3105
      %v3347 = vpack.c.b16 %v3108, %v3107
      %v3348 = vpack.c.b16 %v3110, %v3109
      %v3349 = vpack.c.b16 %v3112, %v3111
      %v3350 = vpack.c.b16 %v3114, %v3113
      %v3351 = vpack.c.b16 %v3116, %v3115
      %v3352 = vpack.c.b16 %v3118, %v3117
      %v3353 = vpack.c.b16 %v3120, %v3119
      %v3354 = vpack.c.b16 %v3122, %v3121
      %v3355 = vpack.c.b16 %v3124, %v3123
      %v3356 = vpack.c.b16 %v3126, %v3125
      %v3357 = vpack.c.b16 %v3128, %v3127
      %v3358 = vpack.c.b16 %v3130, %v3129
      %v3359 = vpack.c.b16 %v3132, %v3131
      %v3360 = vpack.c.b16 %v3134, %v3133
      %v3361 = vpack.c.b16 %v3136, %v3135
      %v3362 = vpack.c.b16 %v3138, %v3137
      %v3363 = vpack.c.b16 %v3140, %v3139
      %v3364 = vpack.c.b16 %v3142, %v3141
      %v3365 = vpack.c.b16 %v3144, %v3143
      %v3366 = vpack.c.b16 %v3146, %v3145
      %v3367 = vpack.c.b16 %v3148, %v3147
      %v3368 = vpack.c.b16 %v3150, %v3149
      %v3369 = vpack.c.b16 %v3152, %v3151
      %v3370 = vpack.c.b16 %v3154, %v3153
      %v3371 = vpack.c.b16 %v3156, %v3155
      %v3372 = vpack.c.b16 %v3158, %v3157
      %v3373 = vpack.c.b16 %v3160, %v3159
      %v3374 = vpack.c.b16 %v3162, %v3161
      %v3375 = vpack.c.b16 %v3164, %v3163
      %v3376 = vpack.c.b16 %v3166, %v3165
      %v3377 = vpack.c.b16 %v3168, %v3167
      %v3378 = vpack.c.b16 %v3170, %v3169
      %v3379 = vpack.c.b16 %v3172, %v3171
      %v3380 = vpack.c.b16 %v3174, %v3173
      %v3381 = vpack.c.b16 %v3176, %v3175
      %v3382 = vpack.c.b16 %v3178, %v3177
      %v3383 = vpack.c.b16 %v3180, %v3179
      %v3384 = vpack.c.b16 %v3182, %v3181
      %v3385 = vpack.c.b16 %v3184, %v3183
      %v3386 = vpack.c.b16 %v3186, %v3185
      %v3387 = vpack.c.b16 %v3188, %v3187
      %v3388 = vpack.c.b16 %v3190, %v3189
      %v3389 = vpack.c.b16 %v3192, %v3191
      %v3390 = vpack.c.b16 %v3194, %v3193
      %v3391 = vpack.c.b16 %v3196, %v3195
      %v3392 = vpack.c.b16 %v3198, %v3197
      %v3393 = vpack.c.b16 %v3200, %v3199
      %v3394 = vpack.c.b16 %v3202, %v3201
      %v3395 = vpack.c.b16 %v3204, %v3203
      %v3396 = vpack.c.b16 %v3206, %v3205
      %v3397 = vpack.c.b16 %v3208, %v3207
      %v3398 = vpack.c.b16 %v3210, %v3209
      %v3399 = vpack.c.b16 %v3212, %v3211
      %v3400 = vpack.c.b16 %v3214, %v3213
      %v3401 = vpack.c.b16 %v3216, %v3215
      %v3402 = vpack.c.b16 %v3218, %v3217
      %v3403 = vpack.c.b16 %v3220, %v3219
      %v3404 = vpack.c.b16 %v3222, %v3221
      %v3405 = vpack.c.b16 %v3224, %v3223
      %v3406 = vpack.c.b16 %v3226, %v3225
      %v3407 = vpack.c.b16 %v3228, %v3227
      %v3408 = vpack.c.b16 %v3230, %v3229
      %v3409 = vpack.c.b16 %v3232, %v3231
      %v3410 = vpack.c.b16 %v3234, %v3233
      %v3411 = vpack.c.b16 %v3236, %v3235
      %v3412 = vpack.c.b16 %v3238, %v3237
      %v3413 = vpack.c.b16 %v3240, %v3239
      %v3414 = vpack.c.b16 %v3242, %v3241
      %v3415 = vpack.c.b16 %v3244, %v3243
      %v3416 = vpack.c.b16 %v3246, %v3245
      %v3417 = vpack.c.b16 %v3248, %v3247
      %v3418 = vpack.c.b16 %v3250, %v3249
      %v3419 = vpack.c.b16 %v3252, %v3251
      %v3420 = vpack.c.b16 %v3254, %v3253
      %v3421 = vpack.c.b16 %v3256, %v3255
      %v3422 = vpack.c.b16 %v3258, %v3257
      %v3423 = vpack.c.b16 %v3260, %v3259
      %v3424 = vpack.c.b16 %v3262, %v3261
      %v3425 = vpack.c.b16 %v3264, %v3263
      %v3426 = vpack.c.b16 %v3266, %v3265
      %v3427 = vpack.c.b16 %v3268, %v3267
      %v3428 = vpack.c.b16 %v3270, %v3269
      %v3429 = vpack.c.b16 %v3272, %v3271
      %v3430 = vpack.c.b16 %v3274, %v3273
      %v3431 = vpack.c.b16 %v3276, %v3275
      %v3432 = vpack.c.b16 %v3278, %v3277
      %v3433 = vpack.c.b16 %v3280, %v3279
      %v3434 = vpack.c.b16 %v3282, %v3281
      %v3435 = vpack.c.b16 %v3284, %v3283
      %v3436 = vpack.c.b16 %v3286, %v3285
      %v3437 = vpack.c.b16 %v3288, %v3287
      %v3438 = vpack.c.b16 %v3290, %v3289
      %v3439 = vpack.c.b16 %v3292, %v3291
      %v3440 = vpack.c.b16 %v3294, %v3293
      %v3441 = vpack.c.b16 %v3296, %v3295
      %v3442 = vpack.c.b16 %v3298, %v3297
      %v3443 = vpack.c.b16 %v3300, %v3299
      %v3444 = vpack.c.b16 %v3302, %v3301
      %v3445 = vpack.c.b16 %v3304, %v3303
      %v3446 = vpack.c.b16 %v3306, %v3305
      %v3447 = vpack.c.b16 %v3308, %v3307
      %v3448 = vpack.c.b16 %v3310, %v3309
      %v3449 = vpack.c.b16 %v3312, %v3311
      %v3450 = vpack.c.b16 %v3314, %v3313
      %v3451 = vpack.c.b16 %v3316, %v3315
      %v3452 = vpack.c.b16 %v3318, %v3317
      %v3453 = vpack.c.b16 %v3320, %v3319
      %v3454 = vpack.c.b16 %v3322, %v3321
      %v3455 = vpack.c.b16 %v3324, %v3323
      %v3456 = vpack.c.b16 %v3326, %v3325
      %v3457 = vpack.c.b16 %v3328, %v3327
      %v3458 = vpack.c.b16 %v3330, %v3329
      %3587 = vmatprep.subr.bf16.mxu0 0
      %3588 = vmatpush1.bf16.msra.mxu0 %v3331
      %3589 = vmatprep.subr.bf16.mxu0 0
      %3590 = vmatpush1.bf16.msra.mxu0 %v3332
      %3591 = vmatprep.subr.bf16.mxu0 0
      %3592 = vmatpush1.bf16.msra.mxu0 %v3333
      %3593 = vmatprep.subr.bf16.mxu0 0
      %3594 = vmatpush1.bf16.msra.mxu0 %v3334
      %3595 = vmatprep.subr.bf16.mxu0 0
      %3596 = vmatpush1.bf16.msra.mxu0 %v3335
      %3597 = vmatprep.subr.bf16.mxu0 0
      %3598 = vmatpush1.bf16.msra.mxu0 %v3336
      %3599 = vmatprep.subr.bf16.mxu0 0
      %3600 = vmatpush1.bf16.msra.mxu0 %v3337
      %3601 = vmatprep.subr.bf16.mxu0 0
      %3602 = vmatpush1.bf16.msra.mxu0 %v3338
      %3603 = vmatprep.subr.bf16.mxu0 0
      %3604 = vmatpush1.bf16.msra.mxu0 %v3339
      %3605 = vmatprep.subr.bf16.mxu0 0
      %3606 = vmatpush1.bf16.msra.mxu0 %v3340
      %3607 = vmatprep.subr.bf16.mxu0 0
      %3608 = vmatpush1.bf16.msra.mxu0 %v3341
      %3609 = vmatprep.subr.bf16.mxu0 0
      %3610 = vmatpush1.bf16.msra.mxu0 %v3342
      %3611 = vmatprep.subr.bf16.mxu0 0
      %3612 = vmatpush1.bf16.msra.mxu0 %v3343
      %3613 = vmatprep.subr.bf16.mxu0 0
      %3614 = vmatpush1.bf16.msra.mxu0 %v3344
      %3615 = vmatprep.subr.bf16.mxu0 0
      %3616 = vmatpush1.bf16.msra.mxu0 %v3345
      %3617 = vmatprep.subr.bf16.mxu0 0
      %3618 = vmatpush1.bf16.msra.mxu0 %v3346
      %3619 = vmatprep.mubr.bf16.mxu0 %v2525
      %3620 = vmatmul.mubr.bf16.gmra.mrb[0].mxu0 %v2524
      %v3621 = vpop.f32.mrb[0].mxu0
      %v3622 = vadd.f32 %v2817, %v3621
      %v3623 = vpop.f32.mrb[0].mxu0
      %v3624 = vpop.f32.mrb[0].mxu0
      %v3625 = vadd.f32 %v2817, %v3624
      %v3626 = vpop.f32.mrb[0].mxu0
      %3627 = vmatprep.mubr.bf16.mxu0 %v2541
      %3628 = vmatmul.mubr.bf16.gmra.mrb[0].mxu0 %v2540
      %v3629 = vpop.f32.mrb[0].mxu0
      %v3630 = vadd.f32 %v2817, %v3629
      %v3631 = vpop.f32.mrb[0].mxu0
      %v3632 = vpop.f32.mrb[0].mxu0
      %v3633 = vadd.f32 %v2817, %v3632
      %v3634 = vpop.f32.mrb[0].mxu0
      %3635 = vdwg.mxu0
      %3636 = vmatprep.subr.bf16.mxu0 0
      %3637 = vmatpush1.bf16.msra.mxu0 %v3347
      %3638 = vmatprep.subr.bf16.mxu0 0
      %3639 = vmatpush1.bf16.msra.mxu0 %v3348
      %3640 = vmatprep.subr.bf16.mxu0 0
      %3641 = vmatpush1.bf16.msra.mxu0 %v3349
      %3642 = vmatprep.subr.bf16.mxu0 0
      %3643 = vmatpush1.bf16.msra.mxu0 %v3350
      %3644 = vmatprep.subr.bf16.mxu0 0
      %3645 = vmatpush1.bf16.msra.mxu0 %v3351
      %3646 = vmatprep.subr.bf16.mxu0 0
      %3647 = vmatpush1.bf16.msra.mxu0 %v3352
      %3648 = vmatprep.subr.bf16.mxu0 0
      %3649 = vmatpush1.bf16.msra.mxu0 %v3353
      %3650 = vmatprep.subr.bf16.mxu0 0
      %3651 = vmatpush1.bf16.msra.mxu0 %v3354
      %3652 = vmatprep.subr.bf16.mxu0 0
      %3653 = vmatpush1.bf16.msra.mxu0 %v3355
      %3654 = vmatprep.subr.bf16.mxu0 0
      %3655 = vmatpush1.bf16.msra.mxu0 %v3356
      %3656 = vmatprep.subr.bf16.mxu0 0
      %3657 = vmatpush1.bf16.msra.mxu0 %v3357
      %3658 = vmatprep.subr.bf16.mxu0 0
      %3659 = vmatpush1.bf16.msra.mxu0 %v3358
      %3660 = vmatprep.subr.bf16.mxu0 0
      %3661 = vmatpush1.bf16.msra.mxu0 %v3359
      %3662 = vmatprep.subr.bf16.mxu0 0
      %3663 = vmatpush1.bf16.msra.mxu0 %v3360
      %3664 = vmatprep.subr.bf16.mxu0 0
      %3665 = vmatpush1.bf16.msra.mxu0 %v3361
      %3666 = vmatprep.subr.bf16.mxu0 0
      %3667 = vmatpush1.bf16.msra.mxu0 %v3362
      %3668 = vmatprep.mubr.bf16.mxu0 %v2527
      %3669 = vmatmul.mubr.bf16.gmra.mrb[0].mxu0 %v2526
      %v3670 = vpop.f32.mrb[0].mxu0
      %v3671 = vadd.f32 %v3622, %v3670
      %v3672 = vpop.f32.mrb[0].mxu0
      %v3673 = vpop.f32.mrb[0].mxu0
      %v3674 = vadd.f32 %v3625, %v3673
      %v3675 = vpop.f32.mrb[0].mxu0
      %3676 = vmatprep.mubr.bf16.mxu0 %v2543
      %3677 = vmatmul.mubr.bf16.gmra.mrb[0].mxu0 %v2542
      %v3678 = vpop.f32.mrb[0].mxu0
      %v3679 = vadd.f32 %v3630, %v3678
      %v3680 = vpop.f32.mrb[0].mxu0
      %v3681 = vpop.f32.mrb[0].mxu0
      %v3682 = vadd.f32 %v3633, %v3681
      %v3683 = vpop.f32.mrb[0].mxu0
      %3684 = vdwg.mxu0
      %3685 = vmatprep.subr.bf16.mxu0 0
      %3686 = vmatpush1.bf16.msra.mxu0 %v3363
      %3687 = vmatprep.subr.bf16.mxu0 0
      %3688 = vmatpush1.bf16.msra.mxu0 %v3364
      %3689 = vmatprep.subr.bf16.mxu0 0
      %3690 = vmatpush1.bf16.msra.mxu0 %v3365
      %3691 = vmatprep.subr.bf16.mxu0 0
      %3692 = vmatpush1.bf16.msra.mxu0 %v3366
      %3693 = vmatprep.subr.bf16.mxu0 0
      %3694 = vmatpush1.bf16.msra.mxu0 %v3367
      %3695 = vmatprep.subr.bf16.mxu0 0
      %3696 = vmatpush1.bf16.msra.mxu0 %v3368
      %3697 = vmatprep.subr.bf16.mxu0 0
      %3698 = vmatpush1.bf16.msra.mxu0 %v3369
      %3699 = vmatprep.subr.bf16.mxu0 0
      %3700 = vmatpush1.bf16.msra.mxu0 %v3370
      %3701 = vmatprep.subr.bf16.mxu0 0
      %3702 = vmatpush1.bf16.msra.mxu0 %v3371
      %3703 = vmatprep.subr.bf16.mxu0 0
      %3704 = vmatpush1.bf16.msra.mxu0 %v3372
      %3705 = vmatprep.subr.bf16.mxu0 0
      %3706 = vmatpush1.bf16.msra.mxu0 %v3373
      %3707 = vmatprep.subr.bf16.mxu0 0
      %3708 = vmatpush1.bf16.msra.mxu0 %v3374
      %3709 = vmatprep.subr.bf16.mxu0 0
      %3710 = vmatpush1.bf16.msra.mxu0 %v3375
      %3711 = vmatprep.subr.bf16.mxu0 0
      %3712 = vmatpush1.bf16.msra.mxu0 %v3376
      %3713 = vmatprep.subr.bf16.mxu0 0
      %3714 = vmatpush1.bf16.msra.mxu0 %v3377
      %3715 = vmatprep.subr.bf16.mxu0 0
      %3716 = vmatpush1.bf16.msra.mxu0 %v3378
      %3717 = vmatprep.mubr.bf16.mxu0 %v2529
      %3718 = vmatmul.mubr.bf16.gmra.mrb[0].mxu0 %v2528
      %v3719 = vpop.f32.mrb[0].mxu0
      %v3720 = vadd.f32 %v3671, %v3719
      %v3721 = vpop.f32.mrb[0].mxu0
      %v3722 = vpop.f32.mrb[0].mxu0
      %v3723 = vadd.f32 %v3674, %v3722
      %v3724 = vpop.f32.mrb[0].mxu0
      %3725 = vmatprep.mubr.bf16.mxu0 %v2545
      %3726 = vmatmul.mubr.bf16.gmra.mrb[0].mxu0 %v2544
      %v3727 = vpop.f32.mrb[0].mxu0
      %v3728 = vadd.f32 %v3679, %v3727
      %v3729 = vpop.f32.mrb[0].mxu0
      %v3730 = vpop.f32.mrb[0].mxu0
      %v3731 = vadd.f32 %v3682, %v3730
      %v3732 = vpop.f32.mrb[0].mxu0
      %3733 = vdwg.mxu0
      %3734 = vmatprep.subr.bf16.mxu0 0
      %3735 = vmatpush1.bf16.msra.mxu0 %v3379
      %3736 = vmatprep.subr.bf16.mxu0 0
      %3737 = vmatpush1.bf16.msra.mxu0 %v3380
      %3738 = vmatprep.subr.bf16.mxu0 0
      %3739 = vmatpush1.bf16.msra.mxu0 %v3381
      %3740 = vmatprep.subr.bf16.mxu0 0
      %3741 = vmatpush1.bf16.msra.mxu0 %v3382
      %3742 = vmatprep.subr.bf16.mxu0 0
      %3743 = vmatpush1.bf16.msra.mxu0 %v3383
      %3744 = vmatprep.subr.bf16.mxu0 0
      %3745 = vmatpush1.bf16.msra.mxu0 %v3384
      %3746 = vmatprep.subr.bf16.mxu0 0
      %3747 = vmatpush1.bf16.msra.mxu0 %v3385
      %3748 = vmatprep.subr.bf16.mxu0 0
      %3749 = vmatpush1.bf16.msra.mxu0 %v3386
      %3750 = vmatprep.subr.bf16.mxu0 0
      %3751 = vmatpush1.bf16.msra.mxu0 %v3387
      %3752 = vmatprep.subr.bf16.mxu0 0
      %3753 = vmatpush1.bf16.msra.mxu0 %v3388
      %3754 = vmatprep.subr.bf16.mxu0 0
      %3755 = vmatpush1.bf16.msra.mxu0 %v3389
      %3756 = vmatprep.subr.bf16.mxu0 0
      %3757 = vmatpush1.bf16.msra.mxu0 %v3390
      %3758 = vmatprep.subr.bf16.mxu0 0
      %3759 = vmatpush1.bf16.msra.mxu0 %v3391
      %3760 = vmatprep.subr.bf16.mxu0 0
      %3761 = vmatpush1.bf16.msra.mxu0 %v3392
      %3762 = vmatprep.subr.bf16.mxu0 0
      %3763 = vmatpush1.bf16.msra.mxu0 %v3393
      %3764 = vmatprep.subr.bf16.mxu0 0
      %3765 = vmatpush1.bf16.msra.mxu0 %v3394
      %3766 = vmatprep.mubr.bf16.mxu0 %v2531
      %3767 = vmatmul.mubr.bf16.gmra.mrb[0].mxu0 %v2530
      %v3768 = vpop.f32.mrb[0].mxu0
      %v3769 = vadd.f32 %v3720, %v3768
      %v3770 = vpop.f32.mrb[0].mxu0
      %v3771 = vpop.f32.mrb[0].mxu0
      %v3772 = vadd.f32 %v3723, %v3771
      %v3773 = vpop.f32.mrb[0].mxu0
      %3774 = vmatprep.mubr.bf16.mxu0 %v2547
      %3775 = vmatmul.mubr.bf16.gmra.mrb[0].mxu0 %v2546
      %v3776 = vpop.f32.mrb[0].mxu0
      %v3777 = vadd.f32 %v3728, %v3776
      %v3778 = vpop.f32.mrb[0].mxu0
      %v3779 = vpop.f32.mrb[0].mxu0
      %v3780 = vadd.f32 %v3731, %v3779
      %v3781 = vpop.f32.mrb[0].mxu0
      %3782 = vdwg.mxu0
      %3783 = vmatprep.subr.bf16.mxu0 0
      %3784 = vmatpush1.bf16.msra.mxu0 %v3395
      %3785 = vmatprep.subr.bf16.mxu0 0
      %3786 = vmatpush1.bf16.msra.mxu0 %v3396
      %3787 = vmatprep.subr.bf16.mxu0 0
      %3788 = vmatpush1.bf16.msra.mxu0 %v3397
      %3789 = vmatprep.subr.bf16.mxu0 0
      %3790 = vmatpush1.bf16.msra.mxu0 %v3398
      %3791 = vmatprep.subr.bf16.mxu0 0
      %3792 = vmatpush1.bf16.msra.mxu0 %v3399
      %3793 = vmatprep.subr.bf16.mxu0 0
      %3794 = vmatpush1.bf16.msra.mxu0 %v3400
      %3795 = vmatprep.subr.bf16.mxu0 0
      %3796 = vmatpush1.bf16.msra.mxu0 %v3401
      %3797 = vmatprep.subr.bf16.mxu0 0
      %3798 = vmatpush1.bf16.msra.mxu0 %v3402
      %3799 = vmatprep.subr.bf16.mxu0 0
      %3800 = vmatpush1.bf16.msra.mxu0 %v3403
      %3801 = vmatprep.subr.bf16.mxu0 0
      %3802 = vmatpush1.bf16.msra.mxu0 %v3404
      %3803 = vmatprep.subr.bf16.mxu0 0
      %3804 = vmatpush1.bf16.msra.mxu0 %v3405
      %3805 = vmatprep.subr.bf16.mxu0 0
      %3806 = vmatpush1.bf16.msra.mxu0 %v3406
      %3807 = vmatprep.subr.bf16.mxu0 0
      %3808 = vmatpush1.bf16.msra.mxu0 %v3407
      %3809 = vmatprep.subr.bf16.mxu0 0
      %3810 = vmatpush1.bf16.msra.mxu0 %v3408
      %3811 = vmatprep.subr.bf16.mxu0 0
      %3812 = vmatpush1.bf16.msra.mxu0 %v3409
      %3813 = vmatprep.subr.bf16.mxu0 0
      %3814 = vmatpush1.bf16.msra.mxu0 %v3410
      %3815 = vmatprep.mubr.bf16.mxu0 %v2533
      %3816 = vmatmul.mubr.bf16.gmra.mrb[0].mxu0 %v2532
      %v3817 = vpop.f32.mrb[0].mxu0
      %v3818 = vadd.f32 %v3769, %v3817
      %v3819 = vpop.f32.mrb[0].mxu0
      %v3820 = vpop.f32.mrb[0].mxu0
      %v3821 = vadd.f32 %v3772, %v3820
      %v3822 = vpop.f32.mrb[0].mxu0
      %3823 = vmatprep.mubr.bf16.mxu0 %v2549
      %3824 = vmatmul.mubr.bf16.gmra.mrb[0].mxu0 %v2548
      %v3825 = vpop.f32.mrb[0].mxu0
      %v3826 = vadd.f32 %v3777, %v3825
      %v3827 = vpop.f32.mrb[0].mxu0
      %v3828 = vpop.f32.mrb[0].mxu0
      %v3829 = vadd.f32 %v3780, %v3828
      %v3830 = vpop.f32.mrb[0].mxu0
      %3831 = vdwg.mxu0
      %3832 = vmatprep.subr.bf16.mxu0 0
      %3833 = vmatpush1.bf16.msra.mxu0 %v3411
      %3834 = vmatprep.subr.bf16.mxu0 0
      %3835 = vmatpush1.bf16.msra.mxu0 %v3412
      %3836 = vmatprep.subr.bf16.mxu0 0
      %3837 = vmatpush1.bf16.msra.mxu0 %v3413
      %3838 = vmatprep.subr.bf16.mxu0 0
      %3839 = vmatpush1.bf16.msra.mxu0 %v3414
      %3840 = vmatprep.subr.bf16.mxu0 0
      %3841 = vmatpush1.bf16.msra.mxu0 %v3415
      %3842 = vmatprep.subr.bf16.mxu0 0
      %3843 = vmatpush1.bf16.msra.mxu0 %v3416
      %3844 = vmatprep.subr.bf16.mxu0 0
      %3845 = vmatpush1.bf16.msra.mxu0 %v3417
      %3846 = vmatprep.subr.bf16.mxu0 0
      %3847 = vmatpush1.bf16.msra.mxu0 %v3418
      %3848 = vmatprep.subr.bf16.mxu0 0
      %3849 = vmatpush1.bf16.msra.mxu0 %v3419
      %3850 = vmatprep.subr.bf16.mxu0 0
      %3851 = vmatpush1.bf16.msra.mxu0 %v3420
      %3852 = vmatprep.subr.bf16.mxu0 0
      %3853 = vmatpush1.bf16.msra.mxu0 %v3421
      %3854 = vmatprep.subr.bf16.mxu0 0
      %3855 = vmatpush1.bf16.msra.mxu0 %v3422
      %3856 = vmatprep.subr.bf16.mxu0 0
      %3857 = vmatpush1.bf16.msra.mxu0 %v3423
      %3858 = vmatprep.subr.bf16.mxu0 0
      %3859 = vmatpush1.bf16.msra.mxu0 %v3424
      %3860 = vmatprep.subr.bf16.mxu0 0
      %3861 = vmatpush1.bf16.msra.mxu0 %v3425
      %3862 = vmatprep.subr.bf16.mxu0 0
      %3863 = vmatpush1.bf16.msra.mxu0 %v3426
      %3864 = vmatprep.mubr.bf16.mxu0 %v2535
      %3865 = vmatmul.mubr.bf16.gmra.mrb[0].mxu0 %v2534
      %v3866 = vpop.f32.mrb[0].mxu0
      %v3867 = vadd.f32 %v3818, %v3866
      %v3868 = vpop.f32.mrb[0].mxu0
      %v3869 = vpop.f32.mrb[0].mxu0
      %v3870 = vadd.f32 %v3821, %v3869
      %v3871 = vpop.f32.mrb[0].mxu0
      %3872 = vmatprep.mubr.bf16.mxu0 %v2551
      %3873 = vmatmul.mubr.bf16.gmra.mrb[0].mxu0 %v2550
      %v3874 = vpop.f32.mrb[0].mxu0
      %v3875 = vadd.f32 %v3826, %v3874
      %v3876 = vpop.f32.mrb[0].mxu0
      %v3877 = vpop.f32.mrb[0].mxu0
      %v3878 = vadd.f32 %v3829, %v3877
      %v3879 = vpop.f32.mrb[0].mxu0
      %3880 = vdwg.mxu0
      %3881 = vmatprep.subr.bf16.mxu0 0
      %3882 = vmatpush1.bf16.msra.mxu0 %v3427
      %3883 = vmatprep.subr.bf16.mxu0 0
      %3884 = vmatpush1.bf16.msra.mxu0 %v3428
      %3885 = vmatprep.subr.bf16.mxu0 0
      %3886 = vmatpush1.bf16.msra.mxu0 %v3429
      %3887 = vmatprep.subr.bf16.mxu0 0
      %3888 = vmatpush1.bf16.msra.mxu0 %v3430
      %3889 = vmatprep.subr.bf16.mxu0 0
      %3890 = vmatpush1.bf16.msra.mxu0 %v3431
      %3891 = vmatprep.subr.bf16.mxu0 0
      %3892 = vmatpush1.bf16.msra.mxu0 %v3432
      %3893 = vmatprep.subr.bf16.mxu0 0
      %3894 = vmatpush1.bf16.msra.mxu0 %v3433
      %3895 = vmatprep.subr.bf16.mxu0 0
      %3896 = vmatpush1.bf16.msra.mxu0 %v3434
      %3897 = vmatprep.subr.bf16.mxu0 0
      %3898 = vmatpush1.bf16.msra.mxu0 %v3435
      %3899 = vmatprep.subr.bf16.mxu0 0
      %3900 = vmatpush1.bf16.msra.mxu0 %v3436
      %3901 = vmatprep.subr.bf16.mxu0 0
      %3902 = vmatpush1.bf16.msra.mxu0 %v3437
      %3903 = vmatprep.subr.bf16.mxu0 0
      %3904 = vmatpush1.bf16.msra.mxu0 %v3438
      %3905 = vmatprep.subr.bf16.mxu0 0
      %3906 = vmatpush1.bf16.msra.mxu0 %v3439
      %3907 = vmatprep.subr.bf16.mxu0 0
      %3908 = vmatpush1.bf16.msra.mxu0 %v3440
      %3909 = vmatprep.subr.bf16.mxu0 0
      %3910 = vmatpush1.bf16.msra.mxu0 %v3441
      %3911 = vmatprep.subr.bf16.mxu0 0
      %3912 = vmatpush1.bf16.msra.mxu0 %v3442
      %3913 = vmatprep.mubr.bf16.mxu0 %v2537
      %3914 = vmatmul.mubr.bf16.gmra.mrb[0].mxu0 %v2536
      %v3915 = vpop.f32.mrb[0].mxu0
      %v3916 = vadd.f32 %v3867, %v3915
      %v3917 = vpop.f32.mrb[0].mxu0
      %v3918 = vpop.f32.mrb[0].mxu0
      %v3919 = vadd.f32 %v3870, %v3918
      %v3920 = vpop.f32.mrb[0].mxu0
      %3921 = vmatprep.mubr.bf16.mxu0 %v2553
      %3922 = vmatmul.mubr.bf16.gmra.mrb[0].mxu0 %v2552
      %v3923 = vpop.f32.mrb[0].mxu0
      %v3924 = vadd.f32 %v3875, %v3923
      %v3925 = vpop.f32.mrb[0].mxu0
      %v3926 = vpop.f32.mrb[0].mxu0
      %v3927 = vadd.f32 %v3878, %v3926
      %v3928 = vpop.f32.mrb[0].mxu0
      %3929 = vdwg.mxu0
      %3930 = vmatprep.subr.bf16.mxu0 0
      %3931 = vmatpush1.bf16.msra.mxu0 %v3443
      %3932 = vmatprep.subr.bf16.mxu0 0
      %3933 = vmatpush1.bf16.msra.mxu0 %v3444
      %3934 = vmatprep.subr.bf16.mxu0 0
      %3935 = vmatpush1.bf16.msra.mxu0 %v3445
      %3936 = vmatprep.subr.bf16.mxu0 0
      %3937 = vmatpush1.bf16.msra.mxu0 %v3446
      %3938 = vmatprep.subr.bf16.mxu0 0
      %3939 = vmatpush1.bf16.msra.mxu0 %v3447
      %3940 = vmatprep.subr.bf16.mxu0 0
      %3941 = vmatpush1.bf16.msra.mxu0 %v3448
      %3942 = vmatprep.subr.bf16.mxu0 0
      %3943 = vmatpush1.bf16.msra.mxu0 %v3449
      %3944 = vmatprep.subr.bf16.mxu0 0
      %3945 = vmatpush1.bf16.msra.mxu0 %v3450
      %3946 = vmatprep.subr.bf16.mxu0 0
      %3947 = vmatpush1.bf16.msra.mxu0 %v3451
      %3948 = vmatprep.subr.bf16.mxu0 0
      %3949 = vmatpush1.bf16.msra.mxu0 %v3452
      %3950 = vmatprep.subr.bf16.mxu0 0
      %3951 = vmatpush1.bf16.msra.mxu0 %v3453
      %3952 = vmatprep.subr.bf16.mxu0 0
      %3953 = vmatpush1.bf16.msra.mxu0 %v3454
      %3954 = vmatprep.subr.bf16.mxu0 0
      %3955 = vmatpush1.bf16.msra.mxu0 %v3455
      %3956 = vmatprep.subr.bf16.mxu0 0
      %3957 = vmatpush1.bf16.msra.mxu0 %v3456
      %3958 = vmatprep.subr.bf16.mxu0 0
      %3959 = vmatpush1.bf16.msra.mxu0 %v3457
      %3960 = vmatprep.subr.bf16.mxu0 0
      %3961 = vmatpush1.bf16.msra.mxu0 %v3458
      %3962 = vmatprep.mubr.bf16.mxu0 %v2539
      %3963 = vmatmul.mubr.bf16.gmra.mrb[0].mxu0 %v2538
      %v3964 = vpop.f32.mrb[0].mxu0
      %v3965 = vadd.f32 %v3916, %v3964
      %v3966 = vpop.f32.mrb[0].mxu0
      %v3967 = vpop.f32.mrb[0].mxu0
      %v3968 = vadd.f32 %v3919, %v3967
      %v3969 = vpop.f32.mrb[0].mxu0
      %3970 = vmatprep.mubr.bf16.mxu0 %v2555
      %3971 = vmatmul.mubr.bf16.gmra.mrb[0].mxu0 %v2554
      %v3972 = vpop.f32.mrb[0].mxu0
      %v3973 = vadd.f32 %v3924, %v3972
      %v3974 = vpop.f32.mrb[0].mxu0
      %v3975 = vpop.f32.mrb[0].mxu0
      %v3976 = vadd.f32 %v3927, %v3975
      %v3977 = vpop.f32.mrb[0].mxu0
      %3978 = vdwg.mxu0
      %v3979 = vadd.f32 %v1652, %v3965
      %v3980 = vadd.f32 %v1653, %v3968
      %v3981 = vadd.f32 %v1654, %v3973
      %v3982 = vadd.f32 %v1655, %v3976
      %v3983 = vld [vmem:[%s654] sm:$0x1]
      %v3984 = vld [vmem:[%s657] sm:$0x1]
      %v3985 = vsel %vm754, %v3979, 0.0
      %3986 = vadd.xlane.f32.xlu0 %v3985
      %v3987 = vpop.xlane.xlu0 %3986
      %v3988 = vsel %vm754, %v3980, 0.0
      %3989 = vadd.xlane.f32.xlu0 %v3988
      %v3990 = vpop.xlane.xlu0 %3989
      %v3991 = vsel %vm754, %v3981, 0.0
      %3992 = vadd.xlane.f32.xlu0 %v3991
      %v3993 = vpop.xlane.xlu0 %3992
      %v3994 = vsel %vm754, %v3982, 0.0
      %3995 = vadd.xlane.f32.xlu0 %v3994
      %v3996 = vpop.xlane.xlu0 %3995
      %v3997 = vmul.f32 %v3987, 0.020833334
      %v3998 = vmul.f32 %v3990, 0.020833334
      %v3999 = vmul.f32 %v3993, 0.020833334
      %v4000 = vmul.f32 %v3996, 0.020833334
      %v4001 = vsub.f32 %v3979, %v3997
      %v4002 = vsub.f32 %v3980, %v3998
      %v4003 = vsub.f32 %v3981, %v3999
      %v4004 = vsub.f32 %v3982, %v4000
      %v4005 = vmul.f32 %v4001, %v4001
      %v4006 = vmul.f32 %v4002, %v4002
      %v4007 = vmul.f32 %v4003, %v4003
      %v4008 = vmul.f32 %v4004, %v4004
      %v4009 = vsel %vm754, %v4005, 0.0
      %4010 = vadd.xlane.f32.xlu0 %v4009
      %v4011 = vpop.xlane.xlu0 %4010
      %v4012 = vsel %vm754, %v4006, 0.0
      %4013 = vadd.xlane.f32.xlu0 %v4012
      %v4014 = vpop.xlane.xlu0 %4013
      %v4015 = vsel %vm754, %v4007, 0.0
      %4016 = vadd.xlane.f32.xlu0 %v4015
      %v4017 = vpop.xlane.xlu0 %4016
      %v4018 = vsel %vm754, %v4008, 0.0
      %4019 = vadd.xlane.f32.xlu0 %v4018
      %v4020 = vpop.xlane.xlu0 %4019
      %v4021 = vmul.f32 %v4011, 0.020833334
      %v4022 = vmul.f32 %v4014, 0.020833334
      %v4023 = vmul.f32 %v4017, 0.020833334
      %v4024 = vmul.f32 %v4020, 0.020833334
      %v4025 = vadd.f32 %v4021, 1e-05
      %v4026 = vadd.f32 %v4022, 1e-05
      %v4027 = vadd.f32 %v4023, 1e-05
      %v4028 = vadd.f32 %v4024, 1e-05
      %v4029 = vrsqrt.pop %v4025
      %v4030 = vrsqrt.pop %v4026
      %v4031 = vrsqrt.pop %v4027
      %v4032 = vrsqrt.pop %v4028
      %v4033 = vmul.f32 %v4001, %v4029
      %v4034 = vmul.f32 %v4002, %v4030
      %v4035 = vmul.f32 %v4003, %v4031
      %v4036 = vmul.f32 %v4004, %v4032
      %v4038 = vlaneseq
      %v4039 = vshrl.u32 %v4038, 7
      %v4040 = vsub.s32 0, %v4039
      %v4041 = vrot.slane %v3983, %v4040
      %v4043 = vmul.f32 %v4033, %v4041
      %v4044 = vmul.f32 %v4034, %v4041
      %v4045 = vmul.f32 %v4035, %v4041
      %v4046 = vmul.f32 %v4036, %v4041
      %v4048 = vlaneseq
      %v4049 = vshrl.u32 %v4048, 7
      %v4050 = vsub.s32 0, %v4049
      %v4051 = vrot.slane %v3984, %v4050
      %v4053 = vadd.f32 %v4043, %v4051
      %v4054 = vadd.f32 %v4044, %v4051
      %v4055 = vadd.f32 %v4045, %v4051
      %v4056 = vadd.f32 %v4046, %v4051
      %4057 = vst.msk [vmem:[#allocation2] sm:$0xff] %vm754, %v4053
      %4058 = vst.msk [vmem:[#allocation2 + $0x8] sm:$0xff] %vm754, %v4054
      %4059 = vst.msk [vmem:[#allocation2 + $0x10] sm:$0xff] %vm754, %v4055
      %4060 = vst.msk [vmem:[#allocation2 + $0x18] sm:$0xff] %vm754, %v4056
      %p4061 = scmp.eq.s32.totalorder %s26, 1
      // Predicated region
      $region85: #{transformer_forward.1} parent=79 // pred_check
        %p4062 = pneg %p4061
      $region86: #{transformer_forward.1} parent=79 // pred_check_branch
        %4064 = sbr.rel (%p4062) target = $region88
      $region87: #{transformer_forward.1} parent=79 // pred_region
        %v4065 = vpack.c.bf16 %v4054, %v4053
        %v4066 = vpack.c.bf16 %v4056, %v4055
        %v4067 = vld [vmem:[%s13] sm:$0xf]
        %v4068 = vld [vmem:[%s13 + $0x4] sm:$0xf]
        %v4069 = vld [vmem:[%s13 + $0x8] sm:$0xf]
        %v4070 = vld [vmem:[%s13 + $0xc] sm:$0xf]
        %v4071 = vld [vmem:[%s13 + $0x10] sm:$0xf]
        %v4072 = vld [vmem:[%s13 + $0x14] sm:$0xf]
        %v4073 = vld [vmem:[%s14] sm:$0x1]
        %v4075 = vlaneseq
        %v4076 = vshrl.u32 %v4075, 7
        %v4077 = vsub.s32 0, %v4076
        %v4078 = vrot.slane %v4073, %v4077
        %v4086 = vunpack.c.l.b16 %v4067
        %v4087 = vunpack.c.l.b16 %v4068
        %v4088 = vunpack.c.l.b16 %v4069
        %v4089 = vunpack.c.l.b16 %v4070
        %v4090 = vunpack.c.l.b16 %v4071
        %v4091 = vunpack.c.l.b16 %v4072
        %v4092 = vpack.c.b16 %v4087, %v4086
        %v4093 = vpack.c.b16 %v4089, %v4088
        %v4094 = vpack.c.b16 %v4091, %v4090
        %v4099 = vsel %vm754, %v4065, 0
        %v4102 = vsel %vm754, %v4066, 0
        %4104 = vmatprep.subr.bf16.mxu0 0
        %4105 = vmatpush1.bf16.msra.mxu0 %v4092
        %4106 = vmatprep.subr.bf16.mxu0 0
        %4107 = vmatpush1.bf16.msra.mxu0 %v4093
        %4108 = vmatprep.subr.bf16.mxu0 0
        %4109 = vmatpush1.bf16.msra.mxu0 %v4094
        %4110 = vmatprep.subr.bf16.mxu0 0
        %4111 = vmatpush1.bf16.msra.mxu0 0
        %4112 = vmatprep.subr.bf16.mxu0 0
        %4113 = vmatpush1.bf16.msra.mxu0 0
        %4114 = vmatprep.subr.bf16.mxu0 0
        %4115 = vmatpush1.bf16.msra.mxu0 0
        %4116 = vmatprep.subr.bf16.mxu0 0
        %4117 = vmatpush1.bf16.msra.mxu0 0
        %4118 = vmatprep.subr.bf16.mxu0 0
        %4119 = vmatpush1.bf16.msra.mxu0 0
        %4120 = vmatprep.subr.bf16.mxu0 0
        %4121 = vmatpush1.bf16.msra.mxu0 0
        %4122 = vmatprep.subr.bf16.mxu0 0
        %4123 = vmatpush1.bf16.msra.mxu0 0
        %4124 = vmatprep.subr.bf16.mxu0 0
        %4125 = vmatpush1.bf16.msra.mxu0 0
        %4126 = vmatprep.subr.bf16.mxu0 0
        %4127 = vmatpush1.bf16.msra.mxu0 0
        %4128 = vmatprep.subr.bf16.mxu0 0
        %4129 = vmatpush1.bf16.msra.mxu0 0
        %4130 = vmatprep.subr.bf16.mxu0 0
        %4131 = vmatpush1.bf16.msra.mxu0 0
        %4132 = vmatprep.subr.bf16.mxu0 0
        %4133 = vmatpush1.bf16.msra.mxu0 0
        %4134 = vmatprep.subr.bf16.mxu0 0
        %4135 = vmatpush1.bf16.msra.mxu0 0
        %4136 = vmatprep.mubr.bf16.mxu0 0
        %4137 = vmatmul.mubr.bf16.gmra.mrb[0].mxu0 %v4099
        %v4138 = vpop.f32.mrb[0].mxu0
        %v4139 = vadd.f32 %v4078, %v4138
        %v4140 = vpop.f32.mrb[0].mxu0
        %v4141 = vpop.f32.mrb[0].mxu0
        %v4142 = vadd.f32 %v4078, %v4141
        %v4143 = vpop.f32.mrb[0].mxu0
        %4144 = vmatprep.mubr.bf16.mxu0 0
        %4145 = vmatmul.mubr.bf16.gmra.mrb[0].mxu0 %v4102
        %v4146 = vpop.f32.mrb[0].mxu0
        %v4147 = vadd.f32 %v4078, %v4146
        %v4148 = vpop.f32.mrb[0].mxu0
        %v4149 = vpop.f32.mrb[0].mxu0
        %v4150 = vadd.f32 %v4078, %v4149
        %v4151 = vpop.f32.mrb[0].mxu0
        %4152 = vdwg.mxu0
        %4153 = vmax.xlane.f32.xlu0 %v4139
        %v4154 = vpop.xlane.xlu0 %4153
        %4155 = vmax.xlane.f32.xlu0 %v4142
        %v4156 = vpop.xlane.xlu0 %4155
        %4157 = vmax.xlane.f32.xlu0 %v4147
        %v4158 = vpop.xlane.xlu0 %4157
        %4159 = vmax.xlane.f32.xlu0 %v4150
        %v4160 = vpop.xlane.xlu0 %4159
        %v4161 = vsub.f32 %v4139, %v4154
        %v4162 = vsub.f32 %v4142, %v4156
        %v4163 = vsub.f32 %v4147, %v4158
        %v4164 = vsub.f32 %v4150, %v4160
        %v4165 = vmul.f32 %v4161, 1.442695
        %v4166 = vpow.pop %v4165
        %v4167 = vmul.f32 %v4162, 1.442695
        %v4168 = vpow.pop %v4167
        %v4169 = vmul.f32 %v4163, 1.442695
        %v4170 = vpow.pop %v4169
        %v4171 = vmul.f32 %v4164, 1.442695
        %v4172 = vpow.pop %v4171
        %4173 = vadd.xlane.f32.xlu0 %v4166
        %v4174 = vpop.xlane.xlu0 %4173
        %4175 = vadd.xlane.f32.xlu0 %v4168
        %v4176 = vpop.xlane.xlu0 %4175
        %4177 = vadd.xlane.f32.xlu0 %v4170
        %v4178 = vpop.xlane.xlu0 %4177
        %4179 = vadd.xlane.f32.xlu0 %v4172
        %v4180 = vpop.xlane.xlu0 %4179
        %v4181 = vlog2.pop %v4174
        %v4182 = vmul.f32 %v4181, 0.6931472
        %v4183 = vlog2.pop %v4176
        %v4184 = vmul.f32 %v4183, 0.6931472
        %v4185 = vlog2.pop %v4178
        %v4186 = vmul.f32 %v4185, 0.6931472
        %v4187 = vlog2.pop %v4180
        %v4188 = vmul.f32 %v4187, 0.6931472
        %v4189 = vsub.f32 %v4161, %v4182
        %v4190 = vsub.f32 %v4162, %v4184
        %v4191 = vsub.f32 %v4163, %v4186
        %v4192 = vsub.f32 %v4164, %v4188
        %4193 = vst [vmem:[%s15] sm:$0xff] %v4189
        %4194 = vst [vmem:[%s15 + $0x8] sm:$0xff] %v4190
        %4195 = vst [vmem:[%s15 + $0x10] sm:$0xff] %v4191
        %4196 = vst [vmem:[%s15 + $0x18] sm:$0xff] %v4192
      $region88: #{transformer_forward.1} parent=79 // pred_fallthru
        _
      // Predicated region
      $region89: #{transformer_forward.1} parent=79 // pred_check
        %p4197 = pneg %p414
      $region90: #{transformer_forward.1} parent=79 // pred_check_branch
        %4199 = sbr.rel (%p4197) target = $region92
      $region91: #{transformer_forward.1} parent=79 // pred_region
        _
      $region92: #{transformer_forward.1} parent=79 // pred_fallthru
        _
      // Predicated region
      $region93: #{transformer_forward.1} parent=79 // pred_check
        %p4200 = pneg %p414
      $region94: #{transformer_forward.1} parent=79 // pred_check_branch
        %4202 = sbr.rel (%p4200) target = $region96
      $region95: #{transformer_forward.1} parent=79 // pred_region
        _
      $region96: #{transformer_forward.1} parent=79 // pred_fallthru
        _
    $region80: #{transformer_forward.1} parent=5 // pred_fallthru
      _
    %p4203 = scmp.le.s32.totalorder 2, %s21
    // Predicated region
    $region97: #{transformer_forward.1} parent=5 // pred_check
      %p4204 = pneg %p4203
    $region98: #{transformer_forward.1} parent=5 // pred_check_branch
      %4206 = sbr.rel (%p4204) target = $region100
    $region99: #{transformer_forward.1} parent=5 // pred_region
      %s4207 = ssub.s32 %s21, 2
    $region100: #{transformer_forward.1} parent=5 // pred_fallthru
      _
  $region6: #{transformer_forward.1} parent=0 // loop_footer
    %s25 = sadd.s32 1, %s21
  $region7: #{transformer_forward.1} parent=0 // loop_footer_branch
    %20 = sbr.rel target = $region3
  $region8: #{transformer_forward.1} parent=0 // loop_exit
    _

</llo_original>
